<compile_context>
chip_gen: v5e
topology: v5e:2x2
jax: 0.10.0
libtpu: 0.0.40
codegen_flags: <defaults>
</compile_context>

<pallas_src>
import functools
import math

import jax
import jax.numpy as jnp
import numpy as np
from jax.experimental import pallas as pl
from jax.experimental.pallas import tpu as pltpu

EPS = 1e-6
_W_PER_LAYER = 14   # fused weight arrays per decoder layer


# --------------------------------- kernel ------------------------------------

def _decoder_stack_kernel(*refs, n_layers, n_heads, d_k, apply_final_norm,
                          matmul_dtype):
    # refs = (norm_smem, x, enc, <14 weights per layer> * n_layers, out)
    norm_ref, x_ref, enc_ref = refs[0], refs[1], refs[2]
    w_refs = refs[3:3 + _W_PER_LAYER * n_layers]
    out_ref = refs[3 + _W_PER_LAYER * n_layers]

    f32 = jnp.float32
    bt, s_q, d_model = x_ref.shape
    s_kv = enc_ref.shape[1]

    # Flatten batch into the matmul M dimension (loop-invariant work hoisted).
    x = x_ref[...].astype(f32).reshape(bt * s_q, d_model)
    enc = enc_ref[...].astype(f32).reshape(bt * s_kv, d_model)

    def mm(a, w):
        return jnp.dot(a.astype(matmul_dtype), w.astype(matmul_dtype),
                       preferred_element_type=f32)

    def layernorm(v, alpha, bias):
        mean = jnp.mean(v, axis=-1, keepdims=True)
        # torch.std is unbiased (divide by N - 1); eps added to the std.
        var = jnp.sum((v - mean) ** 2, axis=-1, keepdims=True) / (d_model - 1)
        return alpha * (v - mean) / (jnp.sqrt(var) + EPS) + bias

    scale = 1.0 / math.sqrt(d_k)

    def attention(q2, k2, v2, sq, skv):
        # Fold 1/sqrt(d_k) into Q: bt*sq*D muls instead of H*bt*sq*skv.
        q3 = (q2 * scale).reshape(bt, sq, d_model)
        k3 = k2.reshape(bt, skv, d_model)
        v3 = v2.reshape(bt, skv, d_model)
        ctx_heads = []
        # Static unroll over heads; each head's dots are batched over the
        # batch tile, then a single fused output projection follows.
        for h in range(n_heads):
            lo = h * d_k
            qh = q3[:, :, lo:lo + d_k].astype(matmul_dtype)
            kh = k3[:, :, lo:lo + d_k].astype(matmul_dtype)
            vh = v3[:, :, lo:lo + d_k].astype(matmul_dtype)
            s = jnp.einsum("bqd,bkd->bqk", qh, kh, preferred_element_type=f32)
            # NOTE: masks intentionally NOT applied (reference discards
            # masked_fill's result).
            m = jnp.max(s, axis=-1, keepdims=True)
            e = jnp.exp(s - m)
            p = e * pl.reciprocal(jnp.sum(e, axis=-1, keepdims=True), approx=True)
            ctx_heads.append(jnp.einsum("bqk,bkd->bqd", p.astype(matmul_dtype),
                                        vh, preferred_element_type=f32))
        ctx = jnp.concatenate(ctx_heads, axis=-1)           # (bt, sq, D)
        return ctx.reshape(bt * sq, d_model)

    for l in range(n_layers):
        (s_wqkv, s_bqkv, s_wo, s_bo,
         c_wq, c_bq, c_wkv, c_bkv, c_wo, c_bo,
         w1, b1, w2, b2) = w_refs[_W_PER_LAYER * l:_W_PER_LAYER * (l + 1)]
        n0 = 3 * l

        # Residual 0: x + self_attn(norm(x)) (dropout = identity)
        xn = layernorm(x, norm_ref[n0 + 0, 0], norm_ref[n0 + 0, 1])
        qkv = mm(xn, s_wqkv[...]) + s_bqkv[...]
        ctx = attention(qkv[:, :d_model], qkv[:, d_model:2 * d_model],
                        qkv[:, 2 * d_model:], s_q, s_q)
        x = x + mm(ctx, s_wo[...]) + s_bo[...]

        # Residual 1: x + cross_attn(norm(x), encoder_out, encoder_out)
        xn = layernorm(x, norm_ref[n0 + 1, 0], norm_ref[n0 + 1, 1])
        q = mm(xn, c_wq[...]) + c_bq[...]
        kv = mm(enc, c_wkv[...]) + c_bkv[...]
        ctx = attention(q, kv[:, :d_model], kv[:, d_model:], s_q, s_kv)
        x = x + mm(ctx, c_wo[...]) + c_bo[...]

        # Residual 2: x + FFN(norm(x)),  FFN = Linear2(relu(Linear1(.)))
        xn = layernorm(x, norm_ref[n0 + 2, 0], norm_ref[n0 + 2, 1])
        h1 = jnp.maximum(mm(xn, w1[...]) + b1[...], 0.0)
        x = x + mm(h1, w2[...]) + b2[...]

    # Final Decoder LayerNormalization, fused into the last group's kernel.
    if apply_final_norm:
        x = layernorm(x, norm_ref[3 * n_layers, 0], norm_ref[3 * n_layers, 1])

    out_ref[...] = x.reshape(bt, s_q, d_model).astype(out_ref.dtype)


# --------------------------------- wrapper -----------------------------------

def _fused_layer_weights(lp, matmul_dtype):
    wd = matmul_dtype   # big 2-D weights stored in matmul dtype; biases stay f32
    return [
        jnp.concatenate([lp["swq"], lp["swk"], lp["swv"]], axis=1).astype(wd),
        jnp.concatenate([lp["sbq"], lp["sbk"], lp["sbv"]], axis=1),
        lp["swo"].astype(wd), lp["sbo"],
        lp["cwq"].astype(wd), lp["cbq"],
        jnp.concatenate([lp["cwk"], lp["cwv"]], axis=1).astype(wd),
        jnp.concatenate([lp["cbk"], lp["cbv"]], axis=1),
        lp["cwo"].astype(wd), lp["cbo"],
        lp["w1"].astype(wd), lp["b1"],
        lp["w2"].astype(wd), lp["b2"],
    ]


def _pick_batch_tile(batch, seq, cap_rows=512):
    # Largest divisor of `batch` such that the flattened tile has <= cap_rows rows.
    bt = max(1, min(batch, cap_rows // max(seq, 1)))
    while batch % bt:
        bt -= 1
    return bt


def _group_layers(layer_bytes, budget):
    # Greedily pack consecutive layers into groups whose weights fit `budget`.
    groups, cur, cur_bytes = [], [], 0
    for li, wb in enumerate(layer_bytes):
        if cur and cur_bytes + wb > budget:
            groups.append(cur)
            cur, cur_bytes = [], 0
        cur.append(li)
        cur_bytes += wb
    if cur:
        groups.append(cur)
    return groups


def _decoder_stack(x, encoder_out, norm_arr, weights, *, n_layers, n_heads,
                   apply_final_norm, batch_tile, matmul_dtype):
    B, S, D = x.shape
    S_enc = encoder_out.shape[1]
    d_k = D // n_heads
    bt = batch_tile

    # Explicit scoped-VMEM budget: single-buffered weights + activation tiles +
    # per-head score temporaries, clamped to every generation's physical VMEM.
    weight_bytes = sum(int(w.size) * w.dtype.itemsize for w in weights)
    act_bytes = 4 * bt * max(S, S_enc) * D
    score_bytes = 4 * bt * S * max(S, S_enc)
    vmem_limit = int(min(max(weight_bytes + 16 * act_bytes + 8 * score_bytes,
                             32 * 1024 * 1024),
                         64 * 1024 * 1024))

    x_spec = pl.BlockSpec((bt, S, D), lambda b: (b, 0, 0))
    enc_spec = pl.BlockSpec((bt, S_enc, D), lambda b: (b, 0, 0))
    # Weights: untiled, single-buffered VMEM residents (no double-buffering).
    w_spec = pl.BlockSpec(memory_space=pltpu.MemorySpace.VMEM)
    smem_spec = pl.BlockSpec(memory_space=pltpu.MemorySpace.SMEM)

    kern = functools.partial(
        _decoder_stack_kernel, n_layers=n_layers, n_heads=n_heads, d_k=d_k,
        apply_final_norm=apply_final_norm, matmul_dtype=matmul_dtype)

    return pl.pallas_call(
        kern,
        grid=(B // bt,),
        in_specs=([smem_spec, x_spec, enc_spec] + [w_spec] * len(weights)),
        out_specs=pl.BlockSpec((bt, S, D), lambda b: (b, 0, 0)),
        out_shape=jax.ShapeDtypeStruct((B, S, D), jnp.float32),
        compiler_params=pltpu.CompilerParams(
            dimension_semantics=("parallel",),      # batch tiles independent
            vmem_limit_bytes=vmem_limit),
    )(norm_arr, x, encoder_out, *weights)


def decoder_forward(x, encoder_out, params, src_mask=None, tgt_mask=None, *,
                    n_heads, batch_tile=None, matmul_dtype=jnp.float32,
                    weight_vmem_budget=40 * 1024 * 1024):
    # src_mask / tgt_mask are intentionally ignored (the reference's masked_fill
    # result is discarded, so masks are a no-op).
    del src_mask, tgt_mask
    B, S, D = x.shape
    assert D % n_heads == 0
    bt = batch_tile if batch_tile is not None else _pick_batch_tile(B, S)

    layers = params["layers"]
    fused = [_fused_layer_weights(lp, matmul_dtype) for lp in layers]
    layer_bytes = [sum(int(w.size) * w.dtype.itemsize for w in ws) for ws in fused]
    groups = _group_layers(layer_bytes, weight_vmem_budget)

    final_nb = jnp.asarray(params["final_norm"], jnp.float32).reshape(1, 2)
    for gi, group in enumerate(groups):
        norms = [jnp.asarray(layers[li]["norm"], jnp.float32) for li in group]
        norm_arr = jnp.concatenate(norms + [final_nb], axis=0)   # (3g + 1, 2)
        weights = [w for li in group for w in fused[li]]
        x = _decoder_stack(x, encoder_out, norm_arr, weights,
                           n_layers=len(group), n_heads=n_heads,
                           apply_final_norm=(gi == len(groups) - 1),
                           batch_tile=bt, matmul_dtype=matmul_dtype)
    return x


# ------------------------------ pure-JAX reference ----------------------------

def ref_decoder(x, enc, params, n_heads):
    D = x.shape[-1]
    d_k = D // n_heads

    def ln(v, a, b):
        mean = v.mean(-1, keepdims=True)
        std = jnp.sqrt(((v - mean) ** 2).sum(-1, keepdims=True) / (D - 1))
        return a * (v - mean) / (std + EPS) + b

    def mha(q, k, v, wq, bq, wk, bk, wv, bv, wo, bo):
        B, Sq, _ = q.shape
        Sk = k.shape[1]
        q = q @ wq + bq
        k = k @ wk + bk
        v = v @ wv + bv
        q = q.reshape(B, Sq, n_heads, d_k).transpose(0, 2, 1, 3)
        k = k.reshape(B, Sk, n_heads, d_k).transpose(0, 2, 1, 3)
        v = v.reshape(B, Sk, n_heads, d_k).transpose(0, 2, 1, 3)
        s = (q @ jnp.swapaxes(k, -1, -2)) / math.sqrt(d_k)
        a = jax.nn.softmax(s, axis=-1)
        o = (a @ v).transpose(0, 2, 1, 3).reshape(B, Sq, D)
        return o @ wo + bo

    for p in params["layers"]:
        xn = ln(x, p["norm"][0, 0], p["norm"][0, 1])
        x = x + mha(xn, xn, xn, p["swq"], p["sbq"], p["swk"], p["sbk"],
                    p["swv"], p["sbv"], p["swo"], p["sbo"])
        xn = ln(x, p["norm"][1, 0], p["norm"][1, 1])
        x = x + mha(xn, enc, enc, p["cwq"], p["cbq"], p["cwk"], p["cbk"],
                    p["cwv"], p["cbv"], p["cwo"], p["cbo"])
        xn = ln(x, p["norm"][2, 0], p["norm"][2, 1])
        h = jnp.maximum(xn @ p["w1"] + p["b1"], 0.0)
        x = x + h @ p["w2"] + p["b2"]
    return ln(x, params["final_norm"][0], params["final_norm"][1])


# ----------------------------------- main -------------------------------------

if __name__ == "__main__":
    B, S, D, H, F, L = 2, 8, 32, 4, 64, 2   # batch, seq, d_model, heads, d_ff, layers

    root = jax.random.PRNGKey(0)

    def make_layer(key):
        ks = jax.random.split(key, 20)
        r = lambda i, shape: jax.random.normal(ks[i], shape, jnp.float32) * 0.05
        return {
            # LayerNormalization params: alpha = 1, bias = 0 (nn.Parameter init)
            "norm": jnp.tile(jnp.array([[1.0, 0.0]], jnp.float32), (3, 1)),
            "swq": r(0, (D, D)), "sbq": r(1, (1, D)),
            "swk": r(2, (D, D)), "sbk": r(3, (1, D)),
            "swv": r(4, (D, D)), "sbv": r(5, (1, D)),
            "swo": r(6, (D, D)), "sbo": r(7, (1, D)),
            "cwq": r(8, (D, D)),  "cbq": r(9, (1, D)),
            "cwk": r(10, (D, D)), "cbk": r(11, (1, D)),
            "cwv": r(12, (D, D)), "cbv": r(13, (1, D)),
            "cwo": r(14, (D, D)), "cbo": r(15, (1, D)),
            "w1": r(16, (D, F)), "b1": r(17, (1, F)),
            "w2": r(18, (F, D)), "b2": r(19, (1, D)),
        }

    root, *layer_keys = jax.random.split(root, L + 1)
    root, kx, ke = jax.random.split(root, 3)

    params = {
        "layers": [make_layer(k) for k in layer_keys],
        "final_norm": jnp.array([1.0, 0.0], jnp.float32),
    }

    x = jax.random.normal(kx, (B, S, D), jnp.float32)
    encoder_out = jax.random.normal(ke, (B, S, D), jnp.float32)
    src_mask = jnp.ones((B, 1, S, S), jnp.float32)             # ignored (no-op in reference)
    tgt_mask = jnp.tril(jnp.ones((B, 1, S, S), jnp.float32))   # ignored (no-op in reference)

    out = decoder_forward(x, encoder_out, params, src_mask, tgt_mask, n_heads=H)
    out = jax.block_until_ready(out)

    ref = ref_decoder(x, encoder_out, params, H)
    np.testing.assert_allclose(np.asarray(out), np.asarray(ref), rtol=2e-3, atol=2e-3)
    print("KERNEL_OK")
</pallas_src>

<mosaic_0001>
module attributes {stable_mosaic.version = 11 : i64} {
  func.func @_decoder_stack_kernel(%arg0: i32, %arg1: memref<7x2xf32, #tpu.memory_space<smem>>, %arg2: memref<2x8x32xf32, #tpu.memory_space<vmem>>, %arg3: memref<2x8x32xf32, #tpu.memory_space<vmem>>, %arg4: memref<32x96xf32, #tpu.memory_space<vmem>>, %arg5: memref<1x96xf32, #tpu.memory_space<vmem>>, %arg6: memref<32x32xf32, #tpu.memory_space<vmem>>, %arg7: memref<1x32xf32, #tpu.memory_space<vmem>>, %arg8: memref<32x32xf32, #tpu.memory_space<vmem>>, %arg9: memref<1x32xf32, #tpu.memory_space<vmem>>, %arg10: memref<32x64xf32, #tpu.memory_space<vmem>>, %arg11: memref<1x64xf32, #tpu.memory_space<vmem>>, %arg12: memref<32x32xf32, #tpu.memory_space<vmem>>, %arg13: memref<1x32xf32, #tpu.memory_space<vmem>>, %arg14: memref<32x64xf32, #tpu.memory_space<vmem>>, %arg15: memref<1x64xf32, #tpu.memory_space<vmem>>, %arg16: memref<64x32xf32, #tpu.memory_space<vmem>>, %arg17: memref<1x32xf32, #tpu.memory_space<vmem>>, %arg18: memref<32x96xf32, #tpu.memory_space<vmem>>, %arg19: memref<1x96xf32, #tpu.memory_space<vmem>>, %arg20: memref<32x32xf32, #tpu.memory_space<vmem>>, %arg21: memref<1x32xf32, #tpu.memory_space<vmem>>, %arg22: memref<32x32xf32, #tpu.memory_space<vmem>>, %arg23: memref<1x32xf32, #tpu.memory_space<vmem>>, %arg24: memref<32x64xf32, #tpu.memory_space<vmem>>, %arg25: memref<1x64xf32, #tpu.memory_space<vmem>>, %arg26: memref<32x32xf32, #tpu.memory_space<vmem>>, %arg27: memref<1x32xf32, #tpu.memory_space<vmem>>, %arg28: memref<32x64xf32, #tpu.memory_space<vmem>>, %arg29: memref<1x64xf32, #tpu.memory_space<vmem>>, %arg30: memref<64x32xf32, #tpu.memory_space<vmem>>, %arg31: memref<1x32xf32, #tpu.memory_space<vmem>>, %arg32: memref<2x8x32xf32, #tpu.memory_space<vmem>>) attributes {dimension_semantics = [#tpu.dimension_semantics<parallel>], iteration_bounds = array<i64: 1>, scalar_prefetch = 0 : i64, scratch_operands = 0 : i64, tpu.core_type = #tpu.core_type<tc>, window_params = [{transform_indices = @transform_0, window_bounds = array<i64: 7, 2>}, {transform_indices = @transform_1, window_bounds = array<i64: 2, 8, 32>}, {transform_indices = @transform_2, window_bounds = array<i64: 2, 8, 32>}, {pipeline_mode = #tpu.pipeline_mode<synchronous>, transform_indices = @transform_3, window_bounds = array<i64: 32, 96>}, {pipeline_mode = #tpu.pipeline_mode<synchronous>, transform_indices = @transform_4, window_bounds = array<i64: 1, 96>}, {pipeline_mode = #tpu.pipeline_mode<synchronous>, transform_indices = @transform_5, window_bounds = array<i64: 32, 32>}, {pipeline_mode = #tpu.pipeline_mode<synchronous>, transform_indices = @transform_6, window_bounds = array<i64: 1, 32>}, {pipeline_mode = #tpu.pipeline_mode<synchronous>, transform_indices = @transform_7, window_bounds = array<i64: 32, 32>}, {pipeline_mode = #tpu.pipeline_mode<synchronous>, transform_indices = @transform_8, window_bounds = array<i64: 1, 32>}, {pipeline_mode = #tpu.pipeline_mode<synchronous>, transform_indices = @transform_9, window_bounds = array<i64: 32, 64>}, {pipeline_mode = #tpu.pipeline_mode<synchronous>, transform_indices = @transform_10, window_bounds = array<i64: 1, 64>}, {pipeline_mode = #tpu.pipeline_mode<synchronous>, transform_indices = @transform_11, window_bounds = array<i64: 32, 32>}, {pipeline_mode = #tpu.pipeline_mode<synchronous>, transform_indices = @transform_12, window_bounds = array<i64: 1, 32>}, {pipeline_mode = #tpu.pipeline_mode<synchronous>, transform_indices = @transform_13, window_bounds = array<i64: 32, 64>}, {pipeline_mode = #tpu.pipeline_mode<synchronous>, transform_indices = @transform_14, window_bounds = array<i64: 1, 64>}, {pipeline_mode = #tpu.pipeline_mode<synchronous>, transform_indices = @transform_15, window_bounds = array<i64: 64, 32>}, {pipeline_mode = #tpu.pipeline_mode<synchronous>, transform_indices = @transform_16, window_bounds = array<i64: 1, 32>}, {pipeline_mode = #tpu.pipeline_mode<synchronous>, transform_indices = @transform_17, window_bounds = array<i64: 32, 96>}, {pipeline_mode = #tpu.pipeline_mode<synchronous>, transform_indices = @transform_18, window_bounds = array<i64: 1, 96>}, {pipeline_mode = #tpu.pipeline_mode<synchronous>, transform_indices = @transform_19, window_bounds = array<i64: 32, 32>}, {pipeline_mode = #tpu.pipeline_mode<synchronous>, transform_indices = @transform_20, window_bounds = array<i64: 1, 32>}, {pipeline_mode = #tpu.pipeline_mode<synchronous>, transform_indices = @transform_21, window_bounds = array<i64: 32, 32>}, {pipeline_mode = #tpu.pipeline_mode<synchronous>, transform_indices = @transform_22, window_bounds = array<i64: 1, 32>}, {pipeline_mode = #tpu.pipeline_mode<synchronous>, transform_indices = @transform_23, window_bounds = array<i64: 32, 64>}, {pipeline_mode = #tpu.pipeline_mode<synchronous>, transform_indices = @transform_24, window_bounds = array<i64: 1, 64>}, {pipeline_mode = #tpu.pipeline_mode<synchronous>, transform_indices = @transform_25, window_bounds = array<i64: 32, 32>}, {pipeline_mode = #tpu.pipeline_mode<synchronous>, transform_indices = @transform_26, window_bounds = array<i64: 1, 32>}, {pipeline_mode = #tpu.pipeline_mode<synchronous>, transform_indices = @transform_27, window_bounds = array<i64: 32, 64>}, {pipeline_mode = #tpu.pipeline_mode<synchronous>, transform_indices = @transform_28, window_bounds = array<i64: 1, 64>}, {pipeline_mode = #tpu.pipeline_mode<synchronous>, transform_indices = @transform_29, window_bounds = array<i64: 64, 32>}, {pipeline_mode = #tpu.pipeline_mode<synchronous>, transform_indices = @transform_30, window_bounds = array<i64: 1, 32>}, {transform_indices = @transform_31, window_bounds = array<i64: 2, 8, 32>}]} {
    %c0 = arith.constant 0 : index
    %c0_0 = arith.constant 0 : index
    %c0_1 = arith.constant 0 : index
    %0 = vector.load %arg2[%c0, %c0_0, %c0_1] : memref<2x8x32xf32, #tpu.memory_space<vmem>>, vector<2x8x32xf32>
    %1 = vector.shape_cast %0 : vector<2x8x32xf32> to vector<16x32xf32>
    %c0_2 = arith.constant 0 : index
    %c0_3 = arith.constant 0 : index
    %c0_4 = arith.constant 0 : index
    %2 = vector.load %arg3[%c0_2, %c0_3, %c0_4] : memref<2x8x32xf32, #tpu.memory_space<vmem>>, vector<2x8x32xf32>
    %3 = vector.shape_cast %2 : vector<2x8x32xf32> to vector<16x32xf32>
    %c0_5 = arith.constant 0 : index
    %c0_6 = arith.constant 0 : index
    %4 = memref.load %arg1[%c0_5, %c0_6] : memref<7x2xf32, #tpu.memory_space<smem>>
    %c0_7 = arith.constant 0 : index
    %c1 = arith.constant 1 : index
    %5 = memref.load %arg1[%c0_7, %c1] : memref<7x2xf32, #tpu.memory_space<smem>>
    %cst = arith.constant dense<0.000000e+00> : vector<16xf32>
    %6 = vector.multi_reduction <add>, %1, %cst [1] : vector<16x32xf32> to vector<16xf32>
    %7 = vector.shape_cast %6 : vector<16xf32> to vector<16x1xf32>
    %cst_8 = arith.constant 3.200000e+01 : f32
    %8 = vector.broadcast %cst_8 : f32 to vector<16x1xf32>
    %9 = arith.divf %7, %8 : vector<16x1xf32>
    %10 = vector.broadcast %9 : vector<16x1xf32> to vector<16x32xf32>
    %11 = arith.subf %1, %10 : vector<16x32xf32>
    %12 = arith.mulf %11, %11 : vector<16x32xf32>
    %cst_9 = arith.constant dense<0.000000e+00> : vector<16xf32>
    %13 = vector.multi_reduction <add>, %12, %cst_9 [1] : vector<16x32xf32> to vector<16xf32>
    %14 = vector.shape_cast %13 : vector<16xf32> to vector<16x1xf32>
    %cst_10 = arith.constant 3.100000e+01 : f32
    %15 = vector.broadcast %cst_10 : f32 to vector<16x1xf32>
    %16 = arith.divf %14, %15 : vector<16x1xf32>
    %17 = vector.broadcast %9 : vector<16x1xf32> to vector<16x32xf32>
    %18 = arith.subf %1, %17 : vector<16x32xf32>
    %19 = vector.broadcast %4 : f32 to vector<16x32xf32>
    %20 = arith.mulf %19, %18 : vector<16x32xf32>
    %21 = math.sqrt %16 : vector<16x1xf32>
    %cst_11 = arith.constant 9.99999997E-7 : f32
    %22 = vector.broadcast %cst_11 : f32 to vector<16x1xf32>
    %23 = arith.addf %21, %22 : vector<16x1xf32>
    %24 = vector.broadcast %23 : vector<16x1xf32> to vector<16x32xf32>
    %25 = arith.divf %20, %24 : vector<16x32xf32>
    %26 = vector.broadcast %5 : f32 to vector<16x32xf32>
    %27 = arith.addf %25, %26 : vector<16x32xf32>
    %c0_12 = arith.constant 0 : index
    %c0_13 = arith.constant 0 : index
    %28 = vector.load %arg4[%c0_12, %c0_13] : memref<32x96xf32, #tpu.memory_space<vmem>>, vector<32x96xf32>
    %cst_14 = arith.constant dense<0.000000e+00> : vector<16x96xf32>
    %29 = tpu.matmul %27, %28, %cst_14 {dimension_numbers = #tpu.dot_dimension_numbers<[1], [0], [0], [1], [0, 0, 1, 1], [], []>} : vector<16x32xf32>, vector<32x96xf32>, vector<16x96xf32> -> vector<16x96xf32>
    %c0_15 = arith.constant 0 : index
    %c0_16 = arith.constant 0 : index
    %30 = vector.load %arg5[%c0_15, %c0_16] : memref<1x96xf32, #tpu.memory_space<vmem>>, vector<1x96xf32>
    %31 = vector.broadcast %30 : vector<1x96xf32> to vector<16x96xf32>
    %32 = arith.addf %29, %31 : vector<16x96xf32>
    %33 = vector.extract_strided_slice %32 {offsets = [0, 0], sizes = [16, 32], strides = [1, 1]} : vector<16x96xf32> to vector<16x32xf32>
    %34 = vector.extract_strided_slice %32 {offsets = [0, 32], sizes = [16, 32], strides = [1, 1]} : vector<16x96xf32> to vector<16x32xf32>
    %35 = vector.extract_strided_slice %32 {offsets = [0, 64], sizes = [16, 32], strides = [1, 1]} : vector<16x96xf32> to vector<16x32xf32>
    %cst_17 = arith.constant 0.353553385 : f32
    %36 = vector.broadcast %cst_17 : f32 to vector<16x32xf32>
    %37 = arith.mulf %33, %36 : vector<16x32xf32>
    %38 = vector.shape_cast %37 : vector<16x32xf32> to vector<2x8x32xf32>
    %39 = vector.shape_cast %34 : vector<16x32xf32> to vector<2x8x32xf32>
    %40 = vector.shape_cast %35 : vector<16x32xf32> to vector<2x8x32xf32>
    %41 = vector.extract_strided_slice %38 {offsets = [0, 0, 0], sizes = [2, 8, 8], strides = [1, 1, 1]} : vector<2x8x32xf32> to vector<2x8x8xf32>
    %42 = vector.extract_strided_slice %39 {offsets = [0, 0, 0], sizes = [2, 8, 8], strides = [1, 1, 1]} : vector<2x8x32xf32> to vector<2x8x8xf32>
    %43 = vector.extract_strided_slice %40 {offsets = [0, 0, 0], sizes = [2, 8, 8], strides = [1, 1, 1]} : vector<2x8x32xf32> to vector<2x8x8xf32>
    "tpu.trace_start"() <{level = 10 : i32, message = "bqd,bkd->bqk"}> : () -> ()
    %cst_18 = arith.constant dense<0.000000e+00> : vector<2x8x8xf32>
    %44 = tpu.matmul %41, %42, %cst_18 {dimension_numbers = #tpu.dot_dimension_numbers<[2], [2], [1], [1], [0, 0, 0, 1, 1, 1], [0], [0]>} : vector<2x8x8xf32>, vector<2x8x8xf32>, vector<2x8x8xf32> -> vector<2x8x8xf32>
    "tpu.trace_stop"() : () -> ()
    %cst_19 = arith.constant dense<0xFF800000> : vector<2x8xf32>
    %45 = vector.multi_reduction <maximumf>, %44, %cst_19 [2] : vector<2x8x8xf32> to vector<2x8xf32>
    %46 = vector.shape_cast %45 : vector<2x8xf32> to vector<2x8x1xf32>
    %47 = vector.broadcast %46 : vector<2x8x1xf32> to vector<2x8x8xf32>
    %48 = arith.subf %44, %47 : vector<2x8x8xf32>
    %49 = math.exp %48 : vector<2x8x8xf32>
    %cst_20 = arith.constant dense<0.000000e+00> : vector<2x8xf32>
    %50 = vector.multi_reduction <add>, %49, %cst_20 [2] : vector<2x8x8xf32> to vector<2x8xf32>
    %51 = vector.shape_cast %50 : vector<2x8xf32> to vector<2x8x1xf32>
    %52 = tpu.reciprocal %51 {approx = true} : vector<2x8x1xf32> -> vector<2x8x1xf32>
    %53 = vector.broadcast %52 : vector<2x8x1xf32> to vector<2x8x8xf32>
    %54 = arith.mulf %49, %53 : vector<2x8x8xf32>
    "tpu.trace_start"() <{level = 10 : i32, message = "bqk,bkd->bqd"}> : () -> ()
    %cst_21 = arith.constant dense<0.000000e+00> : vector<2x8x8xf32>
    %55 = tpu.matmul %54, %43, %cst_21 {dimension_numbers = #tpu.dot_dimension_numbers<[2], [1], [1], [2], [0, 0, 0, 1, 1, 2], [0], [0]>} : vector<2x8x8xf32>, vector<2x8x8xf32>, vector<2x8x8xf32> -> vector<2x8x8xf32>
    "tpu.trace_stop"() : () -> ()
    %56 = vector.extract_strided_slice %38 {offsets = [0, 0, 8], sizes = [2, 8, 8], strides = [1, 1, 1]} : vector<2x8x32xf32> to vector<2x8x8xf32>
    %57 = vector.extract_strided_slice %39 {offsets = [0, 0, 8], sizes = [2, 8, 8], strides = [1, 1, 1]} : vector<2x8x32xf32> to vector<2x8x8xf32>
    %58 = vector.extract_strided_slice %40 {offsets = [0, 0, 8], sizes = [2, 8, 8], strides = [1, 1, 1]} : vector<2x8x32xf32> to vector<2x8x8xf32>
    "tpu.trace_start"() <{level = 10 : i32, message = "bqd,bkd->bqk"}> : () -> ()
    %cst_22 = arith.constant dense<0.000000e+00> : vector<2x8x8xf32>
    %59 = tpu.matmul %56, %57, %cst_22 {dimension_numbers = #tpu.dot_dimension_numbers<[2], [2], [1], [1], [0, 0, 0, 1, 1, 1], [0], [0]>} : vector<2x8x8xf32>, vector<2x8x8xf32>, vector<2x8x8xf32> -> vector<2x8x8xf32>
    "tpu.trace_stop"() : () -> ()
    %cst_23 = arith.constant dense<0xFF800000> : vector<2x8xf32>
    %60 = vector.multi_reduction <maximumf>, %59, %cst_23 [2] : vector<2x8x8xf32> to vector<2x8xf32>
    %61 = vector.shape_cast %60 : vector<2x8xf32> to vector<2x8x1xf32>
    %62 = vector.broadcast %61 : vector<2x8x1xf32> to vector<2x8x8xf32>
    %63 = arith.subf %59, %62 : vector<2x8x8xf32>
    %64 = math.exp %63 : vector<2x8x8xf32>
    %cst_24 = arith.constant dense<0.000000e+00> : vector<2x8xf32>
    %65 = vector.multi_reduction <add>, %64, %cst_24 [2] : vector<2x8x8xf32> to vector<2x8xf32>
    %66 = vector.shape_cast %65 : vector<2x8xf32> to vector<2x8x1xf32>
    %67 = tpu.reciprocal %66 {approx = true} : vector<2x8x1xf32> -> vector<2x8x1xf32>
    %68 = vector.broadcast %67 : vector<2x8x1xf32> to vector<2x8x8xf32>
    %69 = arith.mulf %64, %68 : vector<2x8x8xf32>
    "tpu.trace_start"() <{level = 10 : i32, message = "bqk,bkd->bqd"}> : () -> ()
    %cst_25 = arith.constant dense<0.000000e+00> : vector<2x8x8xf32>
    %70 = tpu.matmul %69, %58, %cst_25 {dimension_numbers = #tpu.dot_dimension_numbers<[2], [1], [1], [2], [0, 0, 0, 1, 1, 2], [0], [0]>} : vector<2x8x8xf32>, vector<2x8x8xf32>, vector<2x8x8xf32> -> vector<2x8x8xf32>
    "tpu.trace_stop"() : () -> ()
    %71 = vector.extract_strided_slice %38 {offsets = [0, 0, 16], sizes = [2, 8, 8], strides = [1, 1, 1]} : vector<2x8x32xf32> to vector<2x8x8xf32>
    %72 = vector.extract_strided_slice %39 {offsets = [0, 0, 16], sizes = [2, 8, 8], strides = [1, 1, 1]} : vector<2x8x32xf32> to vector<2x8x8xf32>
    %73 = vector.extract_strided_slice %40 {offsets = [0, 0, 16], sizes = [2, 8, 8], strides = [1, 1, 1]} : vector<2x8x32xf32> to vector<2x8x8xf32>
    "tpu.trace_start"() <{level = 10 : i32, message = "bqd,bkd->bqk"}> : () -> ()
    %cst_26 = arith.constant dense<0.000000e+00> : vector<2x8x8xf32>
    %74 = tpu.matmul %71, %72, %cst_26 {dimension_numbers = #tpu.dot_dimension_numbers<[2], [2], [1], [1], [0, 0, 0, 1, 1, 1], [0], [0]>} : vector<2x8x8xf32>, vector<2x8x8xf32>, vector<2x8x8xf32> -> vector<2x8x8xf32>
    "tpu.trace_stop"() : () -> ()
    %cst_27 = arith.constant dense<0xFF800000> : vector<2x8xf32>
    %75 = vector.multi_reduction <maximumf>, %74, %cst_27 [2] : vector<2x8x8xf32> to vector<2x8xf32>
    %76 = vector.shape_cast %75 : vector<2x8xf32> to vector<2x8x1xf32>
    %77 = vector.broadcast %76 : vector<2x8x1xf32> to vector<2x8x8xf32>
    %78 = arith.subf %74, %77 : vector<2x8x8xf32>
    %79 = math.exp %78 : vector<2x8x8xf32>
    %cst_28 = arith.constant dense<0.000000e+00> : vector<2x8xf32>
    %80 = vector.multi_reduction <add>, %79, %cst_28 [2] : vector<2x8x8xf32> to vector<2x8xf32>
    %81 = vector.shape_cast %80 : vector<2x8xf32> to vector<2x8x1xf32>
    %82 = tpu.reciprocal %81 {approx = true} : vector<2x8x1xf32> -> vector<2x8x1xf32>
    %83 = vector.broadcast %82 : vector<2x8x1xf32> to vector<2x8x8xf32>
    %84 = arith.mulf %79, %83 : vector<2x8x8xf32>
    "tpu.trace_start"() <{level = 10 : i32, message = "bqk,bkd->bqd"}> : () -> ()
    %cst_29 = arith.constant dense<0.000000e+00> : vector<2x8x8xf32>
    %85 = tpu.matmul %84, %73, %cst_29 {dimension_numbers = #tpu.dot_dimension_numbers<[2], [1], [1], [2], [0, 0, 0, 1, 1, 2], [0], [0]>} : vector<2x8x8xf32>, vector<2x8x8xf32>, vector<2x8x8xf32> -> vector<2x8x8xf32>
    "tpu.trace_stop"() : () -> ()
    %86 = vector.extract_strided_slice %38 {offsets = [0, 0, 24], sizes = [2, 8, 8], strides = [1, 1, 1]} : vector<2x8x32xf32> to vector<2x8x8xf32>
    %87 = vector.extract_strided_slice %39 {offsets = [0, 0, 24], sizes = [2, 8, 8], strides = [1, 1, 1]} : vector<2x8x32xf32> to vector<2x8x8xf32>
    %88 = vector.extract_strided_slice %40 {offsets = [0, 0, 24], sizes = [2, 8, 8], strides = [1, 1, 1]} : vector<2x8x32xf32> to vector<2x8x8xf32>
    "tpu.trace_start"() <{level = 10 : i32, message = "bqd,bkd->bqk"}> : () -> ()
    %cst_30 = arith.constant dense<0.000000e+00> : vector<2x8x8xf32>
    %89 = tpu.matmul %86, %87, %cst_30 {dimension_numbers = #tpu.dot_dimension_numbers<[2], [2], [1], [1], [0, 0, 0, 1, 1, 1], [0], [0]>} : vector<2x8x8xf32>, vector<2x8x8xf32>, vector<2x8x8xf32> -> vector<2x8x8xf32>
    "tpu.trace_stop"() : () -> ()
    %cst_31 = arith.constant dense<0xFF800000> : vector<2x8xf32>
    %90 = vector.multi_reduction <maximumf>, %89, %cst_31 [2] : vector<2x8x8xf32> to vector<2x8xf32>
    %91 = vector.shape_cast %90 : vector<2x8xf32> to vector<2x8x1xf32>
    %92 = vector.broadcast %91 : vector<2x8x1xf32> to vector<2x8x8xf32>
    %93 = arith.subf %89, %92 : vector<2x8x8xf32>
    %94 = math.exp %93 : vector<2x8x8xf32>
    %cst_32 = arith.constant dense<0.000000e+00> : vector<2x8xf32>
    %95 = vector.multi_reduction <add>, %94, %cst_32 [2] : vector<2x8x8xf32> to vector<2x8xf32>
    %96 = vector.shape_cast %95 : vector<2x8xf32> to vector<2x8x1xf32>
    %97 = tpu.reciprocal %96 {approx = true} : vector<2x8x1xf32> -> vector<2x8x1xf32>
    %98 = vector.broadcast %97 : vector<2x8x1xf32> to vector<2x8x8xf32>
    %99 = arith.mulf %94, %98 : vector<2x8x8xf32>
    "tpu.trace_start"() <{level = 10 : i32, message = "bqk,bkd->bqd"}> : () -> ()
    %cst_33 = arith.constant dense<0.000000e+00> : vector<2x8x8xf32>
    %100 = tpu.matmul %99, %88, %cst_33 {dimension_numbers = #tpu.dot_dimension_numbers<[2], [1], [1], [2], [0, 0, 0, 1, 1, 2], [0], [0]>} : vector<2x8x8xf32>, vector<2x8x8xf32>, vector<2x8x8xf32> -> vector<2x8x8xf32>
    "tpu.trace_stop"() : () -> ()
    %101 = tpu.concatenate %55, %70, %85, %100 in 2 : vector<2x8x8xf32>, vector<2x8x8xf32>, vector<2x8x8xf32>, vector<2x8x8xf32> -> vector<2x8x32xf32>
    %102 = vector.shape_cast %101 : vector<2x8x32xf32> to vector<16x32xf32>
    %c0_34 = arith.constant 0 : index
    %c0_35 = arith.constant 0 : index
    %103 = vector.load %arg6[%c0_34, %c0_35] : memref<32x32xf32, #tpu.memory_space<vmem>>, vector<32x32xf32>
    %cst_36 = arith.constant dense<0.000000e+00> : vector<16x32xf32>
    %104 = tpu.matmul %102, %103, %cst_36 {dimension_numbers = #tpu.dot_dimension_numbers<[1], [0], [0], [1], [0, 0, 1, 1], [], []>} : vector<16x32xf32>, vector<32x32xf32>, vector<16x32xf32> -> vector<16x32xf32>
    %105 = arith.addf %1, %104 : vector<16x32xf32>
    %c0_37 = arith.constant 0 : index
    %c0_38 = arith.constant 0 : index
    %106 = vector.load %arg7[%c0_37, %c0_38] : memref<1x32xf32, #tpu.memory_space<vmem>>, vector<1x32xf32>
    %107 = vector.broadcast %106 : vector<1x32xf32> to vector<16x32xf32>
    %108 = arith.addf %105, %107 : vector<16x32xf32>
    %c1_39 = arith.constant 1 : index
    %c0_40 = arith.constant 0 : index
    %109 = memref.load %arg1[%c1_39, %c0_40] : memref<7x2xf32, #tpu.memory_space<smem>>
    %c1_41 = arith.constant 1 : index
    %c1_42 = arith.constant 1 : index
    %110 = memref.load %arg1[%c1_41, %c1_42] : memref<7x2xf32, #tpu.memory_space<smem>>
    %cst_43 = arith.constant dense<0.000000e+00> : vector<16xf32>
    %111 = vector.multi_reduction <add>, %108, %cst_43 [1] : vector<16x32xf32> to vector<16xf32>
    %112 = vector.shape_cast %111 : vector<16xf32> to vector<16x1xf32>
    %cst_44 = arith.constant 3.200000e+01 : f32
    %113 = vector.broadcast %cst_44 : f32 to vector<16x1xf32>
    %114 = arith.divf %112, %113 : vector<16x1xf32>
    %115 = vector.broadcast %114 : vector<16x1xf32> to vector<16x32xf32>
    %116 = arith.subf %108, %115 : vector<16x32xf32>
    %117 = arith.mulf %116, %116 : vector<16x32xf32>
    %cst_45 = arith.constant dense<0.000000e+00> : vector<16xf32>
    %118 = vector.multi_reduction <add>, %117, %cst_45 [1] : vector<16x32xf32> to vector<16xf32>
    %119 = vector.shape_cast %118 : vector<16xf32> to vector<16x1xf32>
    %cst_46 = arith.constant 3.100000e+01 : f32
    %120 = vector.broadcast %cst_46 : f32 to vector<16x1xf32>
    %121 = arith.divf %119, %120 : vector<16x1xf32>
    %122 = vector.broadcast %114 : vector<16x1xf32> to vector<16x32xf32>
    %123 = arith.subf %108, %122 : vector<16x32xf32>
    %124 = vector.broadcast %109 : f32 to vector<16x32xf32>
    %125 = arith.mulf %124, %123 : vector<16x32xf32>
    %126 = math.sqrt %121 : vector<16x1xf32>
    %cst_47 = arith.constant 9.99999997E-7 : f32
    %127 = vector.broadcast %cst_47 : f32 to vector<16x1xf32>
    %128 = arith.addf %126, %127 : vector<16x1xf32>
    %129 = vector.broadcast %128 : vector<16x1xf32> to vector<16x32xf32>
    %130 = arith.divf %125, %129 : vector<16x32xf32>
    %131 = vector.broadcast %110 : f32 to vector<16x32xf32>
    %132 = arith.addf %130, %131 : vector<16x32xf32>
    %c0_48 = arith.constant 0 : index
    %c0_49 = arith.constant 0 : index
    %133 = vector.load %arg8[%c0_48, %c0_49] : memref<32x32xf32, #tpu.memory_space<vmem>>, vector<32x32xf32>
    %cst_50 = arith.constant dense<0.000000e+00> : vector<16x32xf32>
    %134 = tpu.matmul %132, %133, %cst_50 {dimension_numbers = #tpu.dot_dimension_numbers<[1], [0], [0], [1], [0, 0, 1, 1], [], []>} : vector<16x32xf32>, vector<32x32xf32>, vector<16x32xf32> -> vector<16x32xf32>
    %c0_51 = arith.constant 0 : index
    %c0_52 = arith.constant 0 : index
    %135 = vector.load %arg9[%c0_51, %c0_52] : memref<1x32xf32, #tpu.memory_space<vmem>>, vector<1x32xf32>
    %136 = vector.broadcast %135 : vector<1x32xf32> to vector<16x32xf32>
    %137 = arith.addf %134, %136 : vector<16x32xf32>
    %c0_53 = arith.constant 0 : index
    %c0_54 = arith.constant 0 : index
    %138 = vector.load %arg10[%c0_53, %c0_54] : memref<32x64xf32, #tpu.memory_space<vmem>>, vector<32x64xf32>
    %cst_55 = arith.constant dense<0.000000e+00> : vector<16x64xf32>
    %139 = tpu.matmul %3, %138, %cst_55 {dimension_numbers = #tpu.dot_dimension_numbers<[1], [0], [0], [1], [0, 0, 1, 1], [], []>} : vector<16x32xf32>, vector<32x64xf32>, vector<16x64xf32> -> vector<16x64xf32>
    %c0_56 = arith.constant 0 : index
    %c0_57 = arith.constant 0 : index
    %140 = vector.load %arg11[%c0_56, %c0_57] : memref<1x64xf32, #tpu.memory_space<vmem>>, vector<1x64xf32>
    %141 = vector.broadcast %140 : vector<1x64xf32> to vector<16x64xf32>
    %142 = arith.addf %139, %141 : vector<16x64xf32>
    %143 = vector.extract_strided_slice %142 {offsets = [0, 0], sizes = [16, 32], strides = [1, 1]} : vector<16x64xf32> to vector<16x32xf32>
    %144 = vector.extract_strided_slice %142 {offsets = [0, 32], sizes = [16, 32], strides = [1, 1]} : vector<16x64xf32> to vector<16x32xf32>
    %cst_58 = arith.constant 0.353553385 : f32
    %145 = vector.broadcast %cst_58 : f32 to vector<16x32xf32>
    %146 = arith.mulf %137, %145 : vector<16x32xf32>
    %147 = vector.shape_cast %146 : vector<16x32xf32> to vector<2x8x32xf32>
    %148 = vector.shape_cast %143 : vector<16x32xf32> to vector<2x8x32xf32>
    %149 = vector.shape_cast %144 : vector<16x32xf32> to vector<2x8x32xf32>
    %150 = vector.extract_strided_slice %147 {offsets = [0, 0, 0], sizes = [2, 8, 8], strides = [1, 1, 1]} : vector<2x8x32xf32> to vector<2x8x8xf32>
    %151 = vector.extract_strided_slice %148 {offsets = [0, 0, 0], sizes = [2, 8, 8], strides = [1, 1, 1]} : vector<2x8x32xf32> to vector<2x8x8xf32>
    %152 = vector.extract_strided_slice %149 {offsets = [0, 0, 0], sizes = [2, 8, 8], strides = [1, 1, 1]} : vector<2x8x32xf32> to vector<2x8x8xf32>
    "tpu.trace_start"() <{level = 10 : i32, message = "bqd,bkd->bqk"}> : () -> ()
    %cst_59 = arith.constant dense<0.000000e+00> : vector<2x8x8xf32>
    %153 = tpu.matmul %150, %151, %cst_59 {dimension_numbers = #tpu.dot_dimension_numbers<[2], [2], [1], [1], [0, 0, 0, 1, 1, 1], [0], [0]>} : vector<2x8x8xf32>, vector<2x8x8xf32>, vector<2x8x8xf32> -> vector<2x8x8xf32>
    "tpu.trace_stop"() : () -> ()
    %cst_60 = arith.constant dense<0xFF800000> : vector<2x8xf32>
    %154 = vector.multi_reduction <maximumf>, %153, %cst_60 [2] : vector<2x8x8xf32> to vector<2x8xf32>
    %155 = vector.shape_cast %154 : vector<2x8xf32> to vector<2x8x1xf32>
    %156 = vector.broadcast %155 : vector<2x8x1xf32> to vector<2x8x8xf32>
    %157 = arith.subf %153, %156 : vector<2x8x8xf32>
    %158 = math.exp %157 : vector<2x8x8xf32>
    %cst_61 = arith.constant dense<0.000000e+00> : vector<2x8xf32>
    %159 = vector.multi_reduction <add>, %158, %cst_61 [2] : vector<2x8x8xf32> to vector<2x8xf32>
    %160 = vector.shape_cast %159 : vector<2x8xf32> to vector<2x8x1xf32>
    %161 = tpu.reciprocal %160 {approx = true} : vector<2x8x1xf32> -> vector<2x8x1xf32>
    %162 = vector.broadcast %161 : vector<2x8x1xf32> to vector<2x8x8xf32>
    %163 = arith.mulf %158, %162 : vector<2x8x8xf32>
    "tpu.trace_start"() <{level = 10 : i32, message = "bqk,bkd->bqd"}> : () -> ()
    %cst_62 = arith.constant dense<0.000000e+00> : vector<2x8x8xf32>
    %164 = tpu.matmul %163, %152, %cst_62 {dimension_numbers = #tpu.dot_dimension_numbers<[2], [1], [1], [2], [0, 0, 0, 1, 1, 2], [0], [0]>} : vector<2x8x8xf32>, vector<2x8x8xf32>, vector<2x8x8xf32> -> vector<2x8x8xf32>
    "tpu.trace_stop"() : () -> ()
    %165 = vector.extract_strided_slice %147 {offsets = [0, 0, 8], sizes = [2, 8, 8], strides = [1, 1, 1]} : vector<2x8x32xf32> to vector<2x8x8xf32>
    %166 = vector.extract_strided_slice %148 {offsets = [0, 0, 8], sizes = [2, 8, 8], strides = [1, 1, 1]} : vector<2x8x32xf32> to vector<2x8x8xf32>
    %167 = vector.extract_strided_slice %149 {offsets = [0, 0, 8], sizes = [2, 8, 8], strides = [1, 1, 1]} : vector<2x8x32xf32> to vector<2x8x8xf32>
    "tpu.trace_start"() <{level = 10 : i32, message = "bqd,bkd->bqk"}> : () -> ()
    %cst_63 = arith.constant dense<0.000000e+00> : vector<2x8x8xf32>
    %168 = tpu.matmul %165, %166, %cst_63 {dimension_numbers = #tpu.dot_dimension_numbers<[2], [2], [1], [1], [0, 0, 0, 1, 1, 1], [0], [0]>} : vector<2x8x8xf32>, vector<2x8x8xf32>, vector<2x8x8xf32> -> vector<2x8x8xf32>
    "tpu.trace_stop"() : () -> ()
    %cst_64 = arith.constant dense<0xFF800000> : vector<2x8xf32>
    %169 = vector.multi_reduction <maximumf>, %168, %cst_64 [2] : vector<2x8x8xf32> to vector<2x8xf32>
    %170 = vector.shape_cast %169 : vector<2x8xf32> to vector<2x8x1xf32>
    %171 = vector.broadcast %170 : vector<2x8x1xf32> to vector<2x8x8xf32>
    %172 = arith.subf %168, %171 : vector<2x8x8xf32>
    %173 = math.exp %172 : vector<2x8x8xf32>
    %cst_65 = arith.constant dense<0.000000e+00> : vector<2x8xf32>
    %174 = vector.multi_reduction <add>, %173, %cst_65 [2] : vector<2x8x8xf32> to vector<2x8xf32>
    %175 = vector.shape_cast %174 : vector<2x8xf32> to vector<2x8x1xf32>
    %176 = tpu.reciprocal %175 {approx = true} : vector<2x8x1xf32> -> vector<2x8x1xf32>
    %177 = vector.broadcast %176 : vector<2x8x1xf32> to vector<2x8x8xf32>
    %178 = arith.mulf %173, %177 : vector<2x8x8xf32>
    "tpu.trace_start"() <{level = 10 : i32, message = "bqk,bkd->bqd"}> : () -> ()
    %cst_66 = arith.constant dense<0.000000e+00> : vector<2x8x8xf32>
    %179 = tpu.matmul %178, %167, %cst_66 {dimension_numbers = #tpu.dot_dimension_numbers<[2], [1], [1], [2], [0, 0, 0, 1, 1, 2], [0], [0]>} : vector<2x8x8xf32>, vector<2x8x8xf32>, vector<2x8x8xf32> -> vector<2x8x8xf32>
    "tpu.trace_stop"() : () -> ()
    %180 = vector.extract_strided_slice %147 {offsets = [0, 0, 16], sizes = [2, 8, 8], strides = [1, 1, 1]} : vector<2x8x32xf32> to vector<2x8x8xf32>
    %181 = vector.extract_strided_slice %148 {offsets = [0, 0, 16], sizes = [2, 8, 8], strides = [1, 1, 1]} : vector<2x8x32xf32> to vector<2x8x8xf32>
    %182 = vector.extract_strided_slice %149 {offsets = [0, 0, 16], sizes = [2, 8, 8], strides = [1, 1, 1]} : vector<2x8x32xf32> to vector<2x8x8xf32>
    "tpu.trace_start"() <{level = 10 : i32, message = "bqd,bkd->bqk"}> : () -> ()
    %cst_67 = arith.constant dense<0.000000e+00> : vector<2x8x8xf32>
    %183 = tpu.matmul %180, %181, %cst_67 {dimension_numbers = #tpu.dot_dimension_numbers<[2], [2], [1], [1], [0, 0, 0, 1, 1, 1], [0], [0]>} : vector<2x8x8xf32>, vector<2x8x8xf32>, vector<2x8x8xf32> -> vector<2x8x8xf32>
    "tpu.trace_stop"() : () -> ()
    %cst_68 = arith.constant dense<0xFF800000> : vector<2x8xf32>
    %184 = vector.multi_reduction <maximumf>, %183, %cst_68 [2] : vector<2x8x8xf32> to vector<2x8xf32>
    %185 = vector.shape_cast %184 : vector<2x8xf32> to vector<2x8x1xf32>
    %186 = vector.broadcast %185 : vector<2x8x1xf32> to vector<2x8x8xf32>
    %187 = arith.subf %183, %186 : vector<2x8x8xf32>
    %188 = math.exp %187 : vector<2x8x8xf32>
    %cst_69 = arith.constant dense<0.000000e+00> : vector<2x8xf32>
    %189 = vector.multi_reduction <add>, %188, %cst_69 [2] : vector<2x8x8xf32> to vector<2x8xf32>
    %190 = vector.shape_cast %189 : vector<2x8xf32> to vector<2x8x1xf32>
    %191 = tpu.reciprocal %190 {approx = true} : vector<2x8x1xf32> -> vector<2x8x1xf32>
    %192 = vector.broadcast %191 : vector<2x8x1xf32> to vector<2x8x8xf32>
    %193 = arith.mulf %188, %192 : vector<2x8x8xf32>
    "tpu.trace_start"() <{level = 10 : i32, message = "bqk,bkd->bqd"}> : () -> ()
    %cst_70 = arith.constant dense<0.000000e+00> : vector<2x8x8xf32>
    %194 = tpu.matmul %193, %182, %cst_70 {dimension_numbers = #tpu.dot_dimension_numbers<[2], [1], [1], [2], [0, 0, 0, 1, 1, 2], [0], [0]>} : vector<2x8x8xf32>, vector<2x8x8xf32>, vector<2x8x8xf32> -> vector<2x8x8xf32>
    "tpu.trace_stop"() : () -> ()
    %195 = vector.extract_strided_slice %147 {offsets = [0, 0, 24], sizes = [2, 8, 8], strides = [1, 1, 1]} : vector<2x8x32xf32> to vector<2x8x8xf32>
    %196 = vector.extract_strided_slice %148 {offsets = [0, 0, 24], sizes = [2, 8, 8], strides = [1, 1, 1]} : vector<2x8x32xf32> to vector<2x8x8xf32>
    %197 = vector.extract_strided_slice %149 {offsets = [0, 0, 24], sizes = [2, 8, 8], strides = [1, 1, 1]} : vector<2x8x32xf32> to vector<2x8x8xf32>
    "tpu.trace_start"() <{level = 10 : i32, message = "bqd,bkd->bqk"}> : () -> ()
    %cst_71 = arith.constant dense<0.000000e+00> : vector<2x8x8xf32>
    %198 = tpu.matmul %195, %196, %cst_71 {dimension_numbers = #tpu.dot_dimension_numbers<[2], [2], [1], [1], [0, 0, 0, 1, 1, 1], [0], [0]>} : vector<2x8x8xf32>, vector<2x8x8xf32>, vector<2x8x8xf32> -> vector<2x8x8xf32>
    "tpu.trace_stop"() : () -> ()
    %cst_72 = arith.constant dense<0xFF800000> : vector<2x8xf32>
    %199 = vector.multi_reduction <maximumf>, %198, %cst_72 [2] : vector<2x8x8xf32> to vector<2x8xf32>
    %200 = vector.shape_cast %199 : vector<2x8xf32> to vector<2x8x1xf32>
    %201 = vector.broadcast %200 : vector<2x8x1xf32> to vector<2x8x8xf32>
    %202 = arith.subf %198, %201 : vector<2x8x8xf32>
    %203 = math.exp %202 : vector<2x8x8xf32>
    %cst_73 = arith.constant dense<0.000000e+00> : vector<2x8xf32>
    %204 = vector.multi_reduction <add>, %203, %cst_73 [2] : vector<2x8x8xf32> to vector<2x8xf32>
    %205 = vector.shape_cast %204 : vector<2x8xf32> to vector<2x8x1xf32>
    %206 = tpu.reciprocal %205 {approx = true} : vector<2x8x1xf32> -> vector<2x8x1xf32>
    %207 = vector.broadcast %206 : vector<2x8x1xf32> to vector<2x8x8xf32>
    %208 = arith.mulf %203, %207 : vector<2x8x8xf32>
    "tpu.trace_start"() <{level = 10 : i32, message = "bqk,bkd->bqd"}> : () -> ()
    %cst_74 = arith.constant dense<0.000000e+00> : vector<2x8x8xf32>
    %209 = tpu.matmul %208, %197, %cst_74 {dimension_numbers = #tpu.dot_dimension_numbers<[2], [1], [1], [2], [0, 0, 0, 1, 1, 2], [0], [0]>} : vector<2x8x8xf32>, vector<2x8x8xf32>, vector<2x8x8xf32> -> vector<2x8x8xf32>
    "tpu.trace_stop"() : () -> ()
    %210 = tpu.concatenate %164, %179, %194, %209 in 2 : vector<2x8x8xf32>, vector<2x8x8xf32>, vector<2x8x8xf32>, vector<2x8x8xf32> -> vector<2x8x32xf32>
    %211 = vector.shape_cast %210 : vector<2x8x32xf32> to vector<16x32xf32>
    %c0_75 = arith.constant 0 : index
    %c0_76 = arith.constant 0 : index
    %212 = vector.load %arg12[%c0_75, %c0_76] : memref<32x32xf32, #tpu.memory_space<vmem>>, vector<32x32xf32>
    %cst_77 = arith.constant dense<0.000000e+00> : vector<16x32xf32>
    %213 = tpu.matmul %211, %212, %cst_77 {dimension_numbers = #tpu.dot_dimension_numbers<[1], [0], [0], [1], [0, 0, 1, 1], [], []>} : vector<16x32xf32>, vector<32x32xf32>, vector<16x32xf32> -> vector<16x32xf32>
    %214 = arith.addf %108, %213 : vector<16x32xf32>
    %c0_78 = arith.constant 0 : index
    %c0_79 = arith.constant 0 : index
    %215 = vector.load %arg13[%c0_78, %c0_79] : memref<1x32xf32, #tpu.memory_space<vmem>>, vector<1x32xf32>
    %216 = vector.broadcast %215 : vector<1x32xf32> to vector<16x32xf32>
    %217 = arith.addf %214, %216 : vector<16x32xf32>
    %c2 = arith.constant 2 : index
    %c0_80 = arith.constant 0 : index
    %218 = memref.load %arg1[%c2, %c0_80] : memref<7x2xf32, #tpu.memory_space<smem>>
    %c2_81 = arith.constant 2 : index
    %c1_82 = arith.constant 1 : index
    %219 = memref.load %arg1[%c2_81, %c1_82] : memref<7x2xf32, #tpu.memory_space<smem>>
    %cst_83 = arith.constant dense<0.000000e+00> : vector<16xf32>
    %220 = vector.multi_reduction <add>, %217, %cst_83 [1] : vector<16x32xf32> to vector<16xf32>
    %221 = vector.shape_cast %220 : vector<16xf32> to vector<16x1xf32>
    %cst_84 = arith.constant 3.200000e+01 : f32
    %222 = vector.broadcast %cst_84 : f32 to vector<16x1xf32>
    %223 = arith.divf %221, %222 : vector<16x1xf32>
    %224 = vector.broadcast %223 : vector<16x1xf32> to vector<16x32xf32>
    %225 = arith.subf %217, %224 : vector<16x32xf32>
    %226 = arith.mulf %225, %225 : vector<16x32xf32>
    %cst_85 = arith.constant dense<0.000000e+00> : vector<16xf32>
    %227 = vector.multi_reduction <add>, %226, %cst_85 [1] : vector<16x32xf32> to vector<16xf32>
    %228 = vector.shape_cast %227 : vector<16xf32> to vector<16x1xf32>
    %cst_86 = arith.constant 3.100000e+01 : f32
    %229 = vector.broadcast %cst_86 : f32 to vector<16x1xf32>
    %230 = arith.divf %228, %229 : vector<16x1xf32>
    %231 = vector.broadcast %223 : vector<16x1xf32> to vector<16x32xf32>
    %232 = arith.subf %217, %231 : vector<16x32xf32>
    %233 = vector.broadcast %218 : f32 to vector<16x32xf32>
    %234 = arith.mulf %233, %232 : vector<16x32xf32>
    %235 = math.sqrt %230 : vector<16x1xf32>
    %cst_87 = arith.constant 9.99999997E-7 : f32
    %236 = vector.broadcast %cst_87 : f32 to vector<16x1xf32>
    %237 = arith.addf %235, %236 : vector<16x1xf32>
    %238 = vector.broadcast %237 : vector<16x1xf32> to vector<16x32xf32>
    %239 = arith.divf %234, %238 : vector<16x32xf32>
    %240 = vector.broadcast %219 : f32 to vector<16x32xf32>
    %241 = arith.addf %239, %240 : vector<16x32xf32>
    %c0_88 = arith.constant 0 : index
    %c0_89 = arith.constant 0 : index
    %242 = vector.load %arg14[%c0_88, %c0_89] : memref<32x64xf32, #tpu.memory_space<vmem>>, vector<32x64xf32>
    %cst_90 = arith.constant dense<0.000000e+00> : vector<16x64xf32>
    %243 = tpu.matmul %241, %242, %cst_90 {dimension_numbers = #tpu.dot_dimension_numbers<[1], [0], [0], [1], [0, 0, 1, 1], [], []>} : vector<16x32xf32>, vector<32x64xf32>, vector<16x64xf32> -> vector<16x64xf32>
    %c0_91 = arith.constant 0 : index
    %c0_92 = arith.constant 0 : index
    %244 = vector.load %arg15[%c0_91, %c0_92] : memref<1x64xf32, #tpu.memory_space<vmem>>, vector<1x64xf32>
    %245 = vector.broadcast %244 : vector<1x64xf32> to vector<16x64xf32>
    %246 = arith.addf %243, %245 : vector<16x64xf32>
    %cst_93 = arith.constant 0.000000e+00 : f32
    %247 = vector.broadcast %cst_93 : f32 to vector<16x64xf32>
    %248 = arith.maximumf %246, %247 : vector<16x64xf32>
    %c0_94 = arith.constant 0 : index
    %c0_95 = arith.constant 0 : index
    %249 = vector.load %arg16[%c0_94, %c0_95] : memref<64x32xf32, #tpu.memory_space<vmem>>, vector<64x32xf32>
    %cst_96 = arith.constant dense<0.000000e+00> : vector<16x32xf32>
    %250 = tpu.matmul %248, %249, %cst_96 {dimension_numbers = #tpu.dot_dimension_numbers<[1], [0], [0], [1], [0, 0, 1, 1], [], []>} : vector<16x64xf32>, vector<64x32xf32>, vector<16x32xf32> -> vector<16x32xf32>
    %251 = arith.addf %217, %250 : vector<16x32xf32>
    %c0_97 = arith.constant 0 : index
    %c0_98 = arith.constant 0 : index
    %252 = vector.load %arg17[%c0_97, %c0_98] : memref<1x32xf32, #tpu.memory_space<vmem>>, vector<1x32xf32>
    %253 = vector.broadcast %252 : vector<1x32xf32> to vector<16x32xf32>
    %254 = arith.addf %251, %253 : vector<16x32xf32>
    %c3 = arith.constant 3 : index
    %c0_99 = arith.constant 0 : index
    %255 = memref.load %arg1[%c3, %c0_99] : memref<7x2xf32, #tpu.memory_space<smem>>
    %c3_100 = arith.constant 3 : index
    %c1_101 = arith.constant 1 : index
    %256 = memref.load %arg1[%c3_100, %c1_101] : memref<7x2xf32, #tpu.memory_space<smem>>
    %cst_102 = arith.constant dense<0.000000e+00> : vector<16xf32>
    %257 = vector.multi_reduction <add>, %254, %cst_102 [1] : vector<16x32xf32> to vector<16xf32>
    %258 = vector.shape_cast %257 : vector<16xf32> to vector<16x1xf32>
    %cst_103 = arith.constant 3.200000e+01 : f32
    %259 = vector.broadcast %cst_103 : f32 to vector<16x1xf32>
    %260 = arith.divf %258, %259 : vector<16x1xf32>
    %261 = vector.broadcast %260 : vector<16x1xf32> to vector<16x32xf32>
    %262 = arith.subf %254, %261 : vector<16x32xf32>
    %263 = arith.mulf %262, %262 : vector<16x32xf32>
    %cst_104 = arith.constant dense<0.000000e+00> : vector<16xf32>
    %264 = vector.multi_reduction <add>, %263, %cst_104 [1] : vector<16x32xf32> to vector<16xf32>
    %265 = vector.shape_cast %264 : vector<16xf32> to vector<16x1xf32>
    %cst_105 = arith.constant 3.100000e+01 : f32
    %266 = vector.broadcast %cst_105 : f32 to vector<16x1xf32>
    %267 = arith.divf %265, %266 : vector<16x1xf32>
    %268 = vector.broadcast %260 : vector<16x1xf32> to vector<16x32xf32>
    %269 = arith.subf %254, %268 : vector<16x32xf32>
    %270 = vector.broadcast %255 : f32 to vector<16x32xf32>
    %271 = arith.mulf %270, %269 : vector<16x32xf32>
    %272 = math.sqrt %267 : vector<16x1xf32>
    %cst_106 = arith.constant 9.99999997E-7 : f32
    %273 = vector.broadcast %cst_106 : f32 to vector<16x1xf32>
    %274 = arith.addf %272, %273 : vector<16x1xf32>
    %275 = vector.broadcast %274 : vector<16x1xf32> to vector<16x32xf32>
    %276 = arith.divf %271, %275 : vector<16x32xf32>
    %277 = vector.broadcast %256 : f32 to vector<16x32xf32>
    %278 = arith.addf %276, %277 : vector<16x32xf32>
    %c0_107 = arith.constant 0 : index
    %c0_108 = arith.constant 0 : index
    %279 = vector.load %arg18[%c0_107, %c0_108] : memref<32x96xf32, #tpu.memory_space<vmem>>, vector<32x96xf32>
    %cst_109 = arith.constant dense<0.000000e+00> : vector<16x96xf32>
    %280 = tpu.matmul %278, %279, %cst_109 {dimension_numbers = #tpu.dot_dimension_numbers<[1], [0], [0], [1], [0, 0, 1, 1], [], []>} : vector<16x32xf32>, vector<32x96xf32>, vector<16x96xf32> -> vector<16x96xf32>
    %c0_110 = arith.constant 0 : index
    %c0_111 = arith.constant 0 : index
    %281 = vector.load %arg19[%c0_110, %c0_111] : memref<1x96xf32, #tpu.memory_space<vmem>>, vector<1x96xf32>
    %282 = vector.broadcast %281 : vector<1x96xf32> to vector<16x96xf32>
    %283 = arith.addf %280, %282 : vector<16x96xf32>
    %284 = vector.extract_strided_slice %283 {offsets = [0, 0], sizes = [16, 32], strides = [1, 1]} : vector<16x96xf32> to vector<16x32xf32>
    %285 = vector.extract_strided_slice %283 {offsets = [0, 32], sizes = [16, 32], strides = [1, 1]} : vector<16x96xf32> to vector<16x32xf32>
    %286 = vector.extract_strided_slice %283 {offsets = [0, 64], sizes = [16, 32], strides = [1, 1]} : vector<16x96xf32> to vector<16x32xf32>
    %cst_112 = arith.constant 0.353553385 : f32
    %287 = vector.broadcast %cst_112 : f32 to vector<16x32xf32>
    %288 = arith.mulf %284, %287 : vector<16x32xf32>
    %289 = vector.shape_cast %288 : vector<16x32xf32> to vector<2x8x32xf32>
    %290 = vector.shape_cast %285 : vector<16x32xf32> to vector<2x8x32xf32>
    %291 = vector.shape_cast %286 : vector<16x32xf32> to vector<2x8x32xf32>
    %292 = vector.extract_strided_slice %289 {offsets = [0, 0, 0], sizes = [2, 8, 8], strides = [1, 1, 1]} : vector<2x8x32xf32> to vector<2x8x8xf32>
    %293 = vector.extract_strided_slice %290 {offsets = [0, 0, 0], sizes = [2, 8, 8], strides = [1, 1, 1]} : vector<2x8x32xf32> to vector<2x8x8xf32>
    %294 = vector.extract_strided_slice %291 {offsets = [0, 0, 0], sizes = [2, 8, 8], strides = [1, 1, 1]} : vector<2x8x32xf32> to vector<2x8x8xf32>
    "tpu.trace_start"() <{level = 10 : i32, message = "bqd,bkd->bqk"}> : () -> ()
    %cst_113 = arith.constant dense<0.000000e+00> : vector<2x8x8xf32>
    %295 = tpu.matmul %292, %293, %cst_113 {dimension_numbers = #tpu.dot_dimension_numbers<[2], [2], [1], [1], [0, 0, 0, 1, 1, 1], [0], [0]>} : vector<2x8x8xf32>, vector<2x8x8xf32>, vector<2x8x8xf32> -> vector<2x8x8xf32>
    "tpu.trace_stop"() : () -> ()
    %cst_114 = arith.constant dense<0xFF800000> : vector<2x8xf32>
    %296 = vector.multi_reduction <maximumf>, %295, %cst_114 [2] : vector<2x8x8xf32> to vector<2x8xf32>
    %297 = vector.shape_cast %296 : vector<2x8xf32> to vector<2x8x1xf32>
    %298 = vector.broadcast %297 : vector<2x8x1xf32> to vector<2x8x8xf32>
    %299 = arith.subf %295, %298 : vector<2x8x8xf32>
    %300 = math.exp %299 : vector<2x8x8xf32>
    %cst_115 = arith.constant dense<0.000000e+00> : vector<2x8xf32>
    %301 = vector.multi_reduction <add>, %300, %cst_115 [2] : vector<2x8x8xf32> to vector<2x8xf32>
    %302 = vector.shape_cast %301 : vector<2x8xf32> to vector<2x8x1xf32>
    %303 = tpu.reciprocal %302 {approx = true} : vector<2x8x1xf32> -> vector<2x8x1xf32>
    %304 = vector.broadcast %303 : vector<2x8x1xf32> to vector<2x8x8xf32>
    %305 = arith.mulf %300, %304 : vector<2x8x8xf32>
    "tpu.trace_start"() <{level = 10 : i32, message = "bqk,bkd->bqd"}> : () -> ()
    %cst_116 = arith.constant dense<0.000000e+00> : vector<2x8x8xf32>
    %306 = tpu.matmul %305, %294, %cst_116 {dimension_numbers = #tpu.dot_dimension_numbers<[2], [1], [1], [2], [0, 0, 0, 1, 1, 2], [0], [0]>} : vector<2x8x8xf32>, vector<2x8x8xf32>, vector<2x8x8xf32> -> vector<2x8x8xf32>
    "tpu.trace_stop"() : () -> ()
    %307 = vector.extract_strided_slice %289 {offsets = [0, 0, 8], sizes = [2, 8, 8], strides = [1, 1, 1]} : vector<2x8x32xf32> to vector<2x8x8xf32>
    %308 = vector.extract_strided_slice %290 {offsets = [0, 0, 8], sizes = [2, 8, 8], strides = [1, 1, 1]} : vector<2x8x32xf32> to vector<2x8x8xf32>
    %309 = vector.extract_strided_slice %291 {offsets = [0, 0, 8], sizes = [2, 8, 8], strides = [1, 1, 1]} : vector<2x8x32xf32> to vector<2x8x8xf32>
    "tpu.trace_start"() <{level = 10 : i32, message = "bqd,bkd->bqk"}> : () -> ()
    %cst_117 = arith.constant dense<0.000000e+00> : vector<2x8x8xf32>
    %310 = tpu.matmul %307, %308, %cst_117 {dimension_numbers = #tpu.dot_dimension_numbers<[2], [2], [1], [1], [0, 0, 0, 1, 1, 1], [0], [0]>} : vector<2x8x8xf32>, vector<2x8x8xf32>, vector<2x8x8xf32> -> vector<2x8x8xf32>
    "tpu.trace_stop"() : () -> ()
    %cst_118 = arith.constant dense<0xFF800000> : vector<2x8xf32>
    %311 = vector.multi_reduction <maximumf>, %310, %cst_118 [2] : vector<2x8x8xf32> to vector<2x8xf32>
    %312 = vector.shape_cast %311 : vector<2x8xf32> to vector<2x8x1xf32>
    %313 = vector.broadcast %312 : vector<2x8x1xf32> to vector<2x8x8xf32>
    %314 = arith.subf %310, %313 : vector<2x8x8xf32>
    %315 = math.exp %314 : vector<2x8x8xf32>
    %cst_119 = arith.constant dense<0.000000e+00> : vector<2x8xf32>
    %316 = vector.multi_reduction <add>, %315, %cst_119 [2] : vector<2x8x8xf32> to vector<2x8xf32>
    %317 = vector.shape_cast %316 : vector<2x8xf32> to vector<2x8x1xf32>
    %318 = tpu.reciprocal %317 {approx = true} : vector<2x8x1xf32> -> vector<2x8x1xf32>
    %319 = vector.broadcast %318 : vector<2x8x1xf32> to vector<2x8x8xf32>
    %320 = arith.mulf %315, %319 : vector<2x8x8xf32>
    "tpu.trace_start"() <{level = 10 : i32, message = "bqk,bkd->bqd"}> : () -> ()
    %cst_120 = arith.constant dense<0.000000e+00> : vector<2x8x8xf32>
    %321 = tpu.matmul %320, %309, %cst_120 {dimension_numbers = #tpu.dot_dimension_numbers<[2], [1], [1], [2], [0, 0, 0, 1, 1, 2], [0], [0]>} : vector<2x8x8xf32>, vector<2x8x8xf32>, vector<2x8x8xf32> -> vector<2x8x8xf32>
    "tpu.trace_stop"() : () -> ()
    %322 = vector.extract_strided_slice %289 {offsets = [0, 0, 16], sizes = [2, 8, 8], strides = [1, 1, 1]} : vector<2x8x32xf32> to vector<2x8x8xf32>
    %323 = vector.extract_strided_slice %290 {offsets = [0, 0, 16], sizes = [2, 8, 8], strides = [1, 1, 1]} : vector<2x8x32xf32> to vector<2x8x8xf32>
    %324 = vector.extract_strided_slice %291 {offsets = [0, 0, 16], sizes = [2, 8, 8], strides = [1, 1, 1]} : vector<2x8x32xf32> to vector<2x8x8xf32>
    "tpu.trace_start"() <{level = 10 : i32, message = "bqd,bkd->bqk"}> : () -> ()
    %cst_121 = arith.constant dense<0.000000e+00> : vector<2x8x8xf32>
    %325 = tpu.matmul %322, %323, %cst_121 {dimension_numbers = #tpu.dot_dimension_numbers<[2], [2], [1], [1], [0, 0, 0, 1, 1, 1], [0], [0]>} : vector<2x8x8xf32>, vector<2x8x8xf32>, vector<2x8x8xf32> -> vector<2x8x8xf32>
    "tpu.trace_stop"() : () -> ()
    %cst_122 = arith.constant dense<0xFF800000> : vector<2x8xf32>
    %326 = vector.multi_reduction <maximumf>, %325, %cst_122 [2] : vector<2x8x8xf32> to vector<2x8xf32>
    %327 = vector.shape_cast %326 : vector<2x8xf32> to vector<2x8x1xf32>
    %328 = vector.broadcast %327 : vector<2x8x1xf32> to vector<2x8x8xf32>
    %329 = arith.subf %325, %328 : vector<2x8x8xf32>
    %330 = math.exp %329 : vector<2x8x8xf32>
    %cst_123 = arith.constant dense<0.000000e+00> : vector<2x8xf32>
    %331 = vector.multi_reduction <add>, %330, %cst_123 [2] : vector<2x8x8xf32> to vector<2x8xf32>
    %332 = vector.shape_cast %331 : vector<2x8xf32> to vector<2x8x1xf32>
    %333 = tpu.reciprocal %332 {approx = true} : vector<2x8x1xf32> -> vector<2x8x1xf32>
    %334 = vector.broadcast %333 : vector<2x8x1xf32> to vector<2x8x8xf32>
    %335 = arith.mulf %330, %334 : vector<2x8x8xf32>
    "tpu.trace_start"() <{level = 10 : i32, message = "bqk,bkd->bqd"}> : () -> ()
    %cst_124 = arith.constant dense<0.000000e+00> : vector<2x8x8xf32>
    %336 = tpu.matmul %335, %324, %cst_124 {dimension_numbers = #tpu.dot_dimension_numbers<[2], [1], [1], [2], [0, 0, 0, 1, 1, 2], [0], [0]>} : vector<2x8x8xf32>, vector<2x8x8xf32>, vector<2x8x8xf32> -> vector<2x8x8xf32>
    "tpu.trace_stop"() : () -> ()
    %337 = vector.extract_strided_slice %289 {offsets = [0, 0, 24], sizes = [2, 8, 8], strides = [1, 1, 1]} : vector<2x8x32xf32> to vector<2x8x8xf32>
    %338 = vector.extract_strided_slice %290 {offsets = [0, 0, 24], sizes = [2, 8, 8], strides = [1, 1, 1]} : vector<2x8x32xf32> to vector<2x8x8xf32>
    %339 = vector.extract_strided_slice %291 {offsets = [0, 0, 24], sizes = [2, 8, 8], strides = [1, 1, 1]} : vector<2x8x32xf32> to vector<2x8x8xf32>
    "tpu.trace_start"() <{level = 10 : i32, message = "bqd,bkd->bqk"}> : () -> ()
    %cst_125 = arith.constant dense<0.000000e+00> : vector<2x8x8xf32>
    %340 = tpu.matmul %337, %338, %cst_125 {dimension_numbers = #tpu.dot_dimension_numbers<[2], [2], [1], [1], [0, 0, 0, 1, 1, 1], [0], [0]>} : vector<2x8x8xf32>, vector<2x8x8xf32>, vector<2x8x8xf32> -> vector<2x8x8xf32>
    "tpu.trace_stop"() : () -> ()
    %cst_126 = arith.constant dense<0xFF800000> : vector<2x8xf32>
    %341 = vector.multi_reduction <maximumf>, %340, %cst_126 [2] : vector<2x8x8xf32> to vector<2x8xf32>
    %342 = vector.shape_cast %341 : vector<2x8xf32> to vector<2x8x1xf32>
    %343 = vector.broadcast %342 : vector<2x8x1xf32> to vector<2x8x8xf32>
    %344 = arith.subf %340, %343 : vector<2x8x8xf32>
    %345 = math.exp %344 : vector<2x8x8xf32>
    %cst_127 = arith.constant dense<0.000000e+00> : vector<2x8xf32>
    %346 = vector.multi_reduction <add>, %345, %cst_127 [2] : vector<2x8x8xf32> to vector<2x8xf32>
    %347 = vector.shape_cast %346 : vector<2x8xf32> to vector<2x8x1xf32>
    %348 = tpu.reciprocal %347 {approx = true} : vector<2x8x1xf32> -> vector<2x8x1xf32>
    %349 = vector.broadcast %348 : vector<2x8x1xf32> to vector<2x8x8xf32>
    %350 = arith.mulf %345, %349 : vector<2x8x8xf32>
    "tpu.trace_start"() <{level = 10 : i32, message = "bqk,bkd->bqd"}> : () -> ()
    %cst_128 = arith.constant dense<0.000000e+00> : vector<2x8x8xf32>
    %351 = tpu.matmul %350, %339, %cst_128 {dimension_numbers = #tpu.dot_dimension_numbers<[2], [1], [1], [2], [0, 0, 0, 1, 1, 2], [0], [0]>} : vector<2x8x8xf32>, vector<2x8x8xf32>, vector<2x8x8xf32> -> vector<2x8x8xf32>
    "tpu.trace_stop"() : () -> ()
    %352 = tpu.concatenate %306, %321, %336, %351 in 2 : vector<2x8x8xf32>, vector<2x8x8xf32>, vector<2x8x8xf32>, vector<2x8x8xf32> -> vector<2x8x32xf32>
    %353 = vector.shape_cast %352 : vector<2x8x32xf32> to vector<16x32xf32>
    %c0_129 = arith.constant 0 : index
    %c0_130 = arith.constant 0 : index
    %354 = vector.load %arg20[%c0_129, %c0_130] : memref<32x32xf32, #tpu.memory_space<vmem>>, vector<32x32xf32>
    %cst_131 = arith.constant dense<0.000000e+00> : vector<16x32xf32>
    %355 = tpu.matmul %353, %354, %cst_131 {dimension_numbers = #tpu.dot_dimension_numbers<[1], [0], [0], [1], [0, 0, 1, 1], [], []>} : vector<16x32xf32>, vector<32x32xf32>, vector<16x32xf32> -> vector<16x32xf32>
    %356 = arith.addf %254, %355 : vector<16x32xf32>
    %c0_132 = arith.constant 0 : index
    %c0_133 = arith.constant 0 : index
    %357 = vector.load %arg21[%c0_132, %c0_133] : memref<1x32xf32, #tpu.memory_space<vmem>>, vector<1x32xf32>
    %358 = vector.broadcast %357 : vector<1x32xf32> to vector<16x32xf32>
    %359 = arith.addf %356, %358 : vector<16x32xf32>
    %c4 = arith.constant 4 : index
    %c0_134 = arith.constant 0 : index
    %360 = memref.load %arg1[%c4, %c0_134] : memref<7x2xf32, #tpu.memory_space<smem>>
    %c4_135 = arith.constant 4 : index
    %c1_136 = arith.constant 1 : index
    %361 = memref.load %arg1[%c4_135, %c1_136] : memref<7x2xf32, #tpu.memory_space<smem>>
    %cst_137 = arith.constant dense<0.000000e+00> : vector<16xf32>
    %362 = vector.multi_reduction <add>, %359, %cst_137 [1] : vector<16x32xf32> to vector<16xf32>
    %363 = vector.shape_cast %362 : vector<16xf32> to vector<16x1xf32>
    %cst_138 = arith.constant 3.200000e+01 : f32
    %364 = vector.broadcast %cst_138 : f32 to vector<16x1xf32>
    %365 = arith.divf %363, %364 : vector<16x1xf32>
    %366 = vector.broadcast %365 : vector<16x1xf32> to vector<16x32xf32>
    %367 = arith.subf %359, %366 : vector<16x32xf32>
    %368 = arith.mulf %367, %367 : vector<16x32xf32>
    %cst_139 = arith.constant dense<0.000000e+00> : vector<16xf32>
    %369 = vector.multi_reduction <add>, %368, %cst_139 [1] : vector<16x32xf32> to vector<16xf32>
    %370 = vector.shape_cast %369 : vector<16xf32> to vector<16x1xf32>
    %cst_140 = arith.constant 3.100000e+01 : f32
    %371 = vector.broadcast %cst_140 : f32 to vector<16x1xf32>
    %372 = arith.divf %370, %371 : vector<16x1xf32>
    %373 = vector.broadcast %365 : vector<16x1xf32> to vector<16x32xf32>
    %374 = arith.subf %359, %373 : vector<16x32xf32>
    %375 = vector.broadcast %360 : f32 to vector<16x32xf32>
    %376 = arith.mulf %375, %374 : vector<16x32xf32>
    %377 = math.sqrt %372 : vector<16x1xf32>
    %cst_141 = arith.constant 9.99999997E-7 : f32
    %378 = vector.broadcast %cst_141 : f32 to vector<16x1xf32>
    %379 = arith.addf %377, %378 : vector<16x1xf32>
    %380 = vector.broadcast %379 : vector<16x1xf32> to vector<16x32xf32>
    %381 = arith.divf %376, %380 : vector<16x32xf32>
    %382 = vector.broadcast %361 : f32 to vector<16x32xf32>
    %383 = arith.addf %381, %382 : vector<16x32xf32>
    %c0_142 = arith.constant 0 : index
    %c0_143 = arith.constant 0 : index
    %384 = vector.load %arg22[%c0_142, %c0_143] : memref<32x32xf32, #tpu.memory_space<vmem>>, vector<32x32xf32>
    %cst_144 = arith.constant dense<0.000000e+00> : vector<16x32xf32>
    %385 = tpu.matmul %383, %384, %cst_144 {dimension_numbers = #tpu.dot_dimension_numbers<[1], [0], [0], [1], [0, 0, 1, 1], [], []>} : vector<16x32xf32>, vector<32x32xf32>, vector<16x32xf32> -> vector<16x32xf32>
    %c0_145 = arith.constant 0 : index
    %c0_146 = arith.constant 0 : index
    %386 = vector.load %arg23[%c0_145, %c0_146] : memref<1x32xf32, #tpu.memory_space<vmem>>, vector<1x32xf32>
    %387 = vector.broadcast %386 : vector<1x32xf32> to vector<16x32xf32>
    %388 = arith.addf %385, %387 : vector<16x32xf32>
    %c0_147 = arith.constant 0 : index
    %c0_148 = arith.constant 0 : index
    %389 = vector.load %arg24[%c0_147, %c0_148] : memref<32x64xf32, #tpu.memory_space<vmem>>, vector<32x64xf32>
    %cst_149 = arith.constant dense<0.000000e+00> : vector<16x64xf32>
    %390 = tpu.matmul %3, %389, %cst_149 {dimension_numbers = #tpu.dot_dimension_numbers<[1], [0], [0], [1], [0, 0, 1, 1], [], []>} : vector<16x32xf32>, vector<32x64xf32>, vector<16x64xf32> -> vector<16x64xf32>
    %c0_150 = arith.constant 0 : index
    %c0_151 = arith.constant 0 : index
    %391 = vector.load %arg25[%c0_150, %c0_151] : memref<1x64xf32, #tpu.memory_space<vmem>>, vector<1x64xf32>
    %392 = vector.broadcast %391 : vector<1x64xf32> to vector<16x64xf32>
    %393 = arith.addf %390, %392 : vector<16x64xf32>
    %394 = vector.extract_strided_slice %393 {offsets = [0, 0], sizes = [16, 32], strides = [1, 1]} : vector<16x64xf32> to vector<16x32xf32>
    %395 = vector.extract_strided_slice %393 {offsets = [0, 32], sizes = [16, 32], strides = [1, 1]} : vector<16x64xf32> to vector<16x32xf32>
    %cst_152 = arith.constant 0.353553385 : f32
    %396 = vector.broadcast %cst_152 : f32 to vector<16x32xf32>
    %397 = arith.mulf %388, %396 : vector<16x32xf32>
    %398 = vector.shape_cast %397 : vector<16x32xf32> to vector<2x8x32xf32>
    %399 = vector.shape_cast %394 : vector<16x32xf32> to vector<2x8x32xf32>
    %400 = vector.shape_cast %395 : vector<16x32xf32> to vector<2x8x32xf32>
    %401 = vector.extract_strided_slice %398 {offsets = [0, 0, 0], sizes = [2, 8, 8], strides = [1, 1, 1]} : vector<2x8x32xf32> to vector<2x8x8xf32>
    %402 = vector.extract_strided_slice %399 {offsets = [0, 0, 0], sizes = [2, 8, 8], strides = [1, 1, 1]} : vector<2x8x32xf32> to vector<2x8x8xf32>
    %403 = vector.extract_strided_slice %400 {offsets = [0, 0, 0], sizes = [2, 8, 8], strides = [1, 1, 1]} : vector<2x8x32xf32> to vector<2x8x8xf32>
    "tpu.trace_start"() <{level = 10 : i32, message = "bqd,bkd->bqk"}> : () -> ()
    %cst_153 = arith.constant dense<0.000000e+00> : vector<2x8x8xf32>
    %404 = tpu.matmul %401, %402, %cst_153 {dimension_numbers = #tpu.dot_dimension_numbers<[2], [2], [1], [1], [0, 0, 0, 1, 1, 1], [0], [0]>} : vector<2x8x8xf32>, vector<2x8x8xf32>, vector<2x8x8xf32> -> vector<2x8x8xf32>
    "tpu.trace_stop"() : () -> ()
    %cst_154 = arith.constant dense<0xFF800000> : vector<2x8xf32>
    %405 = vector.multi_reduction <maximumf>, %404, %cst_154 [2] : vector<2x8x8xf32> to vector<2x8xf32>
    %406 = vector.shape_cast %405 : vector<2x8xf32> to vector<2x8x1xf32>
    %407 = vector.broadcast %406 : vector<2x8x1xf32> to vector<2x8x8xf32>
    %408 = arith.subf %404, %407 : vector<2x8x8xf32>
    %409 = math.exp %408 : vector<2x8x8xf32>
    %cst_155 = arith.constant dense<0.000000e+00> : vector<2x8xf32>
    %410 = vector.multi_reduction <add>, %409, %cst_155 [2] : vector<2x8x8xf32> to vector<2x8xf32>
    %411 = vector.shape_cast %410 : vector<2x8xf32> to vector<2x8x1xf32>
    %412 = tpu.reciprocal %411 {approx = true} : vector<2x8x1xf32> -> vector<2x8x1xf32>
    %413 = vector.broadcast %412 : vector<2x8x1xf32> to vector<2x8x8xf32>
    %414 = arith.mulf %409, %413 : vector<2x8x8xf32>
    "tpu.trace_start"() <{level = 10 : i32, message = "bqk,bkd->bqd"}> : () -> ()
    %cst_156 = arith.constant dense<0.000000e+00> : vector<2x8x8xf32>
    %415 = tpu.matmul %414, %403, %cst_156 {dimension_numbers = #tpu.dot_dimension_numbers<[2], [1], [1], [2], [0, 0, 0, 1, 1, 2], [0], [0]>} : vector<2x8x8xf32>, vector<2x8x8xf32>, vector<2x8x8xf32> -> vector<2x8x8xf32>
    "tpu.trace_stop"() : () -> ()
    %416 = vector.extract_strided_slice %398 {offsets = [0, 0, 8], sizes = [2, 8, 8], strides = [1, 1, 1]} : vector<2x8x32xf32> to vector<2x8x8xf32>
    %417 = vector.extract_strided_slice %399 {offsets = [0, 0, 8], sizes = [2, 8, 8], strides = [1, 1, 1]} : vector<2x8x32xf32> to vector<2x8x8xf32>
    %418 = vector.extract_strided_slice %400 {offsets = [0, 0, 8], sizes = [2, 8, 8], strides = [1, 1, 1]} : vector<2x8x32xf32> to vector<2x8x8xf32>
    "tpu.trace_start"() <{level = 10 : i32, message = "bqd,bkd->bqk"}> : () -> ()
    %cst_157 = arith.constant dense<0.000000e+00> : vector<2x8x8xf32>
    %419 = tpu.matmul %416, %417, %cst_157 {dimension_numbers = #tpu.dot_dimension_numbers<[2], [2], [1], [1], [0, 0, 0, 1, 1, 1], [0], [0]>} : vector<2x8x8xf32>, vector<2x8x8xf32>, vector<2x8x8xf32> -> vector<2x8x8xf32>
    "tpu.trace_stop"() : () -> ()
    %cst_158 = arith.constant dense<0xFF800000> : vector<2x8xf32>
    %420 = vector.multi_reduction <maximumf>, %419, %cst_158 [2] : vector<2x8x8xf32> to vector<2x8xf32>
    %421 = vector.shape_cast %420 : vector<2x8xf32> to vector<2x8x1xf32>
    %422 = vector.broadcast %421 : vector<2x8x1xf32> to vector<2x8x8xf32>
    %423 = arith.subf %419, %422 : vector<2x8x8xf32>
    %424 = math.exp %423 : vector<2x8x8xf32>
    %cst_159 = arith.constant dense<0.000000e+00> : vector<2x8xf32>
    %425 = vector.multi_reduction <add>, %424, %cst_159 [2] : vector<2x8x8xf32> to vector<2x8xf32>
    %426 = vector.shape_cast %425 : vector<2x8xf32> to vector<2x8x1xf32>
    %427 = tpu.reciprocal %426 {approx = true} : vector<2x8x1xf32> -> vector<2x8x1xf32>
    %428 = vector.broadcast %427 : vector<2x8x1xf32> to vector<2x8x8xf32>
    %429 = arith.mulf %424, %428 : vector<2x8x8xf32>
    "tpu.trace_start"() <{level = 10 : i32, message = "bqk,bkd->bqd"}> : () -> ()
    %cst_160 = arith.constant dense<0.000000e+00> : vector<2x8x8xf32>
    %430 = tpu.matmul %429, %418, %cst_160 {dimension_numbers = #tpu.dot_dimension_numbers<[2], [1], [1], [2], [0, 0, 0, 1, 1, 2], [0], [0]>} : vector<2x8x8xf32>, vector<2x8x8xf32>, vector<2x8x8xf32> -> vector<2x8x8xf32>
    "tpu.trace_stop"() : () -> ()
    %431 = vector.extract_strided_slice %398 {offsets = [0, 0, 16], sizes = [2, 8, 8], strides = [1, 1, 1]} : vector<2x8x32xf32> to vector<2x8x8xf32>
    %432 = vector.extract_strided_slice %399 {offsets = [0, 0, 16], sizes = [2, 8, 8], strides = [1, 1, 1]} : vector<2x8x32xf32> to vector<2x8x8xf32>
    %433 = vector.extract_strided_slice %400 {offsets = [0, 0, 16], sizes = [2, 8, 8], strides = [1, 1, 1]} : vector<2x8x32xf32> to vector<2x8x8xf32>
    "tpu.trace_start"() <{level = 10 : i32, message = "bqd,bkd->bqk"}> : () -> ()
    %cst_161 = arith.constant dense<0.000000e+00> : vector<2x8x8xf32>
    %434 = tpu.matmul %431, %432, %cst_161 {dimension_numbers = #tpu.dot_dimension_numbers<[2], [2], [1], [1], [0, 0, 0, 1, 1, 1], [0], [0]>} : vector<2x8x8xf32>, vector<2x8x8xf32>, vector<2x8x8xf32> -> vector<2x8x8xf32>
    "tpu.trace_stop"() : () -> ()
    %cst_162 = arith.constant dense<0xFF800000> : vector<2x8xf32>
    %435 = vector.multi_reduction <maximumf>, %434, %cst_162 [2] : vector<2x8x8xf32> to vector<2x8xf32>
    %436 = vector.shape_cast %435 : vector<2x8xf32> to vector<2x8x1xf32>
    %437 = vector.broadcast %436 : vector<2x8x1xf32> to vector<2x8x8xf32>
    %438 = arith.subf %434, %437 : vector<2x8x8xf32>
    %439 = math.exp %438 : vector<2x8x8xf32>
    %cst_163 = arith.constant dense<0.000000e+00> : vector<2x8xf32>
    %440 = vector.multi_reduction <add>, %439, %cst_163 [2] : vector<2x8x8xf32> to vector<2x8xf32>
    %441 = vector.shape_cast %440 : vector<2x8xf32> to vector<2x8x1xf32>
    %442 = tpu.reciprocal %441 {approx = true} : vector<2x8x1xf32> -> vector<2x8x1xf32>
    %443 = vector.broadcast %442 : vector<2x8x1xf32> to vector<2x8x8xf32>
    %444 = arith.mulf %439, %443 : vector<2x8x8xf32>
    "tpu.trace_start"() <{level = 10 : i32, message = "bqk,bkd->bqd"}> : () -> ()
    %cst_164 = arith.constant dense<0.000000e+00> : vector<2x8x8xf32>
    %445 = tpu.matmul %444, %433, %cst_164 {dimension_numbers = #tpu.dot_dimension_numbers<[2], [1], [1], [2], [0, 0, 0, 1, 1, 2], [0], [0]>} : vector<2x8x8xf32>, vector<2x8x8xf32>, vector<2x8x8xf32> -> vector<2x8x8xf32>
    "tpu.trace_stop"() : () -> ()
    %446 = vector.extract_strided_slice %398 {offsets = [0, 0, 24], sizes = [2, 8, 8], strides = [1, 1, 1]} : vector<2x8x32xf32> to vector<2x8x8xf32>
    %447 = vector.extract_strided_slice %399 {offsets = [0, 0, 24], sizes = [2, 8, 8], strides = [1, 1, 1]} : vector<2x8x32xf32> to vector<2x8x8xf32>
    %448 = vector.extract_strided_slice %400 {offsets = [0, 0, 24], sizes = [2, 8, 8], strides = [1, 1, 1]} : vector<2x8x32xf32> to vector<2x8x8xf32>
    "tpu.trace_start"() <{level = 10 : i32, message = "bqd,bkd->bqk"}> : () -> ()
    %cst_165 = arith.constant dense<0.000000e+00> : vector<2x8x8xf32>
    %449 = tpu.matmul %446, %447, %cst_165 {dimension_numbers = #tpu.dot_dimension_numbers<[2], [2], [1], [1], [0, 0, 0, 1, 1, 1], [0], [0]>} : vector<2x8x8xf32>, vector<2x8x8xf32>, vector<2x8x8xf32> -> vector<2x8x8xf32>
    "tpu.trace_stop"() : () -> ()
    %cst_166 = arith.constant dense<0xFF800000> : vector<2x8xf32>
    %450 = vector.multi_reduction <maximumf>, %449, %cst_166 [2] : vector<2x8x8xf32> to vector<2x8xf32>
    %451 = vector.shape_cast %450 : vector<2x8xf32> to vector<2x8x1xf32>
    %452 = vector.broadcast %451 : vector<2x8x1xf32> to vector<2x8x8xf32>
    %453 = arith.subf %449, %452 : vector<2x8x8xf32>
    %454 = math.exp %453 : vector<2x8x8xf32>
    %cst_167 = arith.constant dense<0.000000e+00> : vector<2x8xf32>
    %455 = vector.multi_reduction <add>, %454, %cst_167 [2] : vector<2x8x8xf32> to vector<2x8xf32>
    %456 = vector.shape_cast %455 : vector<2x8xf32> to vector<2x8x1xf32>
    %457 = tpu.reciprocal %456 {approx = true} : vector<2x8x1xf32> -> vector<2x8x1xf32>
    %458 = vector.broadcast %457 : vector<2x8x1xf32> to vector<2x8x8xf32>
    %459 = arith.mulf %454, %458 : vector<2x8x8xf32>
    "tpu.trace_start"() <{level = 10 : i32, message = "bqk,bkd->bqd"}> : () -> ()
    %cst_168 = arith.constant dense<0.000000e+00> : vector<2x8x8xf32>
    %460 = tpu.matmul %459, %448, %cst_168 {dimension_numbers = #tpu.dot_dimension_numbers<[2], [1], [1], [2], [0, 0, 0, 1, 1, 2], [0], [0]>} : vector<2x8x8xf32>, vector<2x8x8xf32>, vector<2x8x8xf32> -> vector<2x8x8xf32>
    "tpu.trace_stop"() : () -> ()
    %461 = tpu.concatenate %415, %430, %445, %460 in 2 : vector<2x8x8xf32>, vector<2x8x8xf32>, vector<2x8x8xf32>, vector<2x8x8xf32> -> vector<2x8x32xf32>
    %462 = vector.shape_cast %461 : vector<2x8x32xf32> to vector<16x32xf32>
    %c0_169 = arith.constant 0 : index
    %c0_170 = arith.constant 0 : index
    %463 = vector.load %arg26[%c0_169, %c0_170] : memref<32x32xf32, #tpu.memory_space<vmem>>, vector<32x32xf32>
    %cst_171 = arith.constant dense<0.000000e+00> : vector<16x32xf32>
    %464 = tpu.matmul %462, %463, %cst_171 {dimension_numbers = #tpu.dot_dimension_numbers<[1], [0], [0], [1], [0, 0, 1, 1], [], []>} : vector<16x32xf32>, vector<32x32xf32>, vector<16x32xf32> -> vector<16x32xf32>
    %465 = arith.addf %359, %464 : vector<16x32xf32>
    %c0_172 = arith.constant 0 : index
    %c0_173 = arith.constant 0 : index
    %466 = vector.load %arg27[%c0_172, %c0_173] : memref<1x32xf32, #tpu.memory_space<vmem>>, vector<1x32xf32>
    %467 = vector.broadcast %466 : vector<1x32xf32> to vector<16x32xf32>
    %468 = arith.addf %465, %467 : vector<16x32xf32>
    %c5 = arith.constant 5 : index
    %c0_174 = arith.constant 0 : index
    %469 = memref.load %arg1[%c5, %c0_174] : memref<7x2xf32, #tpu.memory_space<smem>>
    %c5_175 = arith.constant 5 : index
    %c1_176 = arith.constant 1 : index
    %470 = memref.load %arg1[%c5_175, %c1_176] : memref<7x2xf32, #tpu.memory_space<smem>>
    %cst_177 = arith.constant dense<0.000000e+00> : vector<16xf32>
    %471 = vector.multi_reduction <add>, %468, %cst_177 [1] : vector<16x32xf32> to vector<16xf32>
    %472 = vector.shape_cast %471 : vector<16xf32> to vector<16x1xf32>
    %cst_178 = arith.constant 3.200000e+01 : f32
    %473 = vector.broadcast %cst_178 : f32 to vector<16x1xf32>
    %474 = arith.divf %472, %473 : vector<16x1xf32>
    %475 = vector.broadcast %474 : vector<16x1xf32> to vector<16x32xf32>
    %476 = arith.subf %468, %475 : vector<16x32xf32>
    %477 = arith.mulf %476, %476 : vector<16x32xf32>
    %cst_179 = arith.constant dense<0.000000e+00> : vector<16xf32>
    %478 = vector.multi_reduction <add>, %477, %cst_179 [1] : vector<16x32xf32> to vector<16xf32>
    %479 = vector.shape_cast %478 : vector<16xf32> to vector<16x1xf32>
    %cst_180 = arith.constant 3.100000e+01 : f32
    %480 = vector.broadcast %cst_180 : f32 to vector<16x1xf32>
    %481 = arith.divf %479, %480 : vector<16x1xf32>
    %482 = vector.broadcast %474 : vector<16x1xf32> to vector<16x32xf32>
    %483 = arith.subf %468, %482 : vector<16x32xf32>
    %484 = vector.broadcast %469 : f32 to vector<16x32xf32>
    %485 = arith.mulf %484, %483 : vector<16x32xf32>
    %486 = math.sqrt %481 : vector<16x1xf32>
    %cst_181 = arith.constant 9.99999997E-7 : f32
    %487 = vector.broadcast %cst_181 : f32 to vector<16x1xf32>
    %488 = arith.addf %486, %487 : vector<16x1xf32>
    %489 = vector.broadcast %488 : vector<16x1xf32> to vector<16x32xf32>
    %490 = arith.divf %485, %489 : vector<16x32xf32>
    %491 = vector.broadcast %470 : f32 to vector<16x32xf32>
    %492 = arith.addf %490, %491 : vector<16x32xf32>
    %c0_182 = arith.constant 0 : index
    %c0_183 = arith.constant 0 : index
    %493 = vector.load %arg28[%c0_182, %c0_183] : memref<32x64xf32, #tpu.memory_space<vmem>>, vector<32x64xf32>
    %cst_184 = arith.constant dense<0.000000e+00> : vector<16x64xf32>
    %494 = tpu.matmul %492, %493, %cst_184 {dimension_numbers = #tpu.dot_dimension_numbers<[1], [0], [0], [1], [0, 0, 1, 1], [], []>} : vector<16x32xf32>, vector<32x64xf32>, vector<16x64xf32> -> vector<16x64xf32>
    %c0_185 = arith.constant 0 : index
    %c0_186 = arith.constant 0 : index
    %495 = vector.load %arg29[%c0_185, %c0_186] : memref<1x64xf32, #tpu.memory_space<vmem>>, vector<1x64xf32>
    %496 = vector.broadcast %495 : vector<1x64xf32> to vector<16x64xf32>
    %497 = arith.addf %494, %496 : vector<16x64xf32>
    %cst_187 = arith.constant 0.000000e+00 : f32
    %498 = vector.broadcast %cst_187 : f32 to vector<16x64xf32>
    %499 = arith.maximumf %497, %498 : vector<16x64xf32>
    %c0_188 = arith.constant 0 : index
    %c0_189 = arith.constant 0 : index
    %500 = vector.load %arg30[%c0_188, %c0_189] : memref<64x32xf32, #tpu.memory_space<vmem>>, vector<64x32xf32>
    %cst_190 = arith.constant dense<0.000000e+00> : vector<16x32xf32>
    %501 = tpu.matmul %499, %500, %cst_190 {dimension_numbers = #tpu.dot_dimension_numbers<[1], [0], [0], [1], [0, 0, 1, 1], [], []>} : vector<16x64xf32>, vector<64x32xf32>, vector<16x32xf32> -> vector<16x32xf32>
    %502 = arith.addf %468, %501 : vector<16x32xf32>
    %c0_191 = arith.constant 0 : index
    %c0_192 = arith.constant 0 : index
    %503 = vector.load %arg31[%c0_191, %c0_192] : memref<1x32xf32, #tpu.memory_space<vmem>>, vector<1x32xf32>
    %504 = vector.broadcast %503 : vector<1x32xf32> to vector<16x32xf32>
    %505 = arith.addf %502, %504 : vector<16x32xf32>
    %c6 = arith.constant 6 : index
    %c0_193 = arith.constant 0 : index
    %506 = memref.load %arg1[%c6, %c0_193] : memref<7x2xf32, #tpu.memory_space<smem>>
    %c6_194 = arith.constant 6 : index
    %c1_195 = arith.constant 1 : index
    %507 = memref.load %arg1[%c6_194, %c1_195] : memref<7x2xf32, #tpu.memory_space<smem>>
    %cst_196 = arith.constant dense<0.000000e+00> : vector<16xf32>
    %508 = vector.multi_reduction <add>, %505, %cst_196 [1] : vector<16x32xf32> to vector<16xf32>
    %509 = vector.shape_cast %508 : vector<16xf32> to vector<16x1xf32>
    %cst_197 = arith.constant 3.200000e+01 : f32
    %510 = vector.broadcast %cst_197 : f32 to vector<16x1xf32>
    %511 = arith.divf %509, %510 : vector<16x1xf32>
    %512 = vector.broadcast %511 : vector<16x1xf32> to vector<16x32xf32>
    %513 = arith.subf %505, %512 : vector<16x32xf32>
    %514 = arith.mulf %513, %513 : vector<16x32xf32>
    %cst_198 = arith.constant dense<0.000000e+00> : vector<16xf32>
    %515 = vector.multi_reduction <add>, %514, %cst_198 [1] : vector<16x32xf32> to vector<16xf32>
    %516 = vector.shape_cast %515 : vector<16xf32> to vector<16x1xf32>
    %cst_199 = arith.constant 3.100000e+01 : f32
    %517 = vector.broadcast %cst_199 : f32 to vector<16x1xf32>
    %518 = arith.divf %516, %517 : vector<16x1xf32>
    %519 = vector.broadcast %511 : vector<16x1xf32> to vector<16x32xf32>
    %520 = arith.subf %505, %519 : vector<16x32xf32>
    %521 = vector.broadcast %506 : f32 to vector<16x32xf32>
    %522 = arith.mulf %521, %520 : vector<16x32xf32>
    %523 = math.sqrt %518 : vector<16x1xf32>
    %cst_200 = arith.constant 9.99999997E-7 : f32
    %524 = vector.broadcast %cst_200 : f32 to vector<16x1xf32>
    %525 = arith.addf %523, %524 : vector<16x1xf32>
    %526 = vector.broadcast %525 : vector<16x1xf32> to vector<16x32xf32>
    %527 = arith.divf %522, %526 : vector<16x32xf32>
    %528 = vector.broadcast %507 : f32 to vector<16x32xf32>
    %529 = arith.addf %527, %528 : vector<16x32xf32>
    %530 = vector.shape_cast %529 : vector<16x32xf32> to vector<2x8x32xf32>
    %c0_201 = arith.constant 0 : index
    %c0_202 = arith.constant 0 : index
    %c0_203 = arith.constant 0 : index
    %531 = vector.load %arg32[%c0_201, %c0_202, %c0_203] : memref<2x8x32xf32, #tpu.memory_space<vmem>>, vector<2x8x32xf32>
    tpu.vector_store %arg32[%c0_201, %c0_202, %c0_203], %530 {strides = array<i32>} : memref<2x8x32xf32, #tpu.memory_space<vmem>>, vector<2x8x32xf32>,
    return
  }
  func.func @transform_0(%arg0: i32) -> (i32, i32) {
    %c0_i32 = arith.constant 0 : i32
    %c0_i32_0 = arith.constant 0 : i32
    %c0_i32_1 = arith.constant 0 : i32
    return %c0_i32, %c0_i32_0 : i32, i32
  }
  func.func @transform_1(%arg0: i32) -> (i32, i32, i32) {
    %c0_i32 = arith.constant 0 : i32
    %c0_i32_0 = arith.constant 0 : i32
    %c0_i32_1 = arith.constant 0 : i32
    return %arg0, %c0_i32, %c0_i32_0 : i32, i32, i32
  }
  func.func @transform_2(%arg0: i32) -> (i32, i32, i32) {
    %c0_i32 = arith.constant 0 : i32
    %c0_i32_0 = arith.constant 0 : i32
    %c0_i32_1 = arith.constant 0 : i32
    return %arg0, %c0_i32, %c0_i32_0 : i32, i32, i32
  }
  func.func @transform_3(%arg0: i32) -> (i32, i32) {
    %c0_i32 = arith.constant 0 : i32
    %c0_i32_0 = arith.constant 0 : i32
    %c0_i32_1 = arith.constant 0 : i32
    return %c0_i32, %c0_i32_0 : i32, i32
  }
  func.func @transform_4(%arg0: i32) -> (i32, i32) {
    %c0_i32 = arith.constant 0 : i32
    %c0_i32_0 = arith.constant 0 : i32
    %c0_i32_1 = arith.constant 0 : i32
    return %c0_i32, %c0_i32_0 : i32, i32
  }
  func.func @transform_5(%arg0: i32) -> (i32, i32) {
    %c0_i32 = arith.constant 0 : i32
    %c0_i32_0 = arith.constant 0 : i32
    %c0_i32_1 = arith.constant 0 : i32
    return %c0_i32, %c0_i32_0 : i32, i32
  }
  func.func @transform_6(%arg0: i32) -> (i32, i32) {
    %c0_i32 = arith.constant 0 : i32
    %c0_i32_0 = arith.constant 0 : i32
    %c0_i32_1 = arith.constant 0 : i32
    return %c0_i32, %c0_i32_0 : i32, i32
  }
  func.func @transform_7(%arg0: i32) -> (i32, i32) {
    %c0_i32 = arith.constant 0 : i32
    %c0_i32_0 = arith.constant 0 : i32
    %c0_i32_1 = arith.constant 0 : i32
    return %c0_i32, %c0_i32_0 : i32, i32
  }
  func.func @transform_8(%arg0: i32) -> (i32, i32) {
    %c0_i32 = arith.constant 0 : i32
    %c0_i32_0 = arith.constant 0 : i32
    %c0_i32_1 = arith.constant 0 : i32
    return %c0_i32, %c0_i32_0 : i32, i32
  }
  func.func @transform_9(%arg0: i32) -> (i32, i32) {
    %c0_i32 = arith.constant 0 : i32
    %c0_i32_0 = arith.constant 0 : i32
    %c0_i32_1 = arith.constant 0 : i32
    return %c0_i32, %c0_i32_0 : i32, i32
  }
  func.func @transform_10(%arg0: i32) -> (i32, i32) {
    %c0_i32 = arith.constant 0 : i32
    %c0_i32_0 = arith.constant 0 : i32
    %c0_i32_1 = arith.constant 0 : i32
    return %c0_i32, %c0_i32_0 : i32, i32
  }
  func.func @transform_11(%arg0: i32) -> (i32, i32) {
    %c0_i32 = arith.constant 0 : i32
    %c0_i32_0 = arith.constant 0 : i32
    %c0_i32_1 = arith.constant 0 : i32
    return %c0_i32, %c0_i32_0 : i32, i32
  }
  func.func @transform_12(%arg0: i32) -> (i32, i32) {
    %c0_i32 = arith.constant 0 : i32
    %c0_i32_0 = arith.constant 0 : i32
    %c0_i32_1 = arith.constant 0 : i32
    return %c0_i32, %c0_i32_0 : i32, i32
  }
  func.func @transform_13(%arg0: i32) -> (i32, i32) {
    %c0_i32 = arith.constant 0 : i32
    %c0_i32_0 = arith.constant 0 : i32
    %c0_i32_1 = arith.constant 0 : i32
    return %c0_i32, %c0_i32_0 : i32, i32
  }
  func.func @transform_14(%arg0: i32) -> (i32, i32) {
    %c0_i32 = arith.constant 0 : i32
    %c0_i32_0 = arith.constant 0 : i32
    %c0_i32_1 = arith.constant 0 : i32
    return %c0_i32, %c0_i32_0 : i32, i32
  }
  func.func @transform_15(%arg0: i32) -> (i32, i32) {
    %c0_i32 = arith.constant 0 : i32
    %c0_i32_0 = arith.constant 0 : i32
    %c0_i32_1 = arith.constant 0 : i32
    return %c0_i32, %c0_i32_0 : i32, i32
  }
  func.func @transform_16(%arg0: i32) -> (i32, i32) {
    %c0_i32 = arith.constant 0 : i32
    %c0_i32_0 = arith.constant 0 : i32
    %c0_i32_1 = arith.constant 0 : i32
    return %c0_i32, %c0_i32_0 : i32, i32
  }
  func.func @transform_17(%arg0: i32) -> (i32, i32) {
    %c0_i32 = arith.constant 0 : i32
    %c0_i32_0 = arith.constant 0 : i32
    %c0_i32_1 = arith.constant 0 : i32
    return %c0_i32, %c0_i32_0 : i32, i32
  }
  func.func @transform_18(%arg0: i32) -> (i32, i32) {
    %c0_i32 = arith.constant 0 : i32
    %c0_i32_0 = arith.constant 0 : i32
    %c0_i32_1 = arith.constant 0 : i32
    return %c0_i32, %c0_i32_0 : i32, i32
  }
  func.func @transform_19(%arg0: i32) -> (i32, i32) {
    %c0_i32 = arith.constant 0 : i32
    %c0_i32_0 = arith.constant 0 : i32
    %c0_i32_1 = arith.constant 0 : i32
    return %c0_i32, %c0_i32_0 : i32, i32
  }
  func.func @transform_20(%arg0: i32) -> (i32, i32) {
    %c0_i32 = arith.constant 0 : i32
    %c0_i32_0 = arith.constant 0 : i32
    %c0_i32_1 = arith.constant 0 : i32
    return %c0_i32, %c0_i32_0 : i32, i32
  }
  func.func @transform_21(%arg0: i32) -> (i32, i32) {
    %c0_i32 = arith.constant 0 : i32
    %c0_i32_0 = arith.constant 0 : i32
    %c0_i32_1 = arith.constant 0 : i32
    return %c0_i32, %c0_i32_0 : i32, i32
  }
  func.func @transform_22(%arg0: i32) -> (i32, i32) {
    %c0_i32 = arith.constant 0 : i32
    %c0_i32_0 = arith.constant 0 : i32
    %c0_i32_1 = arith.constant 0 : i32
    return %c0_i32, %c0_i32_0 : i32, i32
  }
  func.func @transform_23(%arg0: i32) -> (i32, i32) {
    %c0_i32 = arith.constant 0 : i32
    %c0_i32_0 = arith.constant 0 : i32
    %c0_i32_1 = arith.constant 0 : i32
    return %c0_i32, %c0_i32_0 : i32, i32
  }
  func.func @transform_24(%arg0: i32) -> (i32, i32) {
    %c0_i32 = arith.constant 0 : i32
    %c0_i32_0 = arith.constant 0 : i32
    %c0_i32_1 = arith.constant 0 : i32
    return %c0_i32, %c0_i32_0 : i32, i32
  }
  func.func @transform_25(%arg0: i32) -> (i32, i32) {
    %c0_i32 = arith.constant 0 : i32
    %c0_i32_0 = arith.constant 0 : i32
    %c0_i32_1 = arith.constant 0 : i32
    return %c0_i32, %c0_i32_0 : i32, i32
  }
  func.func @transform_26(%arg0: i32) -> (i32, i32) {
    %c0_i32 = arith.constant 0 : i32
    %c0_i32_0 = arith.constant 0 : i32
    %c0_i32_1 = arith.constant 0 : i32
    return %c0_i32, %c0_i32_0 : i32, i32
  }
  func.func @transform_27(%arg0: i32) -> (i32, i32) {
    %c0_i32 = arith.constant 0 : i32
    %c0_i32_0 = arith.constant 0 : i32
    %c0_i32_1 = arith.constant 0 : i32
    return %c0_i32, %c0_i32_0 : i32, i32
  }
  func.func @transform_28(%arg0: i32) -> (i32, i32) {
    %c0_i32 = arith.constant 0 : i32
    %c0_i32_0 = arith.constant 0 : i32
    %c0_i32_1 = arith.constant 0 : i32
    return %c0_i32, %c0_i32_0 : i32, i32
  }
  func.func @transform_29(%arg0: i32) -> (i32, i32) {
    %c0_i32 = arith.constant 0 : i32
    %c0_i32_0 = arith.constant 0 : i32
    %c0_i32_1 = arith.constant 0 : i32
    return %c0_i32, %c0_i32_0 : i32, i32
  }
  func.func @transform_30(%arg0: i32) -> (i32, i32) {
    %c0_i32 = arith.constant 0 : i32
    %c0_i32_0 = arith.constant 0 : i32
    %c0_i32_1 = arith.constant 0 : i32
    return %c0_i32, %c0_i32_0 : i32, i32
  }
  func.func @transform_31(%arg0: i32) -> (i32, i32, i32) {
    %c0_i32 = arith.constant 0 : i32
    %c0_i32_0 = arith.constant 0 : i32
    %c0_i32_1 = arith.constant 0 : i32
    return %arg0, %c0_i32, %c0_i32_0 : i32, i32, i32
  }
}

</mosaic_0001>

<llo_original>
// kernel: tpu_custom_call.1
$region0: #{tpu_custom_call.1}
  #allocation0 [shape = 'u32[]', space=smem, size = 0x4, offset = 0x4, fixed_abs, tag = 'smem constant byte address 0x4 - core index']
  #allocation1 [shape = 'u32[72,128]{1,0:T(1,128)}', space=vmem, size = 0x9000, scoped, tag = 'internal scratch']
  %s0 = inlined_call_operand.smem [shape: u32[32], index: -1, kind: input, shape index: {}]
  %s1 = sld [smem:[%s0]]
  %s2 = scalar_lea.smem %s0, 1
  %s3 = sld [smem:[%s2]]
  %s4 = scalar_lea.smem %s0, 2
  %s5 = sld [smem:[%s4]]
  %s6 = scalar_lea.smem %s0, 3
  %s7 = sld [smem:[%s6]]
  %s8 = scalar_lea.smem %s0, 4
  %s9 = sld [smem:[%s8]]
  %s10 = scalar_lea.smem %s0, 5
  %s11 = sld [smem:[%s10]]
  %s12 = scalar_lea.smem %s0, 6
  %s13 = sld [smem:[%s12]]
  %s14 = scalar_lea.smem %s0, 7
  %s15 = sld [smem:[%s14]]
  %s16 = scalar_lea.smem %s0, 8
  %s17 = sld [smem:[%s16]]
  %s18 = scalar_lea.smem %s0, 9
  %s19 = sld [smem:[%s18]]
  %s20 = scalar_lea.smem %s0, 10
  %s21 = sld [smem:[%s20]]
  %s22 = scalar_lea.smem %s0, 11
  %s23 = sld [smem:[%s22]]
  %s24 = scalar_lea.smem %s0, 12
  %s25 = sld [smem:[%s24]]
  %s26 = scalar_lea.smem %s0, 13
  %s27 = sld [smem:[%s26]]
  %s28 = scalar_lea.smem %s0, 14
  %s29 = sld [smem:[%s28]]
  %s30 = scalar_lea.smem %s0, 15
  %s31 = sld [smem:[%s30]]
  %s32 = scalar_lea.smem %s0, 16
  %s33 = sld [smem:[%s32]]
  %s34 = scalar_lea.smem %s0, 17
  %s35 = sld [smem:[%s34]]
  %s36 = scalar_lea.smem %s0, 18
  %s37 = sld [smem:[%s36]]
  %s38 = scalar_lea.smem %s0, 19
  %s39 = sld [smem:[%s38]]
  %s40 = scalar_lea.smem %s0, 20
  %s41 = sld [smem:[%s40]]
  %s42 = scalar_lea.smem %s0, 21
  %s43 = sld [smem:[%s42]]
  %s44 = scalar_lea.smem %s0, 22
  %s45 = sld [smem:[%s44]]
  %s46 = scalar_lea.smem %s0, 23
  %s47 = sld [smem:[%s46]]
  %s48 = scalar_lea.smem %s0, 24
  %s49 = sld [smem:[%s48]]
  %s50 = scalar_lea.smem %s0, 25
  %s51 = sld [smem:[%s50]]
  %s52 = scalar_lea.smem %s0, 26
  %s53 = sld [smem:[%s52]]
  %s54 = scalar_lea.smem %s0, 27
  %s55 = sld [smem:[%s54]]
  %s56 = scalar_lea.smem %s0, 28
  %s57 = sld [smem:[%s56]]
  %s58 = scalar_lea.smem %s0, 29
  %s59 = sld [smem:[%s58]]
  %s60 = scalar_lea.smem %s0, 30
  %s61 = sld [smem:[%s60]]
  %s62 = scalar_lea.smem %s0, 31
  %s63 = sld [smem:[%s62]]
  %s64 = sld [smem:[#allocation0]]
  $region214: #{tpu_custom_call.1} parent=0
    _
  %s66 = ssub.s32 1, %s64
  %s67 = scalar_select 0, %s66, %s64
  $region1: #{tpu_custom_call.1} parent=0
    #allocation2 [shape = 'u8[4096]{0}', space=smem, size = 0x1000, scoped, tag = 'input window, operand 0, single buffered']
    #allocation3 [shape = 's32[1]{0}', space=sflag, size = 0x4, scoped, tag = 'scoped memory for tpu_custom_call.1']
    #allocation4 [shape = 's32[1]{0}', space=sflag, size = 0x4, scoped, tag = 'scoped memory for tpu_custom_call.1']
    #allocation5 [shape = 's32[1]{0}', space=sflag, size = 0x4, scoped, tag = 'scoped memory for tpu_custom_call.1']
    #allocation6 [shape = 'u8[8192]{0}', space=vmem, size = 0x2000, scoped, tag = 'input window, operand 1, single buffered']
    #allocation7 [shape = 'u8[8192]{0}', space=vmem, size = 0x2000, scoped, tag = 'input window, operand 2, single buffered']
    #allocation8 [shape = 's32[1]{0}', space=sflag, size = 0x4, scoped, tag = 'scoped memory for tpu_custom_call.1']
    #allocation9 [shape = 'u8[512]{0}', space=vmem, size = 0x400, scoped, tag = 'input window, operand 6, single buffered']
    #allocation10 [shape = 'u8[512]{0}', space=vmem, size = 0x400, scoped, tag = 'input window, operand 8, single buffered']
    #allocation11 [shape = 's32[1]{0}', space=sflag, size = 0x4, scoped, tag = 'scoped memory for tpu_custom_call.1']
    #allocation12 [shape = 'u8[512]{0}', space=vmem, size = 0x400, scoped, tag = 'input window, operand 10, single buffered']
    #allocation13 [shape = 'u8[512]{0}', space=vmem, size = 0x400, scoped, tag = 'input window, operand 12, single buffered']
    #allocation14 [shape = 's32[1]{0}', space=sflag, size = 0x4, scoped, tag = 'scoped memory for tpu_custom_call.1']
    #allocation15 [shape = 'u8[16384]{0}', space=vmem, size = 0x4000, scoped, tag = 'input window, operand 13, single buffered']
    #allocation16 [shape = 'u8[512]{0}', space=vmem, size = 0x400, scoped, tag = 'input window, operand 14, single buffered']
    #allocation17 [shape = 's32[1]{0}', space=sflag, size = 0x4, scoped, tag = 'scoped memory for tpu_custom_call.1']
    #allocation18 [shape = 'u8[512]{0}', space=vmem, size = 0x400, scoped, tag = 'input window, operand 16, single buffered']
    #allocation19 [shape = 'u8[16384]{0}', space=vmem, size = 0x4000, scoped, tag = 'input window, operand 17, single buffered']
    #allocation20 [shape = 's32[1]{0}', space=sflag, size = 0x4, scoped, tag = 'scoped memory for tpu_custom_call.1']
    #allocation21 [shape = 'u8[512]{0}', space=vmem, size = 0x400, scoped, tag = 'input window, operand 18, single buffered']
    #allocation22 [shape = 'u8[16384]{0}', space=vmem, size = 0x4000, scoped, tag = 'input window, operand 19, single buffered']
    #allocation23 [shape = 's32[1]{0}', space=sflag, size = 0x4, scoped, tag = 'scoped memory for tpu_custom_call.1']
    #allocation24 [shape = 'u8[512]{0}', space=vmem, size = 0x400, scoped, tag = 'input window, operand 20, single buffered']
    #allocation25 [shape = 'u8[16384]{0}', space=vmem, size = 0x4000, scoped, tag = 'input window, operand 21, single buffered']
    #allocation26 [shape = 's32[1]{0}', space=sflag, size = 0x4, scoped, tag = 'scoped memory for tpu_custom_call.1']
    #allocation27 [shape = 'u8[512]{0}', space=vmem, size = 0x400, scoped, tag = 'input window, operand 22, single buffered']
    #allocation28 [shape = 'u8[16384]{0}', space=vmem, size = 0x4000, scoped, tag = 'input window, operand 23, single buffered']
    #allocation29 [shape = 's32[1]{0}', space=sflag, size = 0x4, scoped, tag = 'scoped memory for tpu_custom_call.1']
    #allocation30 [shape = 'u8[512]{0}', space=vmem, size = 0x400, scoped, tag = 'input window, operand 24, single buffered']
    #allocation31 [shape = 'u8[512]{0}', space=vmem, size = 0x400, scoped, tag = 'input window, operand 26, single buffered']
    #allocation32 [shape = 's32[1]{0}', space=sflag, size = 0x4, scoped, tag = 'scoped memory for tpu_custom_call.1']
    #allocation33 [shape = 'u8[16384]{0}', space=vmem, size = 0x4000, scoped, tag = 'input window, operand 27, single buffered']
    #allocation34 [shape = 'u8[8192]{0}', space=vmem, size = 0x2000, scoped, tag = 'output window, operand 0, single buffered']
    %68 = vsyncpa [#allocation5], 0
    %69 = vsyncpa [#allocation3], 0
    %70 = vsyncpa [#allocation8], 0
    %71 = vsyncpa [#allocation11], 0
    %72 = vsyncpa [#allocation14], 0
    %73 = vsyncpa [#allocation17], 0
    %74 = vsyncpa [#allocation20], 0
    %75 = vsyncpa [#allocation23], 0
    %76 = vsyncpa [#allocation26], 0
    %77 = vsyncpa [#allocation29], 0
    %78 = vsyncpa [#allocation32], 0
    %79 = vsyncpa [#allocation4], 0
    // Predicated region
    $region2: #{tpu_custom_call.1} parent=1 // pred_check
      _
    $region3: #{tpu_custom_call.1} parent=1 // pred_check_branch
      %81 = sbr.rel (0) target = $region5
    $region4: #{tpu_custom_call.1} parent=1 // pred_region
      %83 = vsyncadd [#allocation5], 0
      %s85 = sshll.u32 %s1, 4
      %s86 = int_to_ptr.vmem [resolvable:$true] %s85
      %88 = dma.vmem_to_smem %s86, 128, [#allocation2], [#allocation5]
    $region5: #{tpu_custom_call.1} parent=1 // pred_fallthru
      _
    // Predicated region
    $region6: #{tpu_custom_call.1} parent=1 // pred_check
      _
    $region7: #{tpu_custom_call.1} parent=1 // pred_check_branch
      %90 = sbr.rel (0) target = $region9
    $region8: #{tpu_custom_call.1} parent=1 // pred_region
      %92 = vsyncadd [#allocation3], 0
      %s93 = sshll.u32 %s3, 4
      %s94 = int_to_ptr.hbm [resolvable:$true] %s93
      %s95 = sshll.u32 [#allocation6], 4
      %s96 = int_to_ptr.vmem [resolvable:$true] %s95
      %101 = dma.hbm_to_vmem [thread:$0]  %s94, 256, %s96, [#allocation3], 128, 128, 8
    $region9: #{tpu_custom_call.1} parent=1 // pred_fallthru
      _
    // Predicated region
    $region10: #{tpu_custom_call.1} parent=1 // pred_check
      _
    $region11: #{tpu_custom_call.1} parent=1 // pred_check_branch
      %103 = sbr.rel (0) target = $region13
    $region12: #{tpu_custom_call.1} parent=1 // pred_region
      %105 = vsyncadd [#allocation8], 0
      %s106 = sshll.u32 %s5, 4
      %s107 = int_to_ptr.hbm [resolvable:$true] %s106
      %s108 = sshll.u32 [#allocation7], 4
      %s109 = int_to_ptr.vmem [resolvable:$true] %s108
      %114 = dma.hbm_to_vmem [thread:$0]  %s107, 256, %s109, [#allocation8], 128, 128, 8
    $region13: #{tpu_custom_call.1} parent=1 // pred_fallthru
      _
    // Predicated region
    $region14: #{tpu_custom_call.1} parent=1 // pred_check
      _
    $region15: #{tpu_custom_call.1} parent=1 // pred_check_branch
      %116 = sbr.rel (0) target = $region17
    $region16: #{tpu_custom_call.1} parent=1 // pred_region
      _
    $region17: #{tpu_custom_call.1} parent=1 // pred_fallthru
      _
    // Predicated region
    $region18: #{tpu_custom_call.1} parent=1 // pred_check
      _
    $region19: #{tpu_custom_call.1} parent=1 // pred_check_branch
      %118 = sbr.rel (0) target = $region21
    $region20: #{tpu_custom_call.1} parent=1 // pred_region
      _
    $region21: #{tpu_custom_call.1} parent=1 // pred_fallthru
      _
    // Predicated region
    $region22: #{tpu_custom_call.1} parent=1 // pred_check
      _
    $region23: #{tpu_custom_call.1} parent=1 // pred_check_branch
      %120 = sbr.rel (0) target = $region25
    $region24: #{tpu_custom_call.1} parent=1 // pred_region
      _
    $region25: #{tpu_custom_call.1} parent=1 // pred_fallthru
      _
    // Predicated region
    $region26: #{tpu_custom_call.1} parent=1 // pred_check
      _
    $region27: #{tpu_custom_call.1} parent=1 // pred_check_branch
      %122 = sbr.rel (0) target = $region29
    $region28: #{tpu_custom_call.1} parent=1 // pred_region
      %124 = vsyncadd [#allocation8], 0
      %s126 = sshll.u32 %s13, 4
      %s127 = int_to_ptr.hbm [resolvable:$true] %s126
      %s128 = sshll.u32 [#allocation9], 4
      %s129 = int_to_ptr.vmem [resolvable:$true] %s128
      %131 = dma.hbm_to_vmem [thread:$0]  %s127, 16, %s129, [#allocation8]
    $region29: #{tpu_custom_call.1} parent=1 // pred_fallthru
      _
    // Predicated region
    $region30: #{tpu_custom_call.1} parent=1 // pred_check
      _
    $region31: #{tpu_custom_call.1} parent=1 // pred_check_branch
      %133 = sbr.rel (0) target = $region33
    $region32: #{tpu_custom_call.1} parent=1 // pred_region
      _
    $region33: #{tpu_custom_call.1} parent=1 // pred_fallthru
      _
    // Predicated region
    $region34: #{tpu_custom_call.1} parent=1 // pred_check
      _
    $region35: #{tpu_custom_call.1} parent=1 // pred_check_branch
      %135 = sbr.rel (0) target = $region37
    $region36: #{tpu_custom_call.1} parent=1 // pred_region
      %137 = vsyncadd [#allocation11], 0
      %s139 = sshll.u32 %s17, 4
      %s140 = int_to_ptr.hbm [resolvable:$true] %s139
      %s141 = sshll.u32 [#allocation10], 4
      %s142 = int_to_ptr.vmem [resolvable:$true] %s141
      %144 = dma.hbm_to_vmem [thread:$0]  %s140, 16, %s142, [#allocation11]
    $region37: #{tpu_custom_call.1} parent=1 // pred_fallthru
      _
    // Predicated region
    $region38: #{tpu_custom_call.1} parent=1 // pred_check
      _
    $region39: #{tpu_custom_call.1} parent=1 // pred_check_branch
      %146 = sbr.rel (0) target = $region41
    $region40: #{tpu_custom_call.1} parent=1 // pred_region
      _
    $region41: #{tpu_custom_call.1} parent=1 // pred_fallthru
      _
    // Predicated region
    $region42: #{tpu_custom_call.1} parent=1 // pred_check
      _
    $region43: #{tpu_custom_call.1} parent=1 // pred_check_branch
      %148 = sbr.rel (0) target = $region45
    $region44: #{tpu_custom_call.1} parent=1 // pred_region
      %150 = vsyncadd [#allocation11], 0
      %s152 = sshll.u32 %s21, 4
      %s153 = int_to_ptr.hbm [resolvable:$true] %s152
      %s154 = sshll.u32 [#allocation12], 4
      %s155 = int_to_ptr.vmem [resolvable:$true] %s154
      %157 = dma.hbm_to_vmem [thread:$0]  %s153, 16, %s155, [#allocation11]
    $region45: #{tpu_custom_call.1} parent=1 // pred_fallthru
      _
    // Predicated region
    $region46: #{tpu_custom_call.1} parent=1 // pred_check
      _
    $region47: #{tpu_custom_call.1} parent=1 // pred_check_branch
      %159 = sbr.rel (0) target = $region49
    $region48: #{tpu_custom_call.1} parent=1 // pred_region
      _
    $region49: #{tpu_custom_call.1} parent=1 // pred_fallthru
      _
    // Predicated region
    $region50: #{tpu_custom_call.1} parent=1 // pred_check
      _
    $region51: #{tpu_custom_call.1} parent=1 // pred_check_branch
      %161 = sbr.rel (0) target = $region53
    $region52: #{tpu_custom_call.1} parent=1 // pred_region
      %163 = vsyncadd [#allocation14], 0
      %s165 = sshll.u32 %s25, 4
      %s166 = int_to_ptr.hbm [resolvable:$true] %s165
      %s167 = sshll.u32 [#allocation13], 4
      %s168 = int_to_ptr.vmem [resolvable:$true] %s167
      %170 = dma.hbm_to_vmem [thread:$0]  %s166, 16, %s168, [#allocation14]
    $region53: #{tpu_custom_call.1} parent=1 // pred_fallthru
      _
    // Predicated region
    $region54: #{tpu_custom_call.1} parent=1 // pred_check
      _
    $region55: #{tpu_custom_call.1} parent=1 // pred_check_branch
      %172 = sbr.rel (0) target = $region57
    $region56: #{tpu_custom_call.1} parent=1 // pred_region
      %174 = vsyncadd [#allocation14], 0
      %s175 = sshll.u32 %s27, 4
      %s176 = int_to_ptr.hbm [resolvable:$true] %s175
      %s177 = sshll.u32 [#allocation15], 4
      %s178 = int_to_ptr.vmem [resolvable:$true] %s177
      %183 = dma.hbm_to_vmem [thread:$0]  %s176, 512, %s178, [#allocation14], 128, 128, 8
    $region57: #{tpu_custom_call.1} parent=1 // pred_fallthru
      _
    // Predicated region
    $region58: #{tpu_custom_call.1} parent=1 // pred_check
      _
    $region59: #{tpu_custom_call.1} parent=1 // pred_check_branch
      %185 = sbr.rel (0) target = $region61
    $region60: #{tpu_custom_call.1} parent=1 // pred_region
      %187 = vsyncadd [#allocation17], 0
      %s189 = sshll.u32 %s29, 4
      %s190 = int_to_ptr.hbm [resolvable:$true] %s189
      %s191 = sshll.u32 [#allocation16], 4
      %s192 = int_to_ptr.vmem [resolvable:$true] %s191
      %194 = dma.hbm_to_vmem [thread:$0]  %s190, 16, %s192, [#allocation17]
    $region61: #{tpu_custom_call.1} parent=1 // pred_fallthru
      _
    // Predicated region
    $region62: #{tpu_custom_call.1} parent=1 // pred_check
      _
    $region63: #{tpu_custom_call.1} parent=1 // pred_check_branch
      %196 = sbr.rel (0) target = $region65
    $region64: #{tpu_custom_call.1} parent=1 // pred_region
      _
    $region65: #{tpu_custom_call.1} parent=1 // pred_fallthru
      _
    // Predicated region
    $region66: #{tpu_custom_call.1} parent=1 // pred_check
      _
    $region67: #{tpu_custom_call.1} parent=1 // pred_check_branch
      %198 = sbr.rel (0) target = $region69
    $region68: #{tpu_custom_call.1} parent=1 // pred_region
      %200 = vsyncadd [#allocation17], 0
      %s202 = sshll.u32 %s33, 4
      %s203 = int_to_ptr.hbm [resolvable:$true] %s202
      %s204 = sshll.u32 [#allocation18], 4
      %s205 = int_to_ptr.vmem [resolvable:$true] %s204
      %207 = dma.hbm_to_vmem [thread:$0]  %s203, 16, %s205, [#allocation17]
    $region69: #{tpu_custom_call.1} parent=1 // pred_fallthru
      _
    // Predicated region
    $region70: #{tpu_custom_call.1} parent=1 // pred_check
      _
    $region71: #{tpu_custom_call.1} parent=1 // pred_check_branch
      %209 = sbr.rel (0) target = $region73
    $region72: #{tpu_custom_call.1} parent=1 // pred_region
      %211 = vsyncadd [#allocation20], 0
      %s212 = sshll.u32 %s35, 4
      %s213 = int_to_ptr.hbm [resolvable:$true] %s212
      %s214 = sshll.u32 [#allocation19], 4
      %s215 = int_to_ptr.vmem [resolvable:$true] %s214
      %220 = dma.hbm_to_vmem [thread:$0]  %s213, 512, %s215, [#allocation20], 128, 128, 8
    $region73: #{tpu_custom_call.1} parent=1 // pred_fallthru
      _
    // Predicated region
    $region74: #{tpu_custom_call.1} parent=1 // pred_check
      _
    $region75: #{tpu_custom_call.1} parent=1 // pred_check_branch
      %222 = sbr.rel (0) target = $region77
    $region76: #{tpu_custom_call.1} parent=1 // pred_region
      %224 = vsyncadd [#allocation20], 0
      %s226 = sshll.u32 %s37, 4
      %s227 = int_to_ptr.hbm [resolvable:$true] %s226
      %s228 = sshll.u32 [#allocation21], 4
      %s229 = int_to_ptr.vmem [resolvable:$true] %s228
      %231 = dma.hbm_to_vmem [thread:$0]  %s227, 16, %s229, [#allocation20]
    $region77: #{tpu_custom_call.1} parent=1 // pred_fallthru
      _
    // Predicated region
    $region78: #{tpu_custom_call.1} parent=1 // pred_check
      _
    $region79: #{tpu_custom_call.1} parent=1 // pred_check_branch
      %233 = sbr.rel (0) target = $region81
    $region80: #{tpu_custom_call.1} parent=1 // pred_region
      %235 = vsyncadd [#allocation23], 0
      %s236 = sshll.u32 %s39, 4
      %s237 = int_to_ptr.hbm [resolvable:$true] %s236
      %s238 = sshll.u32 [#allocation22], 4
      %s239 = int_to_ptr.vmem [resolvable:$true] %s238
      %244 = dma.hbm_to_vmem [thread:$0]  %s237, 512, %s239, [#allocation23], 128, 128, 8
    $region81: #{tpu_custom_call.1} parent=1 // pred_fallthru
      _
    // Predicated region
    $region82: #{tpu_custom_call.1} parent=1 // pred_check
      _
    $region83: #{tpu_custom_call.1} parent=1 // pred_check_branch
      %246 = sbr.rel (0) target = $region85
    $region84: #{tpu_custom_call.1} parent=1 // pred_region
      %248 = vsyncadd [#allocation23], 0
      %s250 = sshll.u32 %s41, 4
      %s251 = int_to_ptr.hbm [resolvable:$true] %s250
      %s252 = sshll.u32 [#allocation24], 4
      %s253 = int_to_ptr.vmem [resolvable:$true] %s252
      %255 = dma.hbm_to_vmem [thread:$0]  %s251, 16, %s253, [#allocation23]
    $region85: #{tpu_custom_call.1} parent=1 // pred_fallthru
      _
    // Predicated region
    $region86: #{tpu_custom_call.1} parent=1 // pred_check
      _
    $region87: #{tpu_custom_call.1} parent=1 // pred_check_branch
      %257 = sbr.rel (0) target = $region89
    $region88: #{tpu_custom_call.1} parent=1 // pred_region
      %259 = vsyncadd [#allocation26], 0
      %s260 = sshll.u32 %s43, 4
      %s261 = int_to_ptr.hbm [resolvable:$true] %s260
      %s262 = sshll.u32 [#allocation25], 4
      %s263 = int_to_ptr.vmem [resolvable:$true] %s262
      %268 = dma.hbm_to_vmem [thread:$0]  %s261, 512, %s263, [#allocation26], 128, 128, 8
    $region89: #{tpu_custom_call.1} parent=1 // pred_fallthru
      _
    // Predicated region
    $region90: #{tpu_custom_call.1} parent=1 // pred_check
      _
    $region91: #{tpu_custom_call.1} parent=1 // pred_check_branch
      %270 = sbr.rel (0) target = $region93
    $region92: #{tpu_custom_call.1} parent=1 // pred_region
      %272 = vsyncadd [#allocation26], 0
      %s274 = sshll.u32 %s45, 4
      %s275 = int_to_ptr.hbm [resolvable:$true] %s274
      %s276 = sshll.u32 [#allocation27], 4
      %s277 = int_to_ptr.vmem [resolvable:$true] %s276
      %279 = dma.hbm_to_vmem [thread:$0]  %s275, 16, %s277, [#allocation26]
    $region93: #{tpu_custom_call.1} parent=1 // pred_fallthru
      _
    // Predicated region
    $region94: #{tpu_custom_call.1} parent=1 // pred_check
      _
    $region95: #{tpu_custom_call.1} parent=1 // pred_check_branch
      %281 = sbr.rel (0) target = $region97
    $region96: #{tpu_custom_call.1} parent=1 // pred_region
      %283 = vsyncadd [#allocation29], 0
      %s284 = sshll.u32 %s47, 4
      %s285 = int_to_ptr.hbm [resolvable:$true] %s284
      %s286 = sshll.u32 [#allocation28], 4
      %s287 = int_to_ptr.vmem [resolvable:$true] %s286
      %292 = dma.hbm_to_vmem [thread:$0]  %s285, 512, %s287, [#allocation29], 128, 128, 8
    $region97: #{tpu_custom_call.1} parent=1 // pred_fallthru
      _
    // Predicated region
    $region98: #{tpu_custom_call.1} parent=1 // pred_check
      _
    $region99: #{tpu_custom_call.1} parent=1 // pred_check_branch
      %294 = sbr.rel (0) target = $region101
    $region100: #{tpu_custom_call.1} parent=1 // pred_region
      %296 = vsyncadd [#allocation29], 0
      %s298 = sshll.u32 %s49, 4
      %s299 = int_to_ptr.hbm [resolvable:$true] %s298
      %s300 = sshll.u32 [#allocation30], 4
      %s301 = int_to_ptr.vmem [resolvable:$true] %s300
      %303 = dma.hbm_to_vmem [thread:$0]  %s299, 16, %s301, [#allocation29]
    $region101: #{tpu_custom_call.1} parent=1 // pred_fallthru
      _
    // Predicated region
    $region102: #{tpu_custom_call.1} parent=1 // pred_check
      _
    $region103: #{tpu_custom_call.1} parent=1 // pred_check_branch
      %305 = sbr.rel (0) target = $region105
    $region104: #{tpu_custom_call.1} parent=1 // pred_region
      _
    $region105: #{tpu_custom_call.1} parent=1 // pred_fallthru
      _
    // Predicated region
    $region106: #{tpu_custom_call.1} parent=1 // pred_check
      _
    $region107: #{tpu_custom_call.1} parent=1 // pred_check_branch
      %307 = sbr.rel (0) target = $region109
    $region108: #{tpu_custom_call.1} parent=1 // pred_region
      %309 = vsyncadd [#allocation32], 0
      %s311 = sshll.u32 %s53, 4
      %s312 = int_to_ptr.hbm [resolvable:$true] %s311
      %s313 = sshll.u32 [#allocation31], 4
      %s314 = int_to_ptr.vmem [resolvable:$true] %s313
      %316 = dma.hbm_to_vmem [thread:$0]  %s312, 16, %s314, [#allocation32]
    $region109: #{tpu_custom_call.1} parent=1 // pred_fallthru
      _
    // Predicated region
    $region110: #{tpu_custom_call.1} parent=1 // pred_check
      _
    $region111: #{tpu_custom_call.1} parent=1 // pred_check_branch
      %318 = sbr.rel (0) target = $region113
    $region112: #{tpu_custom_call.1} parent=1 // pred_region
      %320 = vsyncadd [#allocation32], 0
      %s321 = sshll.u32 %s55, 4
      %s322 = int_to_ptr.hbm [resolvable:$true] %s321
      %s323 = sshll.u32 [#allocation33], 4
      %s324 = int_to_ptr.vmem [resolvable:$true] %s323
      %329 = dma.hbm_to_vmem [thread:$0]  %s322, 512, %s324, [#allocation32], 128, 128, 8
    $region113: #{tpu_custom_call.1} parent=1 // pred_fallthru
      _
    // Predicated region
    $region114: #{tpu_custom_call.1} parent=1 // pred_check
      _
    $region115: #{tpu_custom_call.1} parent=1 // pred_check_branch
      %331 = sbr.rel (0) target = $region117
    $region116: #{tpu_custom_call.1} parent=1 // pred_region
      _
    $region117: #{tpu_custom_call.1} parent=1 // pred_fallthru
      _
    // Predicated region
    $region118: #{tpu_custom_call.1} parent=1 // pred_check
      _
    $region119: #{tpu_custom_call.1} parent=1 // pred_check_branch
      %333 = sbr.rel (0) target = $region121
    $region120: #{tpu_custom_call.1} parent=1 // pred_region
      _
    $region121: #{tpu_custom_call.1} parent=1 // pred_fallthru
      _
    // Predicated region
    $region122: #{tpu_custom_call.1} parent=1 // pred_check
      _
    $region123: #{tpu_custom_call.1} parent=1 // pred_check_branch
      %335 = sbr.rel (0) target = $region125
    $region124: #{tpu_custom_call.1} parent=1 // pred_region
      _
    $region125: #{tpu_custom_call.1} parent=1 // pred_fallthru
      _
    // Predicated region
    $region126: #{tpu_custom_call.1} parent=1 // pred_check
      _
    $region127: #{tpu_custom_call.1} parent=1 // pred_check_branch
      %337 = sbr.rel (0) target = $region129
    $region128: #{tpu_custom_call.1} parent=1 // pred_region
      %339 = dma.done [#allocation5], 128
    $region129: #{tpu_custom_call.1} parent=1 // pred_fallthru
      _
    // Predicated region
    $region130: #{tpu_custom_call.1} parent=1 // pred_check
      _
    $region131: #{tpu_custom_call.1} parent=1 // pred_check_branch
      %341 = sbr.rel (0) target = $region133
    $region132: #{tpu_custom_call.1} parent=1 // pred_region
      %343 = dma.done [#allocation3], 256
    $region133: #{tpu_custom_call.1} parent=1 // pred_fallthru
      _
    // Predicated region
    $region134: #{tpu_custom_call.1} parent=1 // pred_check
      _
    $region135: #{tpu_custom_call.1} parent=1 // pred_check_branch
      %345 = sbr.rel (0) target = $region137
    $region136: #{tpu_custom_call.1} parent=1 // pred_region
      %347 = dma.done [#allocation8], 256
    $region137: #{tpu_custom_call.1} parent=1 // pred_fallthru
      _
    // Predicated region
    $region138: #{tpu_custom_call.1} parent=1 // pred_check
      _
    $region139: #{tpu_custom_call.1} parent=1 // pred_check_branch
      %349 = sbr.rel (0) target = $region141
    $region140: #{tpu_custom_call.1} parent=1 // pred_region
      %351 = dma.done [#allocation8], 16
    $region141: #{tpu_custom_call.1} parent=1 // pred_fallthru
      _
    // Predicated region
    $region142: #{tpu_custom_call.1} parent=1 // pred_check
      _
    $region143: #{tpu_custom_call.1} parent=1 // pred_check_branch
      %353 = sbr.rel (0) target = $region145
    $region144: #{tpu_custom_call.1} parent=1 // pred_region
      %355 = dma.done [#allocation11], 16
    $region145: #{tpu_custom_call.1} parent=1 // pred_fallthru
      _
    // Predicated region
    $region146: #{tpu_custom_call.1} parent=1 // pred_check
      _
    $region147: #{tpu_custom_call.1} parent=1 // pred_check_branch
      %357 = sbr.rel (0) target = $region149
    $region148: #{tpu_custom_call.1} parent=1 // pred_region
      %359 = dma.done [#allocation11], 16
    $region149: #{tpu_custom_call.1} parent=1 // pred_fallthru
      _
    // Predicated region
    $region150: #{tpu_custom_call.1} parent=1 // pred_check
      _
    $region151: #{tpu_custom_call.1} parent=1 // pred_check_branch
      %361 = sbr.rel (0) target = $region153
    $region152: #{tpu_custom_call.1} parent=1 // pred_region
      %363 = dma.done [#allocation14], 16
    $region153: #{tpu_custom_call.1} parent=1 // pred_fallthru
      _
    // Predicated region
    $region154: #{tpu_custom_call.1} parent=1 // pred_check
      _
    $region155: #{tpu_custom_call.1} parent=1 // pred_check_branch
      %365 = sbr.rel (0) target = $region157
    $region156: #{tpu_custom_call.1} parent=1 // pred_region
      %367 = dma.done [#allocation14], 512
    $region157: #{tpu_custom_call.1} parent=1 // pred_fallthru
      _
    // Predicated region
    $region158: #{tpu_custom_call.1} parent=1 // pred_check
      _
    $region159: #{tpu_custom_call.1} parent=1 // pred_check_branch
      %369 = sbr.rel (0) target = $region161
    $region160: #{tpu_custom_call.1} parent=1 // pred_region
      %371 = dma.done [#allocation17], 16
    $region161: #{tpu_custom_call.1} parent=1 // pred_fallthru
      _
    // Predicated region
    $region162: #{tpu_custom_call.1} parent=1 // pred_check
      _
    $region163: #{tpu_custom_call.1} parent=1 // pred_check_branch
      %373 = sbr.rel (0) target = $region165
    $region164: #{tpu_custom_call.1} parent=1 // pred_region
      %375 = dma.done [#allocation17], 16
    $region165: #{tpu_custom_call.1} parent=1 // pred_fallthru
      _
    // Predicated region
    $region166: #{tpu_custom_call.1} parent=1 // pred_check
      _
    $region167: #{tpu_custom_call.1} parent=1 // pred_check_branch
      %377 = sbr.rel (0) target = $region169
    $region168: #{tpu_custom_call.1} parent=1 // pred_region
      %379 = dma.done [#allocation20], 512
    $region169: #{tpu_custom_call.1} parent=1 // pred_fallthru
      _
    // Predicated region
    $region170: #{tpu_custom_call.1} parent=1 // pred_check
      _
    $region171: #{tpu_custom_call.1} parent=1 // pred_check_branch
      %381 = sbr.rel (0) target = $region173
    $region172: #{tpu_custom_call.1} parent=1 // pred_region
      %383 = dma.done [#allocation20], 16
    $region173: #{tpu_custom_call.1} parent=1 // pred_fallthru
      _
    // Predicated region
    $region174: #{tpu_custom_call.1} parent=1 // pred_check
      _
    $region175: #{tpu_custom_call.1} parent=1 // pred_check_branch
      %385 = sbr.rel (0) target = $region177
    $region176: #{tpu_custom_call.1} parent=1 // pred_region
      %387 = dma.done [#allocation23], 512
    $region177: #{tpu_custom_call.1} parent=1 // pred_fallthru
      _
    // Predicated region
    $region178: #{tpu_custom_call.1} parent=1 // pred_check
      _
    $region179: #{tpu_custom_call.1} parent=1 // pred_check_branch
      %389 = sbr.rel (0) target = $region181
    $region180: #{tpu_custom_call.1} parent=1 // pred_region
      %391 = dma.done [#allocation23], 16
    $region181: #{tpu_custom_call.1} parent=1 // pred_fallthru
      _
    // Predicated region
    $region182: #{tpu_custom_call.1} parent=1 // pred_check
      _
    $region183: #{tpu_custom_call.1} parent=1 // pred_check_branch
      %393 = sbr.rel (0) target = $region185
    $region184: #{tpu_custom_call.1} parent=1 // pred_region
      %395 = dma.done [#allocation26], 512
    $region185: #{tpu_custom_call.1} parent=1 // pred_fallthru
      _
    // Predicated region
    $region186: #{tpu_custom_call.1} parent=1 // pred_check
      _
    $region187: #{tpu_custom_call.1} parent=1 // pred_check_branch
      %397 = sbr.rel (0) target = $region189
    $region188: #{tpu_custom_call.1} parent=1 // pred_region
      %399 = dma.done [#allocation26], 16
    $region189: #{tpu_custom_call.1} parent=1 // pred_fallthru
      _
    // Predicated region
    $region190: #{tpu_custom_call.1} parent=1 // pred_check
      _
    $region191: #{tpu_custom_call.1} parent=1 // pred_check_branch
      %401 = sbr.rel (0) target = $region193
    $region192: #{tpu_custom_call.1} parent=1 // pred_region
      %403 = dma.done [#allocation29], 512
    $region193: #{tpu_custom_call.1} parent=1 // pred_fallthru
      _
    // Predicated region
    $region194: #{tpu_custom_call.1} parent=1 // pred_check
      _
    $region195: #{tpu_custom_call.1} parent=1 // pred_check_branch
      %405 = sbr.rel (0) target = $region197
    $region196: #{tpu_custom_call.1} parent=1 // pred_region
      %407 = dma.done [#allocation29], 16
    $region197: #{tpu_custom_call.1} parent=1 // pred_fallthru
      _
    // Predicated region
    $region198: #{tpu_custom_call.1} parent=1 // pred_check
      _
    $region199: #{tpu_custom_call.1} parent=1 // pred_check_branch
      %409 = sbr.rel (0) target = $region201
    $region200: #{tpu_custom_call.1} parent=1 // pred_region
      %411 = dma.done [#allocation32], 16
    $region201: #{tpu_custom_call.1} parent=1 // pred_fallthru
      _
    // Predicated region
    $region202: #{tpu_custom_call.1} parent=1 // pred_check
      _
    $region203: #{tpu_custom_call.1} parent=1 // pred_check_branch
      %413 = sbr.rel (0) target = $region205
    $region204: #{tpu_custom_call.1} parent=1 // pred_region
      %415 = dma.done [#allocation32], 512
    $region205: #{tpu_custom_call.1} parent=1 // pred_fallthru
      _
    %416 = sfence
    %v417 = vld [vmem:[#allocation6] sm:$0xff]
    %v418 = vld [vmem:[#allocation6 + $0x8] sm:$0xff]
    %v419 = vld [vmem:[#allocation7] sm:$0xff]
    %v420 = vld [vmem:[#allocation7 + $0x8] sm:$0xff]
    %s421 = sld [smem:[#allocation2]]
    %s422 = sld [smem:[#allocation2 + $0x1]]
    %vm423 = vcmask 261120
    %v424 = vsel %vm423, %v417, 0.0
    %425 = vadd.xlane.f32.xlu0 %v424
    %v426 = vpop.xlane.xlu0 %425
    %v427 = vsel %vm423, %v418, 0.0
    %428 = vadd.xlane.f32.xlu0 %v427
    %v429 = vpop.xlane.xlu0 %428
    %v430 = vrcp.pop 32.0
    %v431 = vmul.f32 32.0, %v430
    %v432 = vsub.f32 1.0, %v431
    %v433 = vmul.f32 %v430, %v432
    %v434 = vadd.f32 %v430, %v433
    %vm435 = vweird.f32 %v430
    %v436 = vsel %vm435, %v430, %v434
    %v437 = vmul.f32 %v426, %v436
    %v438 = vmul.f32 %v429, %v436
    %v439 = vsub.f32 %v417, %v437
    %v440 = vsub.f32 %v418, %v438
    %v441 = vmul.f32 %v439, %v439
    %v442 = vmul.f32 %v440, %v440
    %v443 = vsel %vm423, %v441, 0.0
    %444 = vadd.xlane.f32.xlu0 %v443
    %v445 = vpop.xlane.xlu0 %444
    %v446 = vsel %vm423, %v442, 0.0
    %447 = vadd.xlane.f32.xlu0 %v446
    %v448 = vpop.xlane.xlu0 %447
    %v449 = vrcp.pop 31.0
    %v450 = vmul.f32 31.0, %v449
    %v451 = vsub.f32 1.0, %v450
    %v452 = vmul.f32 %v449, %v451
    %v453 = vadd.f32 %v449, %v452
    %vm454 = vweird.f32 %v449
    %v455 = vsel %vm454, %v449, %v453
    %v456 = vmul.f32 %v445, %v455
    %v457 = vmul.f32 %v448, %v455
    %v458 = vstv %s421
    %v459 = vmul.f32 %v458, %v439
    %v460 = vmul.f32 %v458, %v440
    %v461 = vrsqrt.pop %v456
    %v462 = vmul.f32 %v461, %v456
    %v463 = vmul.f32 %v462, %v461
    %v464 = vmul.f32 0.5, %v463
    %v465 = vsub.f32 1.5, %v464
    %v466 = vmul.f32 %v461, %v465
    %v467 = vmul.f32 %v456, %v466
    %vm468 = vcmp.eq.f32.partialorder %v456, inf
    %v469 = vsel %vm468, %v456, %v467
    %vm470 = vcmp.eq.f32.partialorder %v456, 0.0
    %v471 = vand.u32 %v456, 2147483648
    %v472 = vsel %vm470, %v471, %v469
    %v473 = vrsqrt.pop %v457
    %v474 = vmul.f32 %v473, %v457
    %v475 = vmul.f32 %v474, %v473
    %v476 = vmul.f32 0.5, %v475
    %v477 = vsub.f32 1.5, %v476
    %v478 = vmul.f32 %v473, %v477
    %v479 = vmul.f32 %v457, %v478
    %vm480 = vcmp.eq.f32.partialorder %v457, inf
    %v481 = vsel %vm480, %v457, %v479
    %vm482 = vcmp.eq.f32.partialorder %v457, 0.0
    %v483 = vand.u32 %v457, 2147483648
    %v484 = vsel %vm482, %v483, %v481
    %v485 = vadd.f32 %v472, 1e-06
    %v486 = vadd.f32 %v484, 1e-06
    %v487 = vrcp.pop %v485
    %v488 = vmul.f32 %v485, %v487
    %v489 = vsub.f32 1.0, %v488
    %v490 = vmul.f32 %v487, %v489
    %v491 = vadd.f32 %v487, %v490
    %vm492 = vweird.f32 %v485
    %vm493 = vweird.f32 %v487
    %vm494 = vmor %vm492, %vm493
    %v495 = vsel %vm494, %v487, %v491
    %v496 = vand.u32 2147483647, %v485
    %vm497 = vcmp.eq.f32.partialorder %v496, 8.507059e+37
    %v498 = vand.u32 %v485, 2147483648
    %v499 = vor.u32 1.1754944e-38, %v498
    %v500 = vsel %vm497, %v499, %v495
    %v501 = vmul.f32 %v459, %v500
    %v502 = vrcp.pop %v486
    %v503 = vmul.f32 %v486, %v502
    %v504 = vsub.f32 1.0, %v503
    %v505 = vmul.f32 %v502, %v504
    %v506 = vadd.f32 %v502, %v505
    %vm507 = vweird.f32 %v486
    %vm508 = vweird.f32 %v502
    %vm509 = vmor %vm507, %vm508
    %v510 = vsel %vm509, %v502, %v506
    %v511 = vand.u32 2147483647, %v486
    %vm512 = vcmp.eq.f32.partialorder %v511, 8.507059e+37
    %v513 = vand.u32 %v486, 2147483648
    %v514 = vor.u32 1.1754944e-38, %v513
    %v515 = vsel %vm512, %v514, %v510
    %v516 = vmul.f32 %v460, %v515
    %v517 = vstv %s422
    %v518 = vadd.f32 %v501, %v517
    %v519 = vadd.f32 %v516, %v517
    %v520 = vld [vmem:[%s7] sm:$0xff]
    %v521 = vld [vmem:[%s7 + $0x8] sm:$0xff]
    %v522 = vld [vmem:[%s7 + $0x10] sm:$0xff]
    %v523 = vld [vmem:[%s7 + $0x18] sm:$0xff]
    %v524 = vld [vmem:[%s9] sm:$0x1]
    %v526 = vperm.slane %v524, 0
    %v529 = vsel %vm423, %v518, 0
    %v532 = vsel %vm423, %v519, 0
    %534 = vmatpush.msra.mxu0 0.0
    %535 = vmatpush.msra.mxu0 0.0
    %536 = vmatpush.msra.mxu0 0.0
    %537 = vmatpush.msra.mxu0 0.0
    %538 = vmatpush.msra.mxu0 0.0
    %539 = vmatpush.msra.mxu0 0.0
    %540 = vmatpush.msra.mxu0 0.0
    %541 = vmatpush.msra.mxu0 0.0
    %542 = vmatpush.msra.mxu0 0.0
    %543 = vmatpush.msra.mxu0 0.0
    %544 = vmatpush.msra.mxu0 0.0
    %545 = vmatpush.msra.mxu0 0.0
    %546 = vmatpush.msra.mxu0 %v523
    %547 = vmatpush.msra.mxu0 %v522
    %548 = vmatpush.msra.mxu0 %v521
    %549 = vmatpush.msra.mxu0 %v520
    %550 = vmatmul.f32.gmra.mxu0 %v529
    %v551 = vpop.f32.mrf.mxu0
    %v552 = vadd.f32 %v526, %v551
    %553 = vmatmul.f32.gmra.mxu0 %v532
    %v554 = vpop.f32.mrf.mxu0
    %v555 = vadd.f32 %v526, %v554
    %556 = vdwg.mxu0
    %v557 = vmul.f32 %v552, 0.35355338
    %v558 = vmul.f32 %v555, 0.35355338
    %560 = vrot.lane.b32.xlu0 %v552, 96
    %v561 = vpop.permute.xlu0 %560
    %vm562 = vcmask 64512
    %v564 = vsel %vm562, %v557, 0
    %v566 = vsel %vm562, %v561, 0
    %568 = vmatpush.xpose.msra.mxu0 0.0
    %569 = vmatpush.xpose.msra.mxu0 0.0
    %570 = vmatpush.xpose.msra.mxu0 0.0
    %571 = vmatpush.xpose.msra.mxu0 0.0
    %572 = vmatpush.xpose.msra.mxu0 0.0
    %573 = vmatpush.xpose.msra.mxu0 0.0
    %574 = vmatpush.xpose.msra.mxu0 0.0
    %575 = vmatpush.xpose.msra.mxu0 0.0
    %576 = vmatpush.xpose.msra.mxu0 0.0
    %577 = vmatpush.xpose.msra.mxu0 0.0
    %578 = vmatpush.xpose.msra.mxu0 0.0
    %579 = vmatpush.xpose.msra.mxu0 0.0
    %580 = vmatpush.xpose.msra.mxu0 0.0
    %581 = vmatpush.xpose.msra.mxu0 0.0
    %582 = vmatpush.xpose.msra.mxu0 0.0
    %583 = vmatpush.xpose.msra.mxu0 %v566
    %584 = vmatmul.f32.gmra.mxu0 %v564
    %v585 = vpop.f32.mrf.mxu0
    %v586 = vadd.f32 0.0, %v585
    %587 = vdwg.mxu0
    %589 = vrot.lane.b32.xlu0 %v555, 96
    %v590 = vpop.permute.xlu0 %589
    %v592 = vsel %vm562, %v558, 0
    %v594 = vsel %vm562, %v590, 0
    %596 = vmatpush.xpose.msra.mxu0 0.0
    %597 = vmatpush.xpose.msra.mxu0 0.0
    %598 = vmatpush.xpose.msra.mxu0 0.0
    %599 = vmatpush.xpose.msra.mxu0 0.0
    %600 = vmatpush.xpose.msra.mxu0 0.0
    %601 = vmatpush.xpose.msra.mxu0 0.0
    %602 = vmatpush.xpose.msra.mxu0 0.0
    %603 = vmatpush.xpose.msra.mxu0 0.0
    %604 = vmatpush.xpose.msra.mxu0 0.0
    %605 = vmatpush.xpose.msra.mxu0 0.0
    %606 = vmatpush.xpose.msra.mxu0 0.0
    %607 = vmatpush.xpose.msra.mxu0 0.0
    %608 = vmatpush.xpose.msra.mxu0 0.0
    %609 = vmatpush.xpose.msra.mxu0 0.0
    %610 = vmatpush.xpose.msra.mxu0 0.0
    %611 = vmatpush.xpose.msra.mxu0 %v594
    %612 = vmatmul.f32.gmra.mxu0 %v592
    %v613 = vpop.f32.mrf.mxu0
    %v614 = vadd.f32 0.0, %v613
    %615 = vdwg.mxu0
    %v616 = vsel %vm562, %v586, -inf
    %617 = vmax.xlane.f32.xlu0 %v616
    %v618 = vpop.xlane.xlu0 %617
    %v619 = vsel %vm562, %v614, -inf
    %620 = vmax.xlane.f32.xlu0 %v619
    %v621 = vpop.xlane.xlu0 %620
    %v622 = vsub.f32 %v586, %v618
    %v623 = vsub.f32 %v614, %v621
    %v624 = vmul.f32 %v622, 1.442695
    %v625 = vpow.pop %v624
    %v626 = vmul.f32 %v623, 1.442695
    %v627 = vpow.pop %v626
    %v628 = vsel %vm562, %v625, 0.0
    %629 = vadd.xlane.f32.xlu0 %v628
    %v630 = vpop.xlane.xlu0 %629
    %v631 = vsel %vm562, %v627, 0.0
    %632 = vadd.xlane.f32.xlu0 %v631
    %v633 = vpop.xlane.xlu0 %632
    %v634 = vrcp.pop %v630
    %v635 = vrcp.pop %v633
    %v636 = vmul.f32 %v625, %v634
    %v637 = vmul.f32 %v627, %v635
    %638 = vrot.lane.b32.xlu0 %v552, 64
    %v639 = vpop.permute.xlu0 %638
    %v642 = vsel %vm562, %v636, 0
    %644 = vmatpush.msra.mxu0 0.0
    %645 = vmatpush.msra.mxu0 0.0
    %646 = vmatpush.msra.mxu0 0.0
    %647 = vmatpush.msra.mxu0 0.0
    %648 = vmatpush.msra.mxu0 0.0
    %649 = vmatpush.msra.mxu0 0.0
    %650 = vmatpush.msra.mxu0 0.0
    %651 = vmatpush.msra.mxu0 0.0
    %652 = vmatpush.msra.mxu0 0.0
    %653 = vmatpush.msra.mxu0 0.0
    %654 = vmatpush.msra.mxu0 0.0
    %655 = vmatpush.msra.mxu0 0.0
    %656 = vmatpush.msra.mxu0 0.0
    %657 = vmatpush.msra.mxu0 0.0
    %658 = vmatpush.msra.mxu0 0.0
    %659 = vmatpush.msra.mxu0 %v639
    %660 = vmatmul.f32.gmra.mxu0 %v642
    %v661 = vpop.f32.mrf.mxu0
    %v662 = vadd.f32 0.0, %v661
    %663 = vdwg.mxu0
    %664 = vrot.lane.b32.xlu0 %v555, 64
    %v665 = vpop.permute.xlu0 %664
    %v668 = vsel %vm562, %v637, 0
    %670 = vmatpush.msra.mxu0 0.0
    %671 = vmatpush.msra.mxu0 0.0
    %672 = vmatpush.msra.mxu0 0.0
    %673 = vmatpush.msra.mxu0 0.0
    %674 = vmatpush.msra.mxu0 0.0
    %675 = vmatpush.msra.mxu0 0.0
    %676 = vmatpush.msra.mxu0 0.0
    %677 = vmatpush.msra.mxu0 0.0
    %678 = vmatpush.msra.mxu0 0.0
    %679 = vmatpush.msra.mxu0 0.0
    %680 = vmatpush.msra.mxu0 0.0
    %681 = vmatpush.msra.mxu0 0.0
    %682 = vmatpush.msra.mxu0 0.0
    %683 = vmatpush.msra.mxu0 0.0
    %684 = vmatpush.msra.mxu0 0.0
    %685 = vmatpush.msra.mxu0 %v665
    %686 = vmatmul.f32.gmra.mxu0 %v668
    %v687 = vpop.f32.mrf.mxu0
    %v688 = vadd.f32 0.0, %v687
    %689 = vdwg.mxu0
    %690 = vrot.lane.b32.xlu0 %v557, 120
    %v691 = vpop.permute.xlu0 %690
    %692 = vrot.lane.b32.xlu0 %v552, 88
    %v693 = vpop.permute.xlu0 %692
    %v694 = vsel %vm562, %v691, 0
    %v696 = vsel %vm562, %v693, 0
    %698 = vmatpush.xpose.msra.mxu0 0.0
    %699 = vmatpush.xpose.msra.mxu0 0.0
    %700 = vmatpush.xpose.msra.mxu0 0.0
    %701 = vmatpush.xpose.msra.mxu0 0.0
    %702 = vmatpush.xpose.msra.mxu0 0.0
    %703 = vmatpush.xpose.msra.mxu0 0.0
    %704 = vmatpush.xpose.msra.mxu0 0.0
    %705 = vmatpush.xpose.msra.mxu0 0.0
    %706 = vmatpush.xpose.msra.mxu0 0.0
    %707 = vmatpush.xpose.msra.mxu0 0.0
    %708 = vmatpush.xpose.msra.mxu0 0.0
    %709 = vmatpush.xpose.msra.mxu0 0.0
    %710 = vmatpush.xpose.msra.mxu0 0.0
    %711 = vmatpush.xpose.msra.mxu0 0.0
    %712 = vmatpush.xpose.msra.mxu0 0.0
    %713 = vmatpush.xpose.msra.mxu0 %v696
    %714 = vmatmul.f32.gmra.mxu0 %v694
    %v715 = vpop.f32.mrf.mxu0
    %v716 = vadd.f32 0.0, %v715
    %717 = vdwg.mxu0
    %718 = vrot.lane.b32.xlu0 %v558, 120
    %v719 = vpop.permute.xlu0 %718
    %720 = vrot.lane.b32.xlu0 %v555, 88
    %v721 = vpop.permute.xlu0 %720
    %v722 = vsel %vm562, %v719, 0
    %v724 = vsel %vm562, %v721, 0
    %726 = vmatpush.xpose.msra.mxu0 0.0
    %727 = vmatpush.xpose.msra.mxu0 0.0
    %728 = vmatpush.xpose.msra.mxu0 0.0
    %729 = vmatpush.xpose.msra.mxu0 0.0
    %730 = vmatpush.xpose.msra.mxu0 0.0
    %731 = vmatpush.xpose.msra.mxu0 0.0
    %732 = vmatpush.xpose.msra.mxu0 0.0
    %733 = vmatpush.xpose.msra.mxu0 0.0
    %734 = vmatpush.xpose.msra.mxu0 0.0
    %735 = vmatpush.xpose.msra.mxu0 0.0
    %736 = vmatpush.xpose.msra.mxu0 0.0
    %737 = vmatpush.xpose.msra.mxu0 0.0
    %738 = vmatpush.xpose.msra.mxu0 0.0
    %739 = vmatpush.xpose.msra.mxu0 0.0
    %740 = vmatpush.xpose.msra.mxu0 0.0
    %741 = vmatpush.xpose.msra.mxu0 %v724
    %742 = vmatmul.f32.gmra.mxu0 %v722
    %v743 = vpop.f32.mrf.mxu0
    %v744 = vadd.f32 0.0, %v743
    %745 = vdwg.mxu0
    %v746 = vsel %vm562, %v716, -inf
    %747 = vmax.xlane.f32.xlu0 %v746
    %v748 = vpop.xlane.xlu0 %747
    %v749 = vsel %vm562, %v744, -inf
    %750 = vmax.xlane.f32.xlu0 %v749
    %v751 = vpop.xlane.xlu0 %750
    %v752 = vsub.f32 %v716, %v748
    %v753 = vsub.f32 %v744, %v751
    %v754 = vmul.f32 %v752, 1.442695
    %v755 = vpow.pop %v754
    %v756 = vmul.f32 %v753, 1.442695
    %v757 = vpow.pop %v756
    %v758 = vsel %vm562, %v755, 0.0
    %759 = vadd.xlane.f32.xlu0 %v758
    %v760 = vpop.xlane.xlu0 %759
    %v761 = vsel %vm562, %v757, 0.0
    %762 = vadd.xlane.f32.xlu0 %v761
    %v763 = vpop.xlane.xlu0 %762
    %v764 = vrcp.pop %v760
    %v765 = vrcp.pop %v763
    %v766 = vmul.f32 %v755, %v764
    %v767 = vmul.f32 %v757, %v765
    %768 = vrot.lane.b32.xlu0 %v552, 56
    %v769 = vpop.permute.xlu0 %768
    %v772 = vsel %vm562, %v766, 0
    %774 = vmatpush.msra.mxu0 0.0
    %775 = vmatpush.msra.mxu0 0.0
    %776 = vmatpush.msra.mxu0 0.0
    %777 = vmatpush.msra.mxu0 0.0
    %778 = vmatpush.msra.mxu0 0.0
    %779 = vmatpush.msra.mxu0 0.0
    %780 = vmatpush.msra.mxu0 0.0
    %781 = vmatpush.msra.mxu0 0.0
    %782 = vmatpush.msra.mxu0 0.0
    %783 = vmatpush.msra.mxu0 0.0
    %784 = vmatpush.msra.mxu0 0.0
    %785 = vmatpush.msra.mxu0 0.0
    %786 = vmatpush.msra.mxu0 0.0
    %787 = vmatpush.msra.mxu0 0.0
    %788 = vmatpush.msra.mxu0 0.0
    %789 = vmatpush.msra.mxu0 %v769
    %790 = vmatmul.f32.gmra.mxu0 %v772
    %v791 = vpop.f32.mrf.mxu0
    %v792 = vadd.f32 0.0, %v791
    %793 = vdwg.mxu0
    %794 = vrot.lane.b32.xlu0 %v555, 56
    %v795 = vpop.permute.xlu0 %794
    %v798 = vsel %vm562, %v767, 0
    %800 = vmatpush.msra.mxu0 0.0
    %801 = vmatpush.msra.mxu0 0.0
    %802 = vmatpush.msra.mxu0 0.0
    %803 = vmatpush.msra.mxu0 0.0
    %804 = vmatpush.msra.mxu0 0.0
    %805 = vmatpush.msra.mxu0 0.0
    %806 = vmatpush.msra.mxu0 0.0
    %807 = vmatpush.msra.mxu0 0.0
    %808 = vmatpush.msra.mxu0 0.0
    %809 = vmatpush.msra.mxu0 0.0
    %810 = vmatpush.msra.mxu0 0.0
    %811 = vmatpush.msra.mxu0 0.0
    %812 = vmatpush.msra.mxu0 0.0
    %813 = vmatpush.msra.mxu0 0.0
    %814 = vmatpush.msra.mxu0 0.0
    %815 = vmatpush.msra.mxu0 %v795
    %816 = vmatmul.f32.gmra.mxu0 %v798
    %v817 = vpop.f32.mrf.mxu0
    %v818 = vadd.f32 0.0, %v817
    %819 = vdwg.mxu0
    %820 = vrot.lane.b32.xlu0 %v557, 112
    %v821 = vpop.permute.xlu0 %820
    %822 = vrot.lane.b32.xlu0 %v552, 80
    %v823 = vpop.permute.xlu0 %822
    %v824 = vsel %vm562, %v821, 0
    %v826 = vsel %vm562, %v823, 0
    %828 = vmatpush.xpose.msra.mxu0 0.0
    %829 = vmatpush.xpose.msra.mxu0 0.0
    %830 = vmatpush.xpose.msra.mxu0 0.0
    %831 = vmatpush.xpose.msra.mxu0 0.0
    %832 = vmatpush.xpose.msra.mxu0 0.0
    %833 = vmatpush.xpose.msra.mxu0 0.0
    %834 = vmatpush.xpose.msra.mxu0 0.0
    %835 = vmatpush.xpose.msra.mxu0 0.0
    %836 = vmatpush.xpose.msra.mxu0 0.0
    %837 = vmatpush.xpose.msra.mxu0 0.0
    %838 = vmatpush.xpose.msra.mxu0 0.0
    %839 = vmatpush.xpose.msra.mxu0 0.0
    %840 = vmatpush.xpose.msra.mxu0 0.0
    %841 = vmatpush.xpose.msra.mxu0 0.0
    %842 = vmatpush.xpose.msra.mxu0 0.0
    %843 = vmatpush.xpose.msra.mxu0 %v826
    %844 = vmatmul.f32.gmra.mxu0 %v824
    %v845 = vpop.f32.mrf.mxu0
    %v846 = vadd.f32 0.0, %v845
    %847 = vdwg.mxu0
    %848 = vrot.lane.b32.xlu0 %v558, 112
    %v849 = vpop.permute.xlu0 %848
    %850 = vrot.lane.b32.xlu0 %v555, 80
    %v851 = vpop.permute.xlu0 %850
    %v852 = vsel %vm562, %v849, 0
    %v854 = vsel %vm562, %v851, 0
    %856 = vmatpush.xpose.msra.mxu0 0.0
    %857 = vmatpush.xpose.msra.mxu0 0.0
    %858 = vmatpush.xpose.msra.mxu0 0.0
    %859 = vmatpush.xpose.msra.mxu0 0.0
    %860 = vmatpush.xpose.msra.mxu0 0.0
    %861 = vmatpush.xpose.msra.mxu0 0.0
    %862 = vmatpush.xpose.msra.mxu0 0.0
    %863 = vmatpush.xpose.msra.mxu0 0.0
    %864 = vmatpush.xpose.msra.mxu0 0.0
    %865 = vmatpush.xpose.msra.mxu0 0.0
    %866 = vmatpush.xpose.msra.mxu0 0.0
    %867 = vmatpush.xpose.msra.mxu0 0.0
    %868 = vmatpush.xpose.msra.mxu0 0.0
    %869 = vmatpush.xpose.msra.mxu0 0.0
    %870 = vmatpush.xpose.msra.mxu0 0.0
    %871 = vmatpush.xpose.msra.mxu0 %v854
    %872 = vmatmul.f32.gmra.mxu0 %v852
    %v873 = vpop.f32.mrf.mxu0
    %v874 = vadd.f32 0.0, %v873
    %875 = vdwg.mxu0
    %v876 = vsel %vm562, %v846, -inf
    %877 = vmax.xlane.f32.xlu0 %v876
    %v878 = vpop.xlane.xlu0 %877
    %v879 = vsel %vm562, %v874, -inf
    %880 = vmax.xlane.f32.xlu0 %v879
    %v881 = vpop.xlane.xlu0 %880
    %v882 = vsub.f32 %v846, %v878
    %v883 = vsub.f32 %v874, %v881
    %v884 = vmul.f32 %v882, 1.442695
    %v885 = vpow.pop %v884
    %v886 = vmul.f32 %v883, 1.442695
    %v887 = vpow.pop %v886
    %v888 = vsel %vm562, %v885, 0.0
    %889 = vadd.xlane.f32.xlu0 %v888
    %v890 = vpop.xlane.xlu0 %889
    %v891 = vsel %vm562, %v887, 0.0
    %892 = vadd.xlane.f32.xlu0 %v891
    %v893 = vpop.xlane.xlu0 %892
    %v894 = vrcp.pop %v890
    %v895 = vrcp.pop %v893
    %v896 = vmul.f32 %v885, %v894
    %v897 = vmul.f32 %v887, %v895
    %898 = vrot.lane.b32.xlu0 %v552, 48
    %v899 = vpop.permute.xlu0 %898
    %v902 = vsel %vm562, %v896, 0
    %904 = vmatpush.msra.mxu0 0.0
    %905 = vmatpush.msra.mxu0 0.0
    %906 = vmatpush.msra.mxu0 0.0
    %907 = vmatpush.msra.mxu0 0.0
    %908 = vmatpush.msra.mxu0 0.0
    %909 = vmatpush.msra.mxu0 0.0
    %910 = vmatpush.msra.mxu0 0.0
    %911 = vmatpush.msra.mxu0 0.0
    %912 = vmatpush.msra.mxu0 0.0
    %913 = vmatpush.msra.mxu0 0.0
    %914 = vmatpush.msra.mxu0 0.0
    %915 = vmatpush.msra.mxu0 0.0
    %916 = vmatpush.msra.mxu0 0.0
    %917 = vmatpush.msra.mxu0 0.0
    %918 = vmatpush.msra.mxu0 0.0
    %919 = vmatpush.msra.mxu0 %v899
    %920 = vmatmul.f32.gmra.mxu0 %v902
    %v921 = vpop.f32.mrf.mxu0
    %v922 = vadd.f32 0.0, %v921
    %923 = vdwg.mxu0
    %924 = vrot.lane.b32.xlu0 %v555, 48
    %v925 = vpop.permute.xlu0 %924
    %v928 = vsel %vm562, %v897, 0
    %930 = vmatpush.msra.mxu0 0.0
    %931 = vmatpush.msra.mxu0 0.0
    %932 = vmatpush.msra.mxu0 0.0
    %933 = vmatpush.msra.mxu0 0.0
    %934 = vmatpush.msra.mxu0 0.0
    %935 = vmatpush.msra.mxu0 0.0
    %936 = vmatpush.msra.mxu0 0.0
    %937 = vmatpush.msra.mxu0 0.0
    %938 = vmatpush.msra.mxu0 0.0
    %939 = vmatpush.msra.mxu0 0.0
    %940 = vmatpush.msra.mxu0 0.0
    %941 = vmatpush.msra.mxu0 0.0
    %942 = vmatpush.msra.mxu0 0.0
    %943 = vmatpush.msra.mxu0 0.0
    %944 = vmatpush.msra.mxu0 0.0
    %945 = vmatpush.msra.mxu0 %v925
    %946 = vmatmul.f32.gmra.mxu0 %v928
    %v947 = vpop.f32.mrf.mxu0
    %v948 = vadd.f32 0.0, %v947
    %949 = vdwg.mxu0
    %950 = vrot.lane.b32.xlu0 %v557, 104
    %v951 = vpop.permute.xlu0 %950
    %952 = vrot.lane.b32.xlu0 %v552, 72
    %v953 = vpop.permute.xlu0 %952
    %v954 = vsel %vm562, %v951, 0
    %v956 = vsel %vm562, %v953, 0
    %958 = vmatpush.xpose.msra.mxu0 0.0
    %959 = vmatpush.xpose.msra.mxu0 0.0
    %960 = vmatpush.xpose.msra.mxu0 0.0
    %961 = vmatpush.xpose.msra.mxu0 0.0
    %962 = vmatpush.xpose.msra.mxu0 0.0
    %963 = vmatpush.xpose.msra.mxu0 0.0
    %964 = vmatpush.xpose.msra.mxu0 0.0
    %965 = vmatpush.xpose.msra.mxu0 0.0
    %966 = vmatpush.xpose.msra.mxu0 0.0
    %967 = vmatpush.xpose.msra.mxu0 0.0
    %968 = vmatpush.xpose.msra.mxu0 0.0
    %969 = vmatpush.xpose.msra.mxu0 0.0
    %970 = vmatpush.xpose.msra.mxu0 0.0
    %971 = vmatpush.xpose.msra.mxu0 0.0
    %972 = vmatpush.xpose.msra.mxu0 0.0
    %973 = vmatpush.xpose.msra.mxu0 %v956
    %974 = vmatmul.f32.gmra.mxu0 %v954
    %v975 = vpop.f32.mrf.mxu0
    %v976 = vadd.f32 0.0, %v975
    %977 = vdwg.mxu0
    %978 = vrot.lane.b32.xlu0 %v558, 104
    %v979 = vpop.permute.xlu0 %978
    %980 = vrot.lane.b32.xlu0 %v555, 72
    %v981 = vpop.permute.xlu0 %980
    %v982 = vsel %vm562, %v979, 0
    %v984 = vsel %vm562, %v981, 0
    %986 = vmatpush.xpose.msra.mxu0 0.0
    %987 = vmatpush.xpose.msra.mxu0 0.0
    %988 = vmatpush.xpose.msra.mxu0 0.0
    %989 = vmatpush.xpose.msra.mxu0 0.0
    %990 = vmatpush.xpose.msra.mxu0 0.0
    %991 = vmatpush.xpose.msra.mxu0 0.0
    %992 = vmatpush.xpose.msra.mxu0 0.0
    %993 = vmatpush.xpose.msra.mxu0 0.0
    %994 = vmatpush.xpose.msra.mxu0 0.0
    %995 = vmatpush.xpose.msra.mxu0 0.0
    %996 = vmatpush.xpose.msra.mxu0 0.0
    %997 = vmatpush.xpose.msra.mxu0 0.0
    %998 = vmatpush.xpose.msra.mxu0 0.0
    %999 = vmatpush.xpose.msra.mxu0 0.0
    %1000 = vmatpush.xpose.msra.mxu0 0.0
    %1001 = vmatpush.xpose.msra.mxu0 %v984
    %1002 = vmatmul.f32.gmra.mxu0 %v982
    %v1003 = vpop.f32.mrf.mxu0
    %v1004 = vadd.f32 0.0, %v1003
    %1005 = vdwg.mxu0
    %v1006 = vsel %vm562, %v976, -inf
    %1007 = vmax.xlane.f32.xlu0 %v1006
    %v1008 = vpop.xlane.xlu0 %1007
    %v1009 = vsel %vm562, %v1004, -inf
    %1010 = vmax.xlane.f32.xlu0 %v1009
    %v1011 = vpop.xlane.xlu0 %1010
    %v1012 = vsub.f32 %v976, %v1008
    %v1013 = vsub.f32 %v1004, %v1011
    %v1014 = vmul.f32 %v1012, 1.442695
    %v1015 = vpow.pop %v1014
    %v1016 = vmul.f32 %v1013, 1.442695
    %v1017 = vpow.pop %v1016
    %v1018 = vsel %vm562, %v1015, 0.0
    %1019 = vadd.xlane.f32.xlu0 %v1018
    %v1020 = vpop.xlane.xlu0 %1019
    %v1021 = vsel %vm562, %v1017, 0.0
    %1022 = vadd.xlane.f32.xlu0 %v1021
    %v1023 = vpop.xlane.xlu0 %1022
    %v1024 = vrcp.pop %v1020
    %v1025 = vrcp.pop %v1023
    %v1026 = vmul.f32 %v1015, %v1024
    %v1027 = vmul.f32 %v1017, %v1025
    %1028 = vrot.lane.b32.xlu0 %v552, 40
    %v1029 = vpop.permute.xlu0 %1028
    %v1032 = vsel %vm562, %v1026, 0
    %1034 = vmatpush.msra.mxu0 0.0
    %1035 = vmatpush.msra.mxu0 0.0
    %1036 = vmatpush.msra.mxu0 0.0
    %1037 = vmatpush.msra.mxu0 0.0
    %1038 = vmatpush.msra.mxu0 0.0
    %1039 = vmatpush.msra.mxu0 0.0
    %1040 = vmatpush.msra.mxu0 0.0
    %1041 = vmatpush.msra.mxu0 0.0
    %1042 = vmatpush.msra.mxu0 0.0
    %1043 = vmatpush.msra.mxu0 0.0
    %1044 = vmatpush.msra.mxu0 0.0
    %1045 = vmatpush.msra.mxu0 0.0
    %1046 = vmatpush.msra.mxu0 0.0
    %1047 = vmatpush.msra.mxu0 0.0
    %1048 = vmatpush.msra.mxu0 0.0
    %1049 = vmatpush.msra.mxu0 %v1029
    %1050 = vmatmul.f32.gmra.mxu0 %v1032
    %v1051 = vpop.f32.mrf.mxu0
    %v1052 = vadd.f32 0.0, %v1051
    %1053 = vdwg.mxu0
    %1054 = vrot.lane.b32.xlu0 %v555, 40
    %v1055 = vpop.permute.xlu0 %1054
    %v1058 = vsel %vm562, %v1027, 0
    %1060 = vmatpush.msra.mxu0 0.0
    %1061 = vmatpush.msra.mxu0 0.0
    %1062 = vmatpush.msra.mxu0 0.0
    %1063 = vmatpush.msra.mxu0 0.0
    %1064 = vmatpush.msra.mxu0 0.0
    %1065 = vmatpush.msra.mxu0 0.0
    %1066 = vmatpush.msra.mxu0 0.0
    %1067 = vmatpush.msra.mxu0 0.0
    %1068 = vmatpush.msra.mxu0 0.0
    %1069 = vmatpush.msra.mxu0 0.0
    %1070 = vmatpush.msra.mxu0 0.0
    %1071 = vmatpush.msra.mxu0 0.0
    %1072 = vmatpush.msra.mxu0 0.0
    %1073 = vmatpush.msra.mxu0 0.0
    %1074 = vmatpush.msra.mxu0 0.0
    %1075 = vmatpush.msra.mxu0 %v1055
    %1076 = vmatmul.f32.gmra.mxu0 %v1058
    %v1077 = vpop.f32.mrf.mxu0
    %v1078 = vadd.f32 0.0, %v1077
    %1079 = vdwg.mxu0
    %1082 = vrot.lane.b32.xlu0 %v792, 8
    %v1083 = vpop.permute.xlu0 %1082
    %1084 = vrot.lane.b32.xlu0 %v818, 8
    %v1085 = vpop.permute.xlu0 %1084
    %1090 = vrot.lane.b32.xlu0 %v922, 16
    %v1091 = vpop.permute.xlu0 %1090
    %1092 = vrot.lane.b32.xlu0 %v948, 16
    %v1093 = vpop.permute.xlu0 %1092
    %1098 = vrot.lane.b32.xlu0 %v1052, 24
    %v1099 = vpop.permute.xlu0 %1098
    %1100 = vrot.lane.b32.xlu0 %v1078, 24
    %v1101 = vpop.permute.xlu0 %1100
    %v1104 = vsel %vm562, %v662, %v1083
    %v1105 = vsel %vm562, %v688, %v1085
    %vm1106 = vcmask 130048
    %v1107 = vsel %vm1106, %v1104, %v1091
    %v1108 = vsel %vm1106, %v1105, %v1093
    %vm1109 = vcmask 195584
    %v1110 = vsel %vm1109, %v1107, %v1099
    %v1111 = vsel %vm1109, %v1108, %v1101
    %v1112 = vld [vmem:[%s11] sm:$0xff]
    %v1113 = vld [vmem:[%s11 + $0x8] sm:$0xff]
    %v1114 = vld [vmem:[%s11 + $0x10] sm:$0xff]
    %v1115 = vld [vmem:[%s11 + $0x18] sm:$0xff]
    %v1117 = vsel %vm423, %v1110, 0
    %v1120 = vsel %vm423, %v1111, 0
    %1122 = vmatpush.msra.mxu0 0.0
    %1123 = vmatpush.msra.mxu0 0.0
    %1124 = vmatpush.msra.mxu0 0.0
    %1125 = vmatpush.msra.mxu0 0.0
    %1126 = vmatpush.msra.mxu0 0.0
    %1127 = vmatpush.msra.mxu0 0.0
    %1128 = vmatpush.msra.mxu0 0.0
    %1129 = vmatpush.msra.mxu0 0.0
    %1130 = vmatpush.msra.mxu0 0.0
    %1131 = vmatpush.msra.mxu0 0.0
    %1132 = vmatpush.msra.mxu0 0.0
    %1133 = vmatpush.msra.mxu0 0.0
    %1134 = vmatpush.msra.mxu0 %v1115
    %1135 = vmatpush.msra.mxu0 %v1114
    %1136 = vmatpush.msra.mxu0 %v1113
    %1137 = vmatpush.msra.mxu0 %v1112
    %1138 = vmatmul.f32.gmra.mxu0 %v1117
    %v1139 = vpop.f32.mrf.mxu0
    %v1140 = vadd.f32 0.0, %v1139
    %1141 = vmatmul.f32.gmra.mxu0 %v1120
    %v1142 = vpop.f32.mrf.mxu0
    %v1143 = vadd.f32 0.0, %v1142
    %1144 = vdwg.mxu0
    %v1145 = vadd.f32 %v417, %v1140
    %v1146 = vadd.f32 %v418, %v1143
    %v1147 = vld [vmem:[#allocation9] sm:$0x1]
    %v1149 = vperm.slane %v1147, 0
    %v1151 = vadd.f32 %v1145, %v1149
    %v1152 = vadd.f32 %v1146, %v1149
    %s1153 = sld [smem:[#allocation2 + $0x80]]
    %s1154 = sld [smem:[#allocation2 + $0x81]]
    %v1155 = vsel %vm423, %v1151, 0.0
    %1156 = vadd.xlane.f32.xlu0 %v1155
    %v1157 = vpop.xlane.xlu0 %1156
    %v1158 = vsel %vm423, %v1152, 0.0
    %1159 = vadd.xlane.f32.xlu0 %v1158
    %v1160 = vpop.xlane.xlu0 %1159
    %v1161 = vmul.f32 %v1157, %v436
    %v1162 = vmul.f32 %v1160, %v436
    %v1163 = vsub.f32 %v1151, %v1161
    %v1164 = vsub.f32 %v1152, %v1162
    %v1165 = vmul.f32 %v1163, %v1163
    %v1166 = vmul.f32 %v1164, %v1164
    %v1167 = vsel %vm423, %v1165, 0.0
    %1168 = vadd.xlane.f32.xlu0 %v1167
    %v1169 = vpop.xlane.xlu0 %1168
    %v1170 = vsel %vm423, %v1166, 0.0
    %1171 = vadd.xlane.f32.xlu0 %v1170
    %v1172 = vpop.xlane.xlu0 %1171
    %v1173 = vmul.f32 %v1169, %v455
    %v1174 = vmul.f32 %v1172, %v455
    %v1175 = vstv %s1153
    %v1176 = vmul.f32 %v1175, %v1163
    %v1177 = vmul.f32 %v1175, %v1164
    %v1178 = vrsqrt.pop %v1173
    %v1179 = vmul.f32 %v1178, %v1173
    %v1180 = vmul.f32 %v1179, %v1178
    %v1181 = vmul.f32 0.5, %v1180
    %v1182 = vsub.f32 1.5, %v1181
    %v1183 = vmul.f32 %v1178, %v1182
    %v1184 = vmul.f32 %v1173, %v1183
    %vm1185 = vcmp.eq.f32.partialorder %v1173, inf
    %v1186 = vsel %vm1185, %v1173, %v1184
    %vm1187 = vcmp.eq.f32.partialorder %v1173, 0.0
    %v1188 = vand.u32 %v1173, 2147483648
    %v1189 = vsel %vm1187, %v1188, %v1186
    %v1190 = vrsqrt.pop %v1174
    %v1191 = vmul.f32 %v1190, %v1174
    %v1192 = vmul.f32 %v1191, %v1190
    %v1193 = vmul.f32 0.5, %v1192
    %v1194 = vsub.f32 1.5, %v1193
    %v1195 = vmul.f32 %v1190, %v1194
    %v1196 = vmul.f32 %v1174, %v1195
    %vm1197 = vcmp.eq.f32.partialorder %v1174, inf
    %v1198 = vsel %vm1197, %v1174, %v1196
    %vm1199 = vcmp.eq.f32.partialorder %v1174, 0.0
    %v1200 = vand.u32 %v1174, 2147483648
    %v1201 = vsel %vm1199, %v1200, %v1198
    %v1202 = vadd.f32 %v1189, 1e-06
    %v1203 = vadd.f32 %v1201, 1e-06
    %v1204 = vrcp.pop %v1202
    %v1205 = vmul.f32 %v1202, %v1204
    %v1206 = vsub.f32 1.0, %v1205
    %v1207 = vmul.f32 %v1204, %v1206
    %v1208 = vadd.f32 %v1204, %v1207
    %vm1209 = vweird.f32 %v1202
    %vm1210 = vweird.f32 %v1204
    %vm1211 = vmor %vm1209, %vm1210
    %v1212 = vsel %vm1211, %v1204, %v1208
    %v1213 = vand.u32 2147483647, %v1202
    %vm1214 = vcmp.eq.f32.partialorder %v1213, 8.507059e+37
    %v1215 = vand.u32 %v1202, 2147483648
    %v1216 = vor.u32 1.1754944e-38, %v1215
    %v1217 = vsel %vm1214, %v1216, %v1212
    %v1218 = vmul.f32 %v1176, %v1217
    %v1219 = vrcp.pop %v1203
    %v1220 = vmul.f32 %v1203, %v1219
    %v1221 = vsub.f32 1.0, %v1220
    %v1222 = vmul.f32 %v1219, %v1221
    %v1223 = vadd.f32 %v1219, %v1222
    %vm1224 = vweird.f32 %v1203
    %vm1225 = vweird.f32 %v1219
    %vm1226 = vmor %vm1224, %vm1225
    %v1227 = vsel %vm1226, %v1219, %v1223
    %v1228 = vand.u32 2147483647, %v1203
    %vm1229 = vcmp.eq.f32.partialorder %v1228, 8.507059e+37
    %v1230 = vand.u32 %v1203, 2147483648
    %v1231 = vor.u32 1.1754944e-38, %v1230
    %v1232 = vsel %vm1229, %v1231, %v1227
    %v1233 = vmul.f32 %v1177, %v1232
    %v1234 = vstv %s1154
    %v1235 = vadd.f32 %v1218, %v1234
    %v1236 = vadd.f32 %v1233, %v1234
    %v1237 = vld [vmem:[%s15] sm:$0xff]
    %v1238 = vld [vmem:[%s15 + $0x8] sm:$0xff]
    %v1239 = vld [vmem:[%s15 + $0x10] sm:$0xff]
    %v1240 = vld [vmem:[%s15 + $0x18] sm:$0xff]
    %v1241 = vld [vmem:[#allocation10] sm:$0x1]
    %v1243 = vperm.slane %v1241, 0
    %v1246 = vsel %vm423, %v1235, 0
    %v1249 = vsel %vm423, %v1236, 0
    %1251 = vmatpush.msra.mxu0 0.0
    %1252 = vmatpush.msra.mxu0 0.0
    %1253 = vmatpush.msra.mxu0 0.0
    %1254 = vmatpush.msra.mxu0 0.0
    %1255 = vmatpush.msra.mxu0 0.0
    %1256 = vmatpush.msra.mxu0 0.0
    %1257 = vmatpush.msra.mxu0 0.0
    %1258 = vmatpush.msra.mxu0 0.0
    %1259 = vmatpush.msra.mxu0 0.0
    %1260 = vmatpush.msra.mxu0 0.0
    %1261 = vmatpush.msra.mxu0 0.0
    %1262 = vmatpush.msra.mxu0 0.0
    %1263 = vmatpush.msra.mxu0 %v1240
    %1264 = vmatpush.msra.mxu0 %v1239
    %1265 = vmatpush.msra.mxu0 %v1238
    %1266 = vmatpush.msra.mxu0 %v1237
    %1267 = vmatmul.f32.gmra.mxu0 %v1246
    %v1268 = vpop.f32.mrf.mxu0
    %v1269 = vadd.f32 %v1243, %v1268
    %1270 = vmatmul.f32.gmra.mxu0 %v1249
    %v1271 = vpop.f32.mrf.mxu0
    %v1272 = vadd.f32 %v1243, %v1271
    %1273 = vdwg.mxu0
    %v1274 = vld [vmem:[%s19] sm:$0xff]
    %v1275 = vld [vmem:[%s19 + $0x8] sm:$0xff]
    %v1276 = vld [vmem:[%s19 + $0x10] sm:$0xff]
    %v1277 = vld [vmem:[%s19 + $0x18] sm:$0xff]
    %v1278 = vld [vmem:[#allocation12] sm:$0x1]
    %v1280 = vperm.slane %v1278, 0
    %v1283 = vsel %vm423, %v419, 0
    %v1286 = vsel %vm423, %v420, 0
    %1288 = vmatpush.msra.mxu0 0.0
    %1289 = vmatpush.msra.mxu0 0.0
    %1290 = vmatpush.msra.mxu0 0.0
    %1291 = vmatpush.msra.mxu0 0.0
    %1292 = vmatpush.msra.mxu0 0.0
    %1293 = vmatpush.msra.mxu0 0.0
    %1294 = vmatpush.msra.mxu0 0.0
    %1295 = vmatpush.msra.mxu0 0.0
    %1296 = vmatpush.msra.mxu0 0.0
    %1297 = vmatpush.msra.mxu0 0.0
    %1298 = vmatpush.msra.mxu0 0.0
    %1299 = vmatpush.msra.mxu0 0.0
    %1300 = vmatpush.msra.mxu0 %v1277
    %1301 = vmatpush.msra.mxu0 %v1276
    %1302 = vmatpush.msra.mxu0 %v1275
    %1303 = vmatpush.msra.mxu0 %v1274
    %1304 = vmatmul.f32.gmra.mxu0 %v1283
    %v1305 = vpop.f32.mrf.mxu0
    %v1306 = vadd.f32 %v1280, %v1305
    %1307 = vmatmul.f32.gmra.mxu0 %v1286
    %v1308 = vpop.f32.mrf.mxu0
    %v1309 = vadd.f32 %v1280, %v1308
    %1310 = vdwg.mxu0
    %v1311 = vmul.f32 %v1269, 0.35355338
    %v1312 = vmul.f32 %v1272, 0.35355338
    %v1314 = vsel %vm562, %v1311, 0
    %v1317 = vsel %vm562, %v1306, 0
    %1319 = vmatpush.xpose.msra.mxu0 0.0
    %1320 = vmatpush.xpose.msra.mxu0 0.0
    %1321 = vmatpush.xpose.msra.mxu0 0.0
    %1322 = vmatpush.xpose.msra.mxu0 0.0
    %1323 = vmatpush.xpose.msra.mxu0 0.0
    %1324 = vmatpush.xpose.msra.mxu0 0.0
    %1325 = vmatpush.xpose.msra.mxu0 0.0
    %1326 = vmatpush.xpose.msra.mxu0 0.0
    %1327 = vmatpush.xpose.msra.mxu0 0.0
    %1328 = vmatpush.xpose.msra.mxu0 0.0
    %1329 = vmatpush.xpose.msra.mxu0 0.0
    %1330 = vmatpush.xpose.msra.mxu0 0.0
    %1331 = vmatpush.xpose.msra.mxu0 0.0
    %1332 = vmatpush.xpose.msra.mxu0 0.0
    %1333 = vmatpush.xpose.msra.mxu0 0.0
    %1334 = vmatpush.xpose.msra.mxu0 %v1317
    %1335 = vmatmul.f32.gmra.mxu0 %v1314
    %v1336 = vpop.f32.mrf.mxu0
    %v1337 = vadd.f32 0.0, %v1336
    %1338 = vdwg.mxu0
    %v1340 = vsel %vm562, %v1312, 0
    %v1343 = vsel %vm562, %v1309, 0
    %1345 = vmatpush.xpose.msra.mxu0 0.0
    %1346 = vmatpush.xpose.msra.mxu0 0.0
    %1347 = vmatpush.xpose.msra.mxu0 0.0
    %1348 = vmatpush.xpose.msra.mxu0 0.0
    %1349 = vmatpush.xpose.msra.mxu0 0.0
    %1350 = vmatpush.xpose.msra.mxu0 0.0
    %1351 = vmatpush.xpose.msra.mxu0 0.0
    %1352 = vmatpush.xpose.msra.mxu0 0.0
    %1353 = vmatpush.xpose.msra.mxu0 0.0
    %1354 = vmatpush.xpose.msra.mxu0 0.0
    %1355 = vmatpush.xpose.msra.mxu0 0.0
    %1356 = vmatpush.xpose.msra.mxu0 0.0
    %1357 = vmatpush.xpose.msra.mxu0 0.0
    %1358 = vmatpush.xpose.msra.mxu0 0.0
    %1359 = vmatpush.xpose.msra.mxu0 0.0
    %1360 = vmatpush.xpose.msra.mxu0 %v1343
    %1361 = vmatmul.f32.gmra.mxu0 %v1340
    %v1362 = vpop.f32.mrf.mxu0
    %v1363 = vadd.f32 0.0, %v1362
    %1364 = vdwg.mxu0
    %v1365 = vsel %vm562, %v1337, -inf
    %1366 = vmax.xlane.f32.xlu0 %v1365
    %v1367 = vpop.xlane.xlu0 %1366
    %v1368 = vsel %vm562, %v1363, -inf
    %1369 = vmax.xlane.f32.xlu0 %v1368
    %v1370 = vpop.xlane.xlu0 %1369
    %v1371 = vsub.f32 %v1337, %v1367
    %v1372 = vsub.f32 %v1363, %v1370
    %v1373 = vmul.f32 %v1371, 1.442695
    %v1374 = vpow.pop %v1373
    %v1375 = vmul.f32 %v1372, 1.442695
    %v1376 = vpow.pop %v1375
    %v1377 = vsel %vm562, %v1374, 0.0
    %1378 = vadd.xlane.f32.xlu0 %v1377
    %v1379 = vpop.xlane.xlu0 %1378
    %v1380 = vsel %vm562, %v1376, 0.0
    %1381 = vadd.xlane.f32.xlu0 %v1380
    %v1382 = vpop.xlane.xlu0 %1381
    %v1383 = vrcp.pop %v1379
    %v1384 = vrcp.pop %v1382
    %v1385 = vmul.f32 %v1374, %v1383
    %v1386 = vmul.f32 %v1376, %v1384
    %1387 = vrot.lane.b32.xlu0 %v1306, 96
    %v1388 = vpop.permute.xlu0 %1387
    %v1391 = vsel %vm562, %v1385, 0
    %1393 = vmatpush.msra.mxu0 0.0
    %1394 = vmatpush.msra.mxu0 0.0
    %1395 = vmatpush.msra.mxu0 0.0
    %1396 = vmatpush.msra.mxu0 0.0
    %1397 = vmatpush.msra.mxu0 0.0
    %1398 = vmatpush.msra.mxu0 0.0
    %1399 = vmatpush.msra.mxu0 0.0
    %1400 = vmatpush.msra.mxu0 0.0
    %1401 = vmatpush.msra.mxu0 0.0
    %1402 = vmatpush.msra.mxu0 0.0
    %1403 = vmatpush.msra.mxu0 0.0
    %1404 = vmatpush.msra.mxu0 0.0
    %1405 = vmatpush.msra.mxu0 0.0
    %1406 = vmatpush.msra.mxu0 0.0
    %1407 = vmatpush.msra.mxu0 0.0
    %1408 = vmatpush.msra.mxu0 %v1388
    %1409 = vmatmul.f32.gmra.mxu0 %v1391
    %v1410 = vpop.f32.mrf.mxu0
    %v1411 = vadd.f32 0.0, %v1410
    %1412 = vdwg.mxu0
    %1413 = vrot.lane.b32.xlu0 %v1309, 96
    %v1414 = vpop.permute.xlu0 %1413
    %v1417 = vsel %vm562, %v1386, 0
    %1419 = vmatpush.msra.mxu0 0.0
    %1420 = vmatpush.msra.mxu0 0.0
    %1421 = vmatpush.msra.mxu0 0.0
    %1422 = vmatpush.msra.mxu0 0.0
    %1423 = vmatpush.msra.mxu0 0.0
    %1424 = vmatpush.msra.mxu0 0.0
    %1425 = vmatpush.msra.mxu0 0.0
    %1426 = vmatpush.msra.mxu0 0.0
    %1427 = vmatpush.msra.mxu0 0.0
    %1428 = vmatpush.msra.mxu0 0.0
    %1429 = vmatpush.msra.mxu0 0.0
    %1430 = vmatpush.msra.mxu0 0.0
    %1431 = vmatpush.msra.mxu0 0.0
    %1432 = vmatpush.msra.mxu0 0.0
    %1433 = vmatpush.msra.mxu0 0.0
    %1434 = vmatpush.msra.mxu0 %v1414
    %1435 = vmatmul.f32.gmra.mxu0 %v1417
    %v1436 = vpop.f32.mrf.mxu0
    %v1437 = vadd.f32 0.0, %v1436
    %1438 = vdwg.mxu0
    %1439 = vrot.lane.b32.xlu0 %v1311, 120
    %v1440 = vpop.permute.xlu0 %1439
    %1441 = vrot.lane.b32.xlu0 %v1306, 120
    %v1442 = vpop.permute.xlu0 %1441
    %v1443 = vsel %vm562, %v1440, 0
    %v1445 = vsel %vm562, %v1442, 0
    %1447 = vmatpush.xpose.msra.mxu0 0.0
    %1448 = vmatpush.xpose.msra.mxu0 0.0
    %1449 = vmatpush.xpose.msra.mxu0 0.0
    %1450 = vmatpush.xpose.msra.mxu0 0.0
    %1451 = vmatpush.xpose.msra.mxu0 0.0
    %1452 = vmatpush.xpose.msra.mxu0 0.0
    %1453 = vmatpush.xpose.msra.mxu0 0.0
    %1454 = vmatpush.xpose.msra.mxu0 0.0
    %1455 = vmatpush.xpose.msra.mxu0 0.0
    %1456 = vmatpush.xpose.msra.mxu0 0.0
    %1457 = vmatpush.xpose.msra.mxu0 0.0
    %1458 = vmatpush.xpose.msra.mxu0 0.0
    %1459 = vmatpush.xpose.msra.mxu0 0.0
    %1460 = vmatpush.xpose.msra.mxu0 0.0
    %1461 = vmatpush.xpose.msra.mxu0 0.0
    %1462 = vmatpush.xpose.msra.mxu0 %v1445
    %1463 = vmatmul.f32.gmra.mxu0 %v1443
    %v1464 = vpop.f32.mrf.mxu0
    %v1465 = vadd.f32 0.0, %v1464
    %1466 = vdwg.mxu0
    %1467 = vrot.lane.b32.xlu0 %v1312, 120
    %v1468 = vpop.permute.xlu0 %1467
    %1469 = vrot.lane.b32.xlu0 %v1309, 120
    %v1470 = vpop.permute.xlu0 %1469
    %v1471 = vsel %vm562, %v1468, 0
    %v1473 = vsel %vm562, %v1470, 0
    %1475 = vmatpush.xpose.msra.mxu0 0.0
    %1476 = vmatpush.xpose.msra.mxu0 0.0
    %1477 = vmatpush.xpose.msra.mxu0 0.0
    %1478 = vmatpush.xpose.msra.mxu0 0.0
    %1479 = vmatpush.xpose.msra.mxu0 0.0
    %1480 = vmatpush.xpose.msra.mxu0 0.0
    %1481 = vmatpush.xpose.msra.mxu0 0.0
    %1482 = vmatpush.xpose.msra.mxu0 0.0
    %1483 = vmatpush.xpose.msra.mxu0 0.0
    %1484 = vmatpush.xpose.msra.mxu0 0.0
    %1485 = vmatpush.xpose.msra.mxu0 0.0
    %1486 = vmatpush.xpose.msra.mxu0 0.0
    %1487 = vmatpush.xpose.msra.mxu0 0.0
    %1488 = vmatpush.xpose.msra.mxu0 0.0
    %1489 = vmatpush.xpose.msra.mxu0 0.0
    %1490 = vmatpush.xpose.msra.mxu0 %v1473
    %1491 = vmatmul.f32.gmra.mxu0 %v1471
    %v1492 = vpop.f32.mrf.mxu0
    %v1493 = vadd.f32 0.0, %v1492
    %1494 = vdwg.mxu0
    %v1495 = vsel %vm562, %v1465, -inf
    %1496 = vmax.xlane.f32.xlu0 %v1495
    %v1497 = vpop.xlane.xlu0 %1496
    %v1498 = vsel %vm562, %v1493, -inf
    %1499 = vmax.xlane.f32.xlu0 %v1498
    %v1500 = vpop.xlane.xlu0 %1499
    %v1501 = vsub.f32 %v1465, %v1497
    %v1502 = vsub.f32 %v1493, %v1500
    %v1503 = vmul.f32 %v1501, 1.442695
    %v1504 = vpow.pop %v1503
    %v1505 = vmul.f32 %v1502, 1.442695
    %v1506 = vpow.pop %v1505
    %v1507 = vsel %vm562, %v1504, 0.0
    %1508 = vadd.xlane.f32.xlu0 %v1507
    %v1509 = vpop.xlane.xlu0 %1508
    %v1510 = vsel %vm562, %v1506, 0.0
    %1511 = vadd.xlane.f32.xlu0 %v1510
    %v1512 = vpop.xlane.xlu0 %1511
    %v1513 = vrcp.pop %v1509
    %v1514 = vrcp.pop %v1512
    %v1515 = vmul.f32 %v1504, %v1513
    %v1516 = vmul.f32 %v1506, %v1514
    %1517 = vrot.lane.b32.xlu0 %v1306, 88
    %v1518 = vpop.permute.xlu0 %1517
    %v1521 = vsel %vm562, %v1515, 0
    %1523 = vmatpush.msra.mxu0 0.0
    %1524 = vmatpush.msra.mxu0 0.0
    %1525 = vmatpush.msra.mxu0 0.0
    %1526 = vmatpush.msra.mxu0 0.0
    %1527 = vmatpush.msra.mxu0 0.0
    %1528 = vmatpush.msra.mxu0 0.0
    %1529 = vmatpush.msra.mxu0 0.0
    %1530 = vmatpush.msra.mxu0 0.0
    %1531 = vmatpush.msra.mxu0 0.0
    %1532 = vmatpush.msra.mxu0 0.0
    %1533 = vmatpush.msra.mxu0 0.0
    %1534 = vmatpush.msra.mxu0 0.0
    %1535 = vmatpush.msra.mxu0 0.0
    %1536 = vmatpush.msra.mxu0 0.0
    %1537 = vmatpush.msra.mxu0 0.0
    %1538 = vmatpush.msra.mxu0 %v1518
    %1539 = vmatmul.f32.gmra.mxu0 %v1521
    %v1540 = vpop.f32.mrf.mxu0
    %v1541 = vadd.f32 0.0, %v1540
    %1542 = vdwg.mxu0
    %1543 = vrot.lane.b32.xlu0 %v1309, 88
    %v1544 = vpop.permute.xlu0 %1543
    %v1547 = vsel %vm562, %v1516, 0
    %1549 = vmatpush.msra.mxu0 0.0
    %1550 = vmatpush.msra.mxu0 0.0
    %1551 = vmatpush.msra.mxu0 0.0
    %1552 = vmatpush.msra.mxu0 0.0
    %1553 = vmatpush.msra.mxu0 0.0
    %1554 = vmatpush.msra.mxu0 0.0
    %1555 = vmatpush.msra.mxu0 0.0
    %1556 = vmatpush.msra.mxu0 0.0
    %1557 = vmatpush.msra.mxu0 0.0
    %1558 = vmatpush.msra.mxu0 0.0
    %1559 = vmatpush.msra.mxu0 0.0
    %1560 = vmatpush.msra.mxu0 0.0
    %1561 = vmatpush.msra.mxu0 0.0
    %1562 = vmatpush.msra.mxu0 0.0
    %1563 = vmatpush.msra.mxu0 0.0
    %1564 = vmatpush.msra.mxu0 %v1544
    %1565 = vmatmul.f32.gmra.mxu0 %v1547
    %v1566 = vpop.f32.mrf.mxu0
    %v1567 = vadd.f32 0.0, %v1566
    %1568 = vdwg.mxu0
    %1569 = vrot.lane.b32.xlu0 %v1311, 112
    %v1570 = vpop.permute.xlu0 %1569
    %1571 = vrot.lane.b32.xlu0 %v1306, 112
    %v1572 = vpop.permute.xlu0 %1571
    %v1573 = vsel %vm562, %v1570, 0
    %v1575 = vsel %vm562, %v1572, 0
    %1577 = vmatpush.xpose.msra.mxu0 0.0
    %1578 = vmatpush.xpose.msra.mxu0 0.0
    %1579 = vmatpush.xpose.msra.mxu0 0.0
    %1580 = vmatpush.xpose.msra.mxu0 0.0
    %1581 = vmatpush.xpose.msra.mxu0 0.0
    %1582 = vmatpush.xpose.msra.mxu0 0.0
    %1583 = vmatpush.xpose.msra.mxu0 0.0
    %1584 = vmatpush.xpose.msra.mxu0 0.0
    %1585 = vmatpush.xpose.msra.mxu0 0.0
    %1586 = vmatpush.xpose.msra.mxu0 0.0
    %1587 = vmatpush.xpose.msra.mxu0 0.0
    %1588 = vmatpush.xpose.msra.mxu0 0.0
    %1589 = vmatpush.xpose.msra.mxu0 0.0
    %1590 = vmatpush.xpose.msra.mxu0 0.0
    %1591 = vmatpush.xpose.msra.mxu0 0.0
    %1592 = vmatpush.xpose.msra.mxu0 %v1575
    %1593 = vmatmul.f32.gmra.mxu0 %v1573
    %v1594 = vpop.f32.mrf.mxu0
    %v1595 = vadd.f32 0.0, %v1594
    %1596 = vdwg.mxu0
    %1597 = vrot.lane.b32.xlu0 %v1312, 112
    %v1598 = vpop.permute.xlu0 %1597
    %1599 = vrot.lane.b32.xlu0 %v1309, 112
    %v1600 = vpop.permute.xlu0 %1599
    %v1601 = vsel %vm562, %v1598, 0
    %v1603 = vsel %vm562, %v1600, 0
    %1605 = vmatpush.xpose.msra.mxu0 0.0
    %1606 = vmatpush.xpose.msra.mxu0 0.0
    %1607 = vmatpush.xpose.msra.mxu0 0.0
    %1608 = vmatpush.xpose.msra.mxu0 0.0
    %1609 = vmatpush.xpose.msra.mxu0 0.0
    %1610 = vmatpush.xpose.msra.mxu0 0.0
    %1611 = vmatpush.xpose.msra.mxu0 0.0
    %1612 = vmatpush.xpose.msra.mxu0 0.0
    %1613 = vmatpush.xpose.msra.mxu0 0.0
    %1614 = vmatpush.xpose.msra.mxu0 0.0
    %1615 = vmatpush.xpose.msra.mxu0 0.0
    %1616 = vmatpush.xpose.msra.mxu0 0.0
    %1617 = vmatpush.xpose.msra.mxu0 0.0
    %1618 = vmatpush.xpose.msra.mxu0 0.0
    %1619 = vmatpush.xpose.msra.mxu0 0.0
    %1620 = vmatpush.xpose.msra.mxu0 %v1603
    %1621 = vmatmul.f32.gmra.mxu0 %v1601
    %v1622 = vpop.f32.mrf.mxu0
    %v1623 = vadd.f32 0.0, %v1622
    %1624 = vdwg.mxu0
    %v1625 = vsel %vm562, %v1595, -inf
    %1626 = vmax.xlane.f32.xlu0 %v1625
    %v1627 = vpop.xlane.xlu0 %1626
    %v1628 = vsel %vm562, %v1623, -inf
    %1629 = vmax.xlane.f32.xlu0 %v1628
    %v1630 = vpop.xlane.xlu0 %1629
    %v1631 = vsub.f32 %v1595, %v1627
    %v1632 = vsub.f32 %v1623, %v1630
    %v1633 = vmul.f32 %v1631, 1.442695
    %v1634 = vpow.pop %v1633
    %v1635 = vmul.f32 %v1632, 1.442695
    %v1636 = vpow.pop %v1635
    %v1637 = vsel %vm562, %v1634, 0.0
    %1638 = vadd.xlane.f32.xlu0 %v1637
    %v1639 = vpop.xlane.xlu0 %1638
    %v1640 = vsel %vm562, %v1636, 0.0
    %1641 = vadd.xlane.f32.xlu0 %v1640
    %v1642 = vpop.xlane.xlu0 %1641
    %v1643 = vrcp.pop %v1639
    %v1644 = vrcp.pop %v1642
    %v1645 = vmul.f32 %v1634, %v1643
    %v1646 = vmul.f32 %v1636, %v1644
    %1647 = vrot.lane.b32.xlu0 %v1306, 80
    %v1648 = vpop.permute.xlu0 %1647
    %v1651 = vsel %vm562, %v1645, 0
    %1653 = vmatpush.msra.mxu0 0.0
    %1654 = vmatpush.msra.mxu0 0.0
    %1655 = vmatpush.msra.mxu0 0.0
    %1656 = vmatpush.msra.mxu0 0.0
    %1657 = vmatpush.msra.mxu0 0.0
    %1658 = vmatpush.msra.mxu0 0.0
    %1659 = vmatpush.msra.mxu0 0.0
    %1660 = vmatpush.msra.mxu0 0.0
    %1661 = vmatpush.msra.mxu0 0.0
    %1662 = vmatpush.msra.mxu0 0.0
    %1663 = vmatpush.msra.mxu0 0.0
    %1664 = vmatpush.msra.mxu0 0.0
    %1665 = vmatpush.msra.mxu0 0.0
    %1666 = vmatpush.msra.mxu0 0.0
    %1667 = vmatpush.msra.mxu0 0.0
    %1668 = vmatpush.msra.mxu0 %v1648
    %1669 = vmatmul.f32.gmra.mxu0 %v1651
    %v1670 = vpop.f32.mrf.mxu0
    %v1671 = vadd.f32 0.0, %v1670
    %1672 = vdwg.mxu0
    %1673 = vrot.lane.b32.xlu0 %v1309, 80
    %v1674 = vpop.permute.xlu0 %1673
    %v1677 = vsel %vm562, %v1646, 0
    %1679 = vmatpush.msra.mxu0 0.0
    %1680 = vmatpush.msra.mxu0 0.0
    %1681 = vmatpush.msra.mxu0 0.0
    %1682 = vmatpush.msra.mxu0 0.0
    %1683 = vmatpush.msra.mxu0 0.0
    %1684 = vmatpush.msra.mxu0 0.0
    %1685 = vmatpush.msra.mxu0 0.0
    %1686 = vmatpush.msra.mxu0 0.0
    %1687 = vmatpush.msra.mxu0 0.0
    %1688 = vmatpush.msra.mxu0 0.0
    %1689 = vmatpush.msra.mxu0 0.0
    %1690 = vmatpush.msra.mxu0 0.0
    %1691 = vmatpush.msra.mxu0 0.0
    %1692 = vmatpush.msra.mxu0 0.0
    %1693 = vmatpush.msra.mxu0 0.0
    %1694 = vmatpush.msra.mxu0 %v1674
    %1695 = vmatmul.f32.gmra.mxu0 %v1677
    %v1696 = vpop.f32.mrf.mxu0
    %v1697 = vadd.f32 0.0, %v1696
    %1698 = vdwg.mxu0
    %1699 = vrot.lane.b32.xlu0 %v1311, 104
    %v1700 = vpop.permute.xlu0 %1699
    %1701 = vrot.lane.b32.xlu0 %v1306, 104
    %v1702 = vpop.permute.xlu0 %1701
    %v1703 = vsel %vm562, %v1700, 0
    %v1705 = vsel %vm562, %v1702, 0
    %1707 = vmatpush.xpose.msra.mxu0 0.0
    %1708 = vmatpush.xpose.msra.mxu0 0.0
    %1709 = vmatpush.xpose.msra.mxu0 0.0
    %1710 = vmatpush.xpose.msra.mxu0 0.0
    %1711 = vmatpush.xpose.msra.mxu0 0.0
    %1712 = vmatpush.xpose.msra.mxu0 0.0
    %1713 = vmatpush.xpose.msra.mxu0 0.0
    %1714 = vmatpush.xpose.msra.mxu0 0.0
    %1715 = vmatpush.xpose.msra.mxu0 0.0
    %1716 = vmatpush.xpose.msra.mxu0 0.0
    %1717 = vmatpush.xpose.msra.mxu0 0.0
    %1718 = vmatpush.xpose.msra.mxu0 0.0
    %1719 = vmatpush.xpose.msra.mxu0 0.0
    %1720 = vmatpush.xpose.msra.mxu0 0.0
    %1721 = vmatpush.xpose.msra.mxu0 0.0
    %1722 = vmatpush.xpose.msra.mxu0 %v1705
    %1723 = vmatmul.f32.gmra.mxu0 %v1703
    %v1724 = vpop.f32.mrf.mxu0
    %v1725 = vadd.f32 0.0, %v1724
    %1726 = vdwg.mxu0
    %1727 = vrot.lane.b32.xlu0 %v1312, 104
    %v1728 = vpop.permute.xlu0 %1727
    %1729 = vrot.lane.b32.xlu0 %v1309, 104
    %v1730 = vpop.permute.xlu0 %1729
    %v1731 = vsel %vm562, %v1728, 0
    %v1733 = vsel %vm562, %v1730, 0
    %1735 = vmatpush.xpose.msra.mxu0 0.0
    %1736 = vmatpush.xpose.msra.mxu0 0.0
    %1737 = vmatpush.xpose.msra.mxu0 0.0
    %1738 = vmatpush.xpose.msra.mxu0 0.0
    %1739 = vmatpush.xpose.msra.mxu0 0.0
    %1740 = vmatpush.xpose.msra.mxu0 0.0
    %1741 = vmatpush.xpose.msra.mxu0 0.0
    %1742 = vmatpush.xpose.msra.mxu0 0.0
    %1743 = vmatpush.xpose.msra.mxu0 0.0
    %1744 = vmatpush.xpose.msra.mxu0 0.0
    %1745 = vmatpush.xpose.msra.mxu0 0.0
    %1746 = vmatpush.xpose.msra.mxu0 0.0
    %1747 = vmatpush.xpose.msra.mxu0 0.0
    %1748 = vmatpush.xpose.msra.mxu0 0.0
    %1749 = vmatpush.xpose.msra.mxu0 0.0
    %1750 = vmatpush.xpose.msra.mxu0 %v1733
    %1751 = vmatmul.f32.gmra.mxu0 %v1731
    %v1752 = vpop.f32.mrf.mxu0
    %v1753 = vadd.f32 0.0, %v1752
    %1754 = vdwg.mxu0
    %v1755 = vsel %vm562, %v1725, -inf
    %1756 = vmax.xlane.f32.xlu0 %v1755
    %v1757 = vpop.xlane.xlu0 %1756
    %v1758 = vsel %vm562, %v1753, -inf
    %1759 = vmax.xlane.f32.xlu0 %v1758
    %v1760 = vpop.xlane.xlu0 %1759
    %v1761 = vsub.f32 %v1725, %v1757
    %v1762 = vsub.f32 %v1753, %v1760
    %v1763 = vmul.f32 %v1761, 1.442695
    %v1764 = vpow.pop %v1763
    %v1765 = vmul.f32 %v1762, 1.442695
    %v1766 = vpow.pop %v1765
    %v1767 = vsel %vm562, %v1764, 0.0
    %1768 = vadd.xlane.f32.xlu0 %v1767
    %v1769 = vpop.xlane.xlu0 %1768
    %v1770 = vsel %vm562, %v1766, 0.0
    %1771 = vadd.xlane.f32.xlu0 %v1770
    %v1772 = vpop.xlane.xlu0 %1771
    %v1773 = vrcp.pop %v1769
    %v1774 = vrcp.pop %v1772
    %v1775 = vmul.f32 %v1764, %v1773
    %v1776 = vmul.f32 %v1766, %v1774
    %1777 = vrot.lane.b32.xlu0 %v1306, 72
    %v1778 = vpop.permute.xlu0 %1777
    %v1781 = vsel %vm562, %v1775, 0
    %1783 = vmatpush.msra.mxu0 0.0
    %1784 = vmatpush.msra.mxu0 0.0
    %1785 = vmatpush.msra.mxu0 0.0
    %1786 = vmatpush.msra.mxu0 0.0
    %1787 = vmatpush.msra.mxu0 0.0
    %1788 = vmatpush.msra.mxu0 0.0
    %1789 = vmatpush.msra.mxu0 0.0
    %1790 = vmatpush.msra.mxu0 0.0
    %1791 = vmatpush.msra.mxu0 0.0
    %1792 = vmatpush.msra.mxu0 0.0
    %1793 = vmatpush.msra.mxu0 0.0
    %1794 = vmatpush.msra.mxu0 0.0
    %1795 = vmatpush.msra.mxu0 0.0
    %1796 = vmatpush.msra.mxu0 0.0
    %1797 = vmatpush.msra.mxu0 0.0
    %1798 = vmatpush.msra.mxu0 %v1778
    %1799 = vmatmul.f32.gmra.mxu0 %v1781
    %v1800 = vpop.f32.mrf.mxu0
    %v1801 = vadd.f32 0.0, %v1800
    %1802 = vdwg.mxu0
    %1803 = vrot.lane.b32.xlu0 %v1309, 72
    %v1804 = vpop.permute.xlu0 %1803
    %v1807 = vsel %vm562, %v1776, 0
    %1809 = vmatpush.msra.mxu0 0.0
    %1810 = vmatpush.msra.mxu0 0.0
    %1811 = vmatpush.msra.mxu0 0.0
    %1812 = vmatpush.msra.mxu0 0.0
    %1813 = vmatpush.msra.mxu0 0.0
    %1814 = vmatpush.msra.mxu0 0.0
    %1815 = vmatpush.msra.mxu0 0.0
    %1816 = vmatpush.msra.mxu0 0.0
    %1817 = vmatpush.msra.mxu0 0.0
    %1818 = vmatpush.msra.mxu0 0.0
    %1819 = vmatpush.msra.mxu0 0.0
    %1820 = vmatpush.msra.mxu0 0.0
    %1821 = vmatpush.msra.mxu0 0.0
    %1822 = vmatpush.msra.mxu0 0.0
    %1823 = vmatpush.msra.mxu0 0.0
    %1824 = vmatpush.msra.mxu0 %v1804
    %1825 = vmatmul.f32.gmra.mxu0 %v1807
    %v1826 = vpop.f32.mrf.mxu0
    %v1827 = vadd.f32 0.0, %v1826
    %1828 = vdwg.mxu0
    %1831 = vrot.lane.b32.xlu0 %v1541, 8
    %v1832 = vpop.permute.xlu0 %1831
    %1833 = vrot.lane.b32.xlu0 %v1567, 8
    %v1834 = vpop.permute.xlu0 %1833
    %1839 = vrot.lane.b32.xlu0 %v1671, 16
    %v1840 = vpop.permute.xlu0 %1839
    %1841 = vrot.lane.b32.xlu0 %v1697, 16
    %v1842 = vpop.permute.xlu0 %1841
    %1847 = vrot.lane.b32.xlu0 %v1801, 24
    %v1848 = vpop.permute.xlu0 %1847
    %1849 = vrot.lane.b32.xlu0 %v1827, 24
    %v1850 = vpop.permute.xlu0 %1849
    %v1853 = vsel %vm562, %v1411, %v1832
    %v1854 = vsel %vm562, %v1437, %v1834
    %v1855 = vsel %vm1106, %v1853, %v1840
    %v1856 = vsel %vm1106, %v1854, %v1842
    %v1857 = vsel %vm1109, %v1855, %v1848
    %v1858 = vsel %vm1109, %v1856, %v1850
    %v1859 = vld [vmem:[%s23] sm:$0xff]
    %v1860 = vld [vmem:[%s23 + $0x8] sm:$0xff]
    %v1861 = vld [vmem:[%s23 + $0x10] sm:$0xff]
    %v1862 = vld [vmem:[%s23 + $0x18] sm:$0xff]
    %v1864 = vsel %vm423, %v1857, 0
    %v1867 = vsel %vm423, %v1858, 0
    %1869 = vmatpush.msra.mxu0 0.0
    %1870 = vmatpush.msra.mxu0 0.0
    %1871 = vmatpush.msra.mxu0 0.0
    %1872 = vmatpush.msra.mxu0 0.0
    %1873 = vmatpush.msra.mxu0 0.0
    %1874 = vmatpush.msra.mxu0 0.0
    %1875 = vmatpush.msra.mxu0 0.0
    %1876 = vmatpush.msra.mxu0 0.0
    %1877 = vmatpush.msra.mxu0 0.0
    %1878 = vmatpush.msra.mxu0 0.0
    %1879 = vmatpush.msra.mxu0 0.0
    %1880 = vmatpush.msra.mxu0 0.0
    %1881 = vmatpush.msra.mxu0 %v1862
    %1882 = vmatpush.msra.mxu0 %v1861
    %1883 = vmatpush.msra.mxu0 %v1860
    %1884 = vmatpush.msra.mxu0 %v1859
    %1885 = vmatmul.f32.gmra.mxu0 %v1864
    %v1886 = vpop.f32.mrf.mxu0
    %v1887 = vadd.f32 0.0, %v1886
    %1888 = vmatmul.f32.gmra.mxu0 %v1867
    %v1889 = vpop.f32.mrf.mxu0
    %v1890 = vadd.f32 0.0, %v1889
    %1891 = vdwg.mxu0
    %v1892 = vadd.f32 %v1151, %v1887
    %v1893 = vadd.f32 %v1152, %v1890
    %v1894 = vld [vmem:[#allocation13] sm:$0x1]
    %v1896 = vperm.slane %v1894, 0
    %v1898 = vadd.f32 %v1892, %v1896
    %v1899 = vadd.f32 %v1893, %v1896
    %s1900 = sld [smem:[#allocation2 + $0x100]]
    %s1901 = sld [smem:[#allocation2 + $0x101]]
    %v1902 = vsel %vm423, %v1898, 0.0
    %1903 = vadd.xlane.f32.xlu0 %v1902
    %v1904 = vpop.xlane.xlu0 %1903
    %v1905 = vsel %vm423, %v1899, 0.0
    %1906 = vadd.xlane.f32.xlu0 %v1905
    %v1907 = vpop.xlane.xlu0 %1906
    %v1908 = vmul.f32 %v1904, %v436
    %v1909 = vmul.f32 %v1907, %v436
    %v1910 = vsub.f32 %v1898, %v1908
    %v1911 = vsub.f32 %v1899, %v1909
    %v1912 = vmul.f32 %v1910, %v1910
    %v1913 = vmul.f32 %v1911, %v1911
    %v1914 = vsel %vm423, %v1912, 0.0
    %1915 = vadd.xlane.f32.xlu0 %v1914
    %v1916 = vpop.xlane.xlu0 %1915
    %v1917 = vsel %vm423, %v1913, 0.0
    %1918 = vadd.xlane.f32.xlu0 %v1917
    %v1919 = vpop.xlane.xlu0 %1918
    %v1920 = vmul.f32 %v1916, %v455
    %v1921 = vmul.f32 %v1919, %v455
    %v1922 = vstv %s1900
    %v1923 = vmul.f32 %v1922, %v1910
    %v1924 = vmul.f32 %v1922, %v1911
    %v1925 = vrsqrt.pop %v1920
    %v1926 = vmul.f32 %v1925, %v1920
    %v1927 = vmul.f32 %v1926, %v1925
    %v1928 = vmul.f32 0.5, %v1927
    %v1929 = vsub.f32 1.5, %v1928
    %v1930 = vmul.f32 %v1925, %v1929
    %v1931 = vmul.f32 %v1920, %v1930
    %vm1932 = vcmp.eq.f32.partialorder %v1920, inf
    %v1933 = vsel %vm1932, %v1920, %v1931
    %vm1934 = vcmp.eq.f32.partialorder %v1920, 0.0
    %v1935 = vand.u32 %v1920, 2147483648
    %v1936 = vsel %vm1934, %v1935, %v1933
    %v1937 = vrsqrt.pop %v1921
    %v1938 = vmul.f32 %v1937, %v1921
    %v1939 = vmul.f32 %v1938, %v1937
    %v1940 = vmul.f32 0.5, %v1939
    %v1941 = vsub.f32 1.5, %v1940
    %v1942 = vmul.f32 %v1937, %v1941
    %v1943 = vmul.f32 %v1921, %v1942
    %vm1944 = vcmp.eq.f32.partialorder %v1921, inf
    %v1945 = vsel %vm1944, %v1921, %v1943
    %vm1946 = vcmp.eq.f32.partialorder %v1921, 0.0
    %v1947 = vand.u32 %v1921, 2147483648
    %v1948 = vsel %vm1946, %v1947, %v1945
    %v1949 = vadd.f32 %v1936, 1e-06
    %v1950 = vadd.f32 %v1948, 1e-06
    %v1951 = vrcp.pop %v1949
    %v1952 = vmul.f32 %v1949, %v1951
    %v1953 = vsub.f32 1.0, %v1952
    %v1954 = vmul.f32 %v1951, %v1953
    %v1955 = vadd.f32 %v1951, %v1954
    %vm1956 = vweird.f32 %v1949
    %vm1957 = vweird.f32 %v1951
    %vm1958 = vmor %vm1956, %vm1957
    %v1959 = vsel %vm1958, %v1951, %v1955
    %v1960 = vand.u32 2147483647, %v1949
    %vm1961 = vcmp.eq.f32.partialorder %v1960, 8.507059e+37
    %v1962 = vand.u32 %v1949, 2147483648
    %v1963 = vor.u32 1.1754944e-38, %v1962
    %v1964 = vsel %vm1961, %v1963, %v1959
    %v1965 = vmul.f32 %v1923, %v1964
    %v1966 = vrcp.pop %v1950
    %v1967 = vmul.f32 %v1950, %v1966
    %v1968 = vsub.f32 1.0, %v1967
    %v1969 = vmul.f32 %v1966, %v1968
    %v1970 = vadd.f32 %v1966, %v1969
    %vm1971 = vweird.f32 %v1950
    %vm1972 = vweird.f32 %v1966
    %vm1973 = vmor %vm1971, %vm1972
    %v1974 = vsel %vm1973, %v1966, %v1970
    %v1975 = vand.u32 2147483647, %v1950
    %vm1976 = vcmp.eq.f32.partialorder %v1975, 8.507059e+37
    %v1977 = vand.u32 %v1950, 2147483648
    %v1978 = vor.u32 1.1754944e-38, %v1977
    %v1979 = vsel %vm1976, %v1978, %v1974
    %v1980 = vmul.f32 %v1924, %v1979
    %v1981 = vstv %s1901
    %v1982 = vadd.f32 %v1965, %v1981
    %v1983 = vadd.f32 %v1980, %v1981
    %v1984 = vld [vmem:[#allocation15] sm:$0xff]
    %v1985 = vld [vmem:[#allocation15 + $0x8] sm:$0xff]
    %v1986 = vld [vmem:[#allocation15 + $0x10] sm:$0xff]
    %v1987 = vld [vmem:[#allocation15 + $0x18] sm:$0xff]
    %v1988 = vld [vmem:[#allocation16] sm:$0x1]
    %v1990 = vperm.slane %v1988, 0
    %v1993 = vsel %vm423, %v1982, 0
    %v1996 = vsel %vm423, %v1983, 0
    %1998 = vmatpush.msra.mxu0 0.0
    %1999 = vmatpush.msra.mxu0 0.0
    %2000 = vmatpush.msra.mxu0 0.0
    %2001 = vmatpush.msra.mxu0 0.0
    %2002 = vmatpush.msra.mxu0 0.0
    %2003 = vmatpush.msra.mxu0 0.0
    %2004 = vmatpush.msra.mxu0 0.0
    %2005 = vmatpush.msra.mxu0 0.0
    %2006 = vmatpush.msra.mxu0 0.0
    %2007 = vmatpush.msra.mxu0 0.0
    %2008 = vmatpush.msra.mxu0 0.0
    %2009 = vmatpush.msra.mxu0 0.0
    %2010 = vmatpush.msra.mxu0 %v1987
    %2011 = vmatpush.msra.mxu0 %v1986
    %2012 = vmatpush.msra.mxu0 %v1985
    %2013 = vmatpush.msra.mxu0 %v1984
    %2014 = vmatmul.f32.gmra.mxu0 %v1993
    %v2015 = vpop.f32.mrf.mxu0
    %v2016 = vadd.f32 %v1990, %v2015
    %2017 = vmatmul.f32.gmra.mxu0 %v1996
    %v2018 = vpop.f32.mrf.mxu0
    %v2019 = vadd.f32 %v1990, %v2018
    %2020 = vdwg.mxu0
    %v2021 = vmax.f32 %v2016, 0.0
    %v2022 = vmax.f32 %v2019, 0.0
    %v2023 = vld [vmem:[%s31] sm:$0xff]
    %v2024 = vld [vmem:[%s31 + $0x8] sm:$0xff]
    %v2025 = vld [vmem:[%s31 + $0x10] sm:$0xff]
    %v2026 = vld [vmem:[%s31 + $0x18] sm:$0xff]
    %v2027 = vld [vmem:[%s31 + $0x20] sm:$0xff]
    %v2028 = vld [vmem:[%s31 + $0x28] sm:$0xff]
    %v2029 = vld [vmem:[%s31 + $0x30] sm:$0xff]
    %v2030 = vld [vmem:[%s31 + $0x38] sm:$0xff]
    %vm2031 = vcmask 523264
    %v2033 = vsel %vm2031, %v2021, 0
    %v2036 = vsel %vm2031, %v2022, 0
    %2038 = vmatpush.msra.mxu0 0.0
    %2039 = vmatpush.msra.mxu0 0.0
    %2040 = vmatpush.msra.mxu0 0.0
    %2041 = vmatpush.msra.mxu0 0.0
    %2042 = vmatpush.msra.mxu0 0.0
    %2043 = vmatpush.msra.mxu0 0.0
    %2044 = vmatpush.msra.mxu0 0.0
    %2045 = vmatpush.msra.mxu0 0.0
    %2046 = vmatpush.msra.mxu0 %v2030
    %2047 = vmatpush.msra.mxu0 %v2029
    %2048 = vmatpush.msra.mxu0 %v2028
    %2049 = vmatpush.msra.mxu0 %v2027
    %2050 = vmatpush.msra.mxu0 %v2026
    %2051 = vmatpush.msra.mxu0 %v2025
    %2052 = vmatpush.msra.mxu0 %v2024
    %2053 = vmatpush.msra.mxu0 %v2023
    %2054 = vmatmul.f32.gmra.mxu0 %v2033
    %v2055 = vpop.f32.mrf.mxu0
    %v2056 = vadd.f32 0.0, %v2055
    %2057 = vmatmul.f32.gmra.mxu0 %v2036
    %v2058 = vpop.f32.mrf.mxu0
    %v2059 = vadd.f32 0.0, %v2058
    %2060 = vdwg.mxu0
    %v2061 = vadd.f32 %v1898, %v2056
    %v2062 = vadd.f32 %v1899, %v2059
    %v2063 = vld [vmem:[#allocation18] sm:$0x1]
    %v2065 = vperm.slane %v2063, 0
    %v2067 = vadd.f32 %v2061, %v2065
    %v2068 = vadd.f32 %v2062, %v2065
    %s2069 = sld [smem:[#allocation2 + $0x180]]
    %s2070 = sld [smem:[#allocation2 + $0x181]]
    %v2071 = vsel %vm423, %v2067, 0.0
    %2072 = vadd.xlane.f32.xlu0 %v2071
    %v2073 = vpop.xlane.xlu0 %2072
    %v2074 = vsel %vm423, %v2068, 0.0
    %2075 = vadd.xlane.f32.xlu0 %v2074
    %v2076 = vpop.xlane.xlu0 %2075
    %v2077 = vmul.f32 %v2073, %v436
    %v2078 = vmul.f32 %v2076, %v436
    %v2079 = vsub.f32 %v2067, %v2077
    %v2080 = vsub.f32 %v2068, %v2078
    %v2081 = vmul.f32 %v2079, %v2079
    %v2082 = vmul.f32 %v2080, %v2080
    %v2083 = vsel %vm423, %v2081, 0.0
    %2084 = vadd.xlane.f32.xlu0 %v2083
    %v2085 = vpop.xlane.xlu0 %2084
    %v2086 = vsel %vm423, %v2082, 0.0
    %2087 = vadd.xlane.f32.xlu0 %v2086
    %v2088 = vpop.xlane.xlu0 %2087
    %v2089 = vmul.f32 %v2085, %v455
    %v2090 = vmul.f32 %v2088, %v455
    %v2091 = vstv %s2069
    %v2092 = vmul.f32 %v2091, %v2079
    %v2093 = vmul.f32 %v2091, %v2080
    %v2094 = vrsqrt.pop %v2089
    %v2095 = vmul.f32 %v2094, %v2089
    %v2096 = vmul.f32 %v2095, %v2094
    %v2097 = vmul.f32 0.5, %v2096
    %v2098 = vsub.f32 1.5, %v2097
    %v2099 = vmul.f32 %v2094, %v2098
    %v2100 = vmul.f32 %v2089, %v2099
    %vm2101 = vcmp.eq.f32.partialorder %v2089, inf
    %v2102 = vsel %vm2101, %v2089, %v2100
    %vm2103 = vcmp.eq.f32.partialorder %v2089, 0.0
    %v2104 = vand.u32 %v2089, 2147483648
    %v2105 = vsel %vm2103, %v2104, %v2102
    %v2106 = vrsqrt.pop %v2090
    %v2107 = vmul.f32 %v2106, %v2090
    %v2108 = vmul.f32 %v2107, %v2106
    %v2109 = vmul.f32 0.5, %v2108
    %v2110 = vsub.f32 1.5, %v2109
    %v2111 = vmul.f32 %v2106, %v2110
    %v2112 = vmul.f32 %v2090, %v2111
    %vm2113 = vcmp.eq.f32.partialorder %v2090, inf
    %v2114 = vsel %vm2113, %v2090, %v2112
    %vm2115 = vcmp.eq.f32.partialorder %v2090, 0.0
    %v2116 = vand.u32 %v2090, 2147483648
    %v2117 = vsel %vm2115, %v2116, %v2114
    %v2118 = vadd.f32 %v2105, 1e-06
    %v2119 = vadd.f32 %v2117, 1e-06
    %v2120 = vrcp.pop %v2118
    %v2121 = vmul.f32 %v2118, %v2120
    %v2122 = vsub.f32 1.0, %v2121
    %v2123 = vmul.f32 %v2120, %v2122
    %v2124 = vadd.f32 %v2120, %v2123
    %vm2125 = vweird.f32 %v2118
    %vm2126 = vweird.f32 %v2120
    %vm2127 = vmor %vm2125, %vm2126
    %v2128 = vsel %vm2127, %v2120, %v2124
    %v2129 = vand.u32 2147483647, %v2118
    %vm2130 = vcmp.eq.f32.partialorder %v2129, 8.507059e+37
    %v2131 = vand.u32 %v2118, 2147483648
    %v2132 = vor.u32 1.1754944e-38, %v2131
    %v2133 = vsel %vm2130, %v2132, %v2128
    %v2134 = vmul.f32 %v2092, %v2133
    %v2135 = vrcp.pop %v2119
    %v2136 = vmul.f32 %v2119, %v2135
    %v2137 = vsub.f32 1.0, %v2136
    %v2138 = vmul.f32 %v2135, %v2137
    %v2139 = vadd.f32 %v2135, %v2138
    %vm2140 = vweird.f32 %v2119
    %vm2141 = vweird.f32 %v2135
    %vm2142 = vmor %vm2140, %vm2141
    %v2143 = vsel %vm2142, %v2135, %v2139
    %v2144 = vand.u32 2147483647, %v2119
    %vm2145 = vcmp.eq.f32.partialorder %v2144, 8.507059e+37
    %v2146 = vand.u32 %v2119, 2147483648
    %v2147 = vor.u32 1.1754944e-38, %v2146
    %v2148 = vsel %vm2145, %v2147, %v2143
    %v2149 = vmul.f32 %v2093, %v2148
    %v2150 = vstv %s2070
    %v2151 = vadd.f32 %v2134, %v2150
    %v2152 = vadd.f32 %v2149, %v2150
    %v2153 = vld [vmem:[#allocation19] sm:$0xff]
    %v2154 = vld [vmem:[#allocation19 + $0x8] sm:$0xff]
    %v2155 = vld [vmem:[#allocation19 + $0x10] sm:$0xff]
    %v2156 = vld [vmem:[#allocation19 + $0x18] sm:$0xff]
    %v2157 = vld [vmem:[#allocation21] sm:$0x1]
    %v2159 = vperm.slane %v2157, 0
    %v2162 = vsel %vm423, %v2151, 0
    %v2165 = vsel %vm423, %v2152, 0
    %2167 = vmatpush.msra.mxu0 0.0
    %2168 = vmatpush.msra.mxu0 0.0
    %2169 = vmatpush.msra.mxu0 0.0
    %2170 = vmatpush.msra.mxu0 0.0
    %2171 = vmatpush.msra.mxu0 0.0
    %2172 = vmatpush.msra.mxu0 0.0
    %2173 = vmatpush.msra.mxu0 0.0
    %2174 = vmatpush.msra.mxu0 0.0
    %2175 = vmatpush.msra.mxu0 0.0
    %2176 = vmatpush.msra.mxu0 0.0
    %2177 = vmatpush.msra.mxu0 0.0
    %2178 = vmatpush.msra.mxu0 0.0
    %2179 = vmatpush.msra.mxu0 %v2156
    %2180 = vmatpush.msra.mxu0 %v2155
    %2181 = vmatpush.msra.mxu0 %v2154
    %2182 = vmatpush.msra.mxu0 %v2153
    %2183 = vmatmul.f32.gmra.mxu0 %v2162
    %v2184 = vpop.f32.mrf.mxu0
    %v2185 = vadd.f32 %v2159, %v2184
    %2186 = vmatmul.f32.gmra.mxu0 %v2165
    %v2187 = vpop.f32.mrf.mxu0
    %v2188 = vadd.f32 %v2159, %v2187
    %2189 = vdwg.mxu0
    %v2190 = vmul.f32 %v2185, 0.35355338
    %v2191 = vmul.f32 %v2188, 0.35355338
    %2193 = vrot.lane.b32.xlu0 %v2185, 96
    %v2194 = vpop.permute.xlu0 %2193
    %v2196 = vsel %vm562, %v2190, 0
    %v2198 = vsel %vm562, %v2194, 0
    %2200 = vmatpush.xpose.msra.mxu0 0.0
    %2201 = vmatpush.xpose.msra.mxu0 0.0
    %2202 = vmatpush.xpose.msra.mxu0 0.0
    %2203 = vmatpush.xpose.msra.mxu0 0.0
    %2204 = vmatpush.xpose.msra.mxu0 0.0
    %2205 = vmatpush.xpose.msra.mxu0 0.0
    %2206 = vmatpush.xpose.msra.mxu0 0.0
    %2207 = vmatpush.xpose.msra.mxu0 0.0
    %2208 = vmatpush.xpose.msra.mxu0 0.0
    %2209 = vmatpush.xpose.msra.mxu0 0.0
    %2210 = vmatpush.xpose.msra.mxu0 0.0
    %2211 = vmatpush.xpose.msra.mxu0 0.0
    %2212 = vmatpush.xpose.msra.mxu0 0.0
    %2213 = vmatpush.xpose.msra.mxu0 0.0
    %2214 = vmatpush.xpose.msra.mxu0 0.0
    %2215 = vmatpush.xpose.msra.mxu0 %v2198
    %2216 = vmatmul.f32.gmra.mxu0 %v2196
    %v2217 = vpop.f32.mrf.mxu0
    %v2218 = vadd.f32 0.0, %v2217
    %2219 = vdwg.mxu0
    %2221 = vrot.lane.b32.xlu0 %v2188, 96
    %v2222 = vpop.permute.xlu0 %2221
    %v2224 = vsel %vm562, %v2191, 0
    %v2226 = vsel %vm562, %v2222, 0
    %2228 = vmatpush.xpose.msra.mxu0 0.0
    %2229 = vmatpush.xpose.msra.mxu0 0.0
    %2230 = vmatpush.xpose.msra.mxu0 0.0
    %2231 = vmatpush.xpose.msra.mxu0 0.0
    %2232 = vmatpush.xpose.msra.mxu0 0.0
    %2233 = vmatpush.xpose.msra.mxu0 0.0
    %2234 = vmatpush.xpose.msra.mxu0 0.0
    %2235 = vmatpush.xpose.msra.mxu0 0.0
    %2236 = vmatpush.xpose.msra.mxu0 0.0
    %2237 = vmatpush.xpose.msra.mxu0 0.0
    %2238 = vmatpush.xpose.msra.mxu0 0.0
    %2239 = vmatpush.xpose.msra.mxu0 0.0
    %2240 = vmatpush.xpose.msra.mxu0 0.0
    %2241 = vmatpush.xpose.msra.mxu0 0.0
    %2242 = vmatpush.xpose.msra.mxu0 0.0
    %2243 = vmatpush.xpose.msra.mxu0 %v2226
    %2244 = vmatmul.f32.gmra.mxu0 %v2224
    %v2245 = vpop.f32.mrf.mxu0
    %v2246 = vadd.f32 0.0, %v2245
    %2247 = vdwg.mxu0
    %v2248 = vsel %vm562, %v2218, -inf
    %2249 = vmax.xlane.f32.xlu0 %v2248
    %v2250 = vpop.xlane.xlu0 %2249
    %v2251 = vsel %vm562, %v2246, -inf
    %2252 = vmax.xlane.f32.xlu0 %v2251
    %v2253 = vpop.xlane.xlu0 %2252
    %v2254 = vsub.f32 %v2218, %v2250
    %v2255 = vsub.f32 %v2246, %v2253
    %v2256 = vmul.f32 %v2254, 1.442695
    %v2257 = vpow.pop %v2256
    %v2258 = vmul.f32 %v2255, 1.442695
    %v2259 = vpow.pop %v2258
    %v2260 = vsel %vm562, %v2257, 0.0
    %2261 = vadd.xlane.f32.xlu0 %v2260
    %v2262 = vpop.xlane.xlu0 %2261
    %v2263 = vsel %vm562, %v2259, 0.0
    %2264 = vadd.xlane.f32.xlu0 %v2263
    %v2265 = vpop.xlane.xlu0 %2264
    %v2266 = vrcp.pop %v2262
    %v2267 = vrcp.pop %v2265
    %v2268 = vmul.f32 %v2257, %v2266
    %v2269 = vmul.f32 %v2259, %v2267
    %2270 = vrot.lane.b32.xlu0 %v2185, 64
    %v2271 = vpop.permute.xlu0 %2270
    %v2274 = vsel %vm562, %v2268, 0
    %2276 = vmatpush.msra.mxu0 0.0
    %2277 = vmatpush.msra.mxu0 0.0
    %2278 = vmatpush.msra.mxu0 0.0
    %2279 = vmatpush.msra.mxu0 0.0
    %2280 = vmatpush.msra.mxu0 0.0
    %2281 = vmatpush.msra.mxu0 0.0
    %2282 = vmatpush.msra.mxu0 0.0
    %2283 = vmatpush.msra.mxu0 0.0
    %2284 = vmatpush.msra.mxu0 0.0
    %2285 = vmatpush.msra.mxu0 0.0
    %2286 = vmatpush.msra.mxu0 0.0
    %2287 = vmatpush.msra.mxu0 0.0
    %2288 = vmatpush.msra.mxu0 0.0
    %2289 = vmatpush.msra.mxu0 0.0
    %2290 = vmatpush.msra.mxu0 0.0
    %2291 = vmatpush.msra.mxu0 %v2271
    %2292 = vmatmul.f32.gmra.mxu0 %v2274
    %v2293 = vpop.f32.mrf.mxu0
    %v2294 = vadd.f32 0.0, %v2293
    %2295 = vdwg.mxu0
    %2296 = vrot.lane.b32.xlu0 %v2188, 64
    %v2297 = vpop.permute.xlu0 %2296
    %v2300 = vsel %vm562, %v2269, 0
    %2302 = vmatpush.msra.mxu0 0.0
    %2303 = vmatpush.msra.mxu0 0.0
    %2304 = vmatpush.msra.mxu0 0.0
    %2305 = vmatpush.msra.mxu0 0.0
    %2306 = vmatpush.msra.mxu0 0.0
    %2307 = vmatpush.msra.mxu0 0.0
    %2308 = vmatpush.msra.mxu0 0.0
    %2309 = vmatpush.msra.mxu0 0.0
    %2310 = vmatpush.msra.mxu0 0.0
    %2311 = vmatpush.msra.mxu0 0.0
    %2312 = vmatpush.msra.mxu0 0.0
    %2313 = vmatpush.msra.mxu0 0.0
    %2314 = vmatpush.msra.mxu0 0.0
    %2315 = vmatpush.msra.mxu0 0.0
    %2316 = vmatpush.msra.mxu0 0.0
    %2317 = vmatpush.msra.mxu0 %v2297
    %2318 = vmatmul.f32.gmra.mxu0 %v2300
    %v2319 = vpop.f32.mrf.mxu0
    %v2320 = vadd.f32 0.0, %v2319
    %2321 = vdwg.mxu0
    %2322 = vrot.lane.b32.xlu0 %v2190, 120
    %v2323 = vpop.permute.xlu0 %2322
    %2324 = vrot.lane.b32.xlu0 %v2185, 88
    %v2325 = vpop.permute.xlu0 %2324
    %v2326 = vsel %vm562, %v2323, 0
    %v2328 = vsel %vm562, %v2325, 0
    %2330 = vmatpush.xpose.msra.mxu0 0.0
    %2331 = vmatpush.xpose.msra.mxu0 0.0
    %2332 = vmatpush.xpose.msra.mxu0 0.0
    %2333 = vmatpush.xpose.msra.mxu0 0.0
    %2334 = vmatpush.xpose.msra.mxu0 0.0
    %2335 = vmatpush.xpose.msra.mxu0 0.0
    %2336 = vmatpush.xpose.msra.mxu0 0.0
    %2337 = vmatpush.xpose.msra.mxu0 0.0
    %2338 = vmatpush.xpose.msra.mxu0 0.0
    %2339 = vmatpush.xpose.msra.mxu0 0.0
    %2340 = vmatpush.xpose.msra.mxu0 0.0
    %2341 = vmatpush.xpose.msra.mxu0 0.0
    %2342 = vmatpush.xpose.msra.mxu0 0.0
    %2343 = vmatpush.xpose.msra.mxu0 0.0
    %2344 = vmatpush.xpose.msra.mxu0 0.0
    %2345 = vmatpush.xpose.msra.mxu0 %v2328
    %2346 = vmatmul.f32.gmra.mxu0 %v2326
    %v2347 = vpop.f32.mrf.mxu0
    %v2348 = vadd.f32 0.0, %v2347
    %2349 = vdwg.mxu0
    %2350 = vrot.lane.b32.xlu0 %v2191, 120
    %v2351 = vpop.permute.xlu0 %2350
    %2352 = vrot.lane.b32.xlu0 %v2188, 88
    %v2353 = vpop.permute.xlu0 %2352
    %v2354 = vsel %vm562, %v2351, 0
    %v2356 = vsel %vm562, %v2353, 0
    %2358 = vmatpush.xpose.msra.mxu0 0.0
    %2359 = vmatpush.xpose.msra.mxu0 0.0
    %2360 = vmatpush.xpose.msra.mxu0 0.0
    %2361 = vmatpush.xpose.msra.mxu0 0.0
    %2362 = vmatpush.xpose.msra.mxu0 0.0
    %2363 = vmatpush.xpose.msra.mxu0 0.0
    %2364 = vmatpush.xpose.msra.mxu0 0.0
    %2365 = vmatpush.xpose.msra.mxu0 0.0
    %2366 = vmatpush.xpose.msra.mxu0 0.0
    %2367 = vmatpush.xpose.msra.mxu0 0.0
    %2368 = vmatpush.xpose.msra.mxu0 0.0
    %2369 = vmatpush.xpose.msra.mxu0 0.0
    %2370 = vmatpush.xpose.msra.mxu0 0.0
    %2371 = vmatpush.xpose.msra.mxu0 0.0
    %2372 = vmatpush.xpose.msra.mxu0 0.0
    %2373 = vmatpush.xpose.msra.mxu0 %v2356
    %2374 = vmatmul.f32.gmra.mxu0 %v2354
    %v2375 = vpop.f32.mrf.mxu0
    %v2376 = vadd.f32 0.0, %v2375
    %2377 = vdwg.mxu0
    %v2378 = vsel %vm562, %v2348, -inf
    %2379 = vmax.xlane.f32.xlu0 %v2378
    %v2380 = vpop.xlane.xlu0 %2379
    %v2381 = vsel %vm562, %v2376, -inf
    %2382 = vmax.xlane.f32.xlu0 %v2381
    %v2383 = vpop.xlane.xlu0 %2382
    %v2384 = vsub.f32 %v2348, %v2380
    %v2385 = vsub.f32 %v2376, %v2383
    %v2386 = vmul.f32 %v2384, 1.442695
    %v2387 = vpow.pop %v2386
    %v2388 = vmul.f32 %v2385, 1.442695
    %v2389 = vpow.pop %v2388
    %v2390 = vsel %vm562, %v2387, 0.0
    %2391 = vadd.xlane.f32.xlu0 %v2390
    %v2392 = vpop.xlane.xlu0 %2391
    %v2393 = vsel %vm562, %v2389, 0.0
    %2394 = vadd.xlane.f32.xlu0 %v2393
    %v2395 = vpop.xlane.xlu0 %2394
    %v2396 = vrcp.pop %v2392
    %v2397 = vrcp.pop %v2395
    %v2398 = vmul.f32 %v2387, %v2396
    %v2399 = vmul.f32 %v2389, %v2397
    %2400 = vrot.lane.b32.xlu0 %v2185, 56
    %v2401 = vpop.permute.xlu0 %2400
    %v2404 = vsel %vm562, %v2398, 0
    %2406 = vmatpush.msra.mxu0 0.0
    %2407 = vmatpush.msra.mxu0 0.0
    %2408 = vmatpush.msra.mxu0 0.0
    %2409 = vmatpush.msra.mxu0 0.0
    %2410 = vmatpush.msra.mxu0 0.0
    %2411 = vmatpush.msra.mxu0 0.0
    %2412 = vmatpush.msra.mxu0 0.0
    %2413 = vmatpush.msra.mxu0 0.0
    %2414 = vmatpush.msra.mxu0 0.0
    %2415 = vmatpush.msra.mxu0 0.0
    %2416 = vmatpush.msra.mxu0 0.0
    %2417 = vmatpush.msra.mxu0 0.0
    %2418 = vmatpush.msra.mxu0 0.0
    %2419 = vmatpush.msra.mxu0 0.0
    %2420 = vmatpush.msra.mxu0 0.0
    %2421 = vmatpush.msra.mxu0 %v2401
    %2422 = vmatmul.f32.gmra.mxu0 %v2404
    %v2423 = vpop.f32.mrf.mxu0
    %v2424 = vadd.f32 0.0, %v2423
    %2425 = vdwg.mxu0
    %2426 = vrot.lane.b32.xlu0 %v2188, 56
    %v2427 = vpop.permute.xlu0 %2426
    %v2430 = vsel %vm562, %v2399, 0
    %2432 = vmatpush.msra.mxu0 0.0
    %2433 = vmatpush.msra.mxu0 0.0
    %2434 = vmatpush.msra.mxu0 0.0
    %2435 = vmatpush.msra.mxu0 0.0
    %2436 = vmatpush.msra.mxu0 0.0
    %2437 = vmatpush.msra.mxu0 0.0
    %2438 = vmatpush.msra.mxu0 0.0
    %2439 = vmatpush.msra.mxu0 0.0
    %2440 = vmatpush.msra.mxu0 0.0
    %2441 = vmatpush.msra.mxu0 0.0
    %2442 = vmatpush.msra.mxu0 0.0
    %2443 = vmatpush.msra.mxu0 0.0
    %2444 = vmatpush.msra.mxu0 0.0
    %2445 = vmatpush.msra.mxu0 0.0
    %2446 = vmatpush.msra.mxu0 0.0
    %2447 = vmatpush.msra.mxu0 %v2427
    %2448 = vmatmul.f32.gmra.mxu0 %v2430
    %v2449 = vpop.f32.mrf.mxu0
    %v2450 = vadd.f32 0.0, %v2449
    %2451 = vdwg.mxu0
    %2452 = vrot.lane.b32.xlu0 %v2190, 112
    %v2453 = vpop.permute.xlu0 %2452
    %2454 = vrot.lane.b32.xlu0 %v2185, 80
    %v2455 = vpop.permute.xlu0 %2454
    %v2456 = vsel %vm562, %v2453, 0
    %v2458 = vsel %vm562, %v2455, 0
    %2460 = vmatpush.xpose.msra.mxu0 0.0
    %2461 = vmatpush.xpose.msra.mxu0 0.0
    %2462 = vmatpush.xpose.msra.mxu0 0.0
    %2463 = vmatpush.xpose.msra.mxu0 0.0
    %2464 = vmatpush.xpose.msra.mxu0 0.0
    %2465 = vmatpush.xpose.msra.mxu0 0.0
    %2466 = vmatpush.xpose.msra.mxu0 0.0
    %2467 = vmatpush.xpose.msra.mxu0 0.0
    %2468 = vmatpush.xpose.msra.mxu0 0.0
    %2469 = vmatpush.xpose.msra.mxu0 0.0
    %2470 = vmatpush.xpose.msra.mxu0 0.0
    %2471 = vmatpush.xpose.msra.mxu0 0.0
    %2472 = vmatpush.xpose.msra.mxu0 0.0
    %2473 = vmatpush.xpose.msra.mxu0 0.0
    %2474 = vmatpush.xpose.msra.mxu0 0.0
    %2475 = vmatpush.xpose.msra.mxu0 %v2458
    %2476 = vmatmul.f32.gmra.mxu0 %v2456
    %v2477 = vpop.f32.mrf.mxu0
    %v2478 = vadd.f32 0.0, %v2477
    %2479 = vdwg.mxu0
    %2480 = vrot.lane.b32.xlu0 %v2191, 112
    %v2481 = vpop.permute.xlu0 %2480
    %2482 = vrot.lane.b32.xlu0 %v2188, 80
    %v2483 = vpop.permute.xlu0 %2482
    %v2484 = vsel %vm562, %v2481, 0
    %v2486 = vsel %vm562, %v2483, 0
    %2488 = vmatpush.xpose.msra.mxu0 0.0
    %2489 = vmatpush.xpose.msra.mxu0 0.0
    %2490 = vmatpush.xpose.msra.mxu0 0.0
    %2491 = vmatpush.xpose.msra.mxu0 0.0
    %2492 = vmatpush.xpose.msra.mxu0 0.0
    %2493 = vmatpush.xpose.msra.mxu0 0.0
    %2494 = vmatpush.xpose.msra.mxu0 0.0
    %2495 = vmatpush.xpose.msra.mxu0 0.0
    %2496 = vmatpush.xpose.msra.mxu0 0.0
    %2497 = vmatpush.xpose.msra.mxu0 0.0
    %2498 = vmatpush.xpose.msra.mxu0 0.0
    %2499 = vmatpush.xpose.msra.mxu0 0.0
    %2500 = vmatpush.xpose.msra.mxu0 0.0
    %2501 = vmatpush.xpose.msra.mxu0 0.0
    %2502 = vmatpush.xpose.msra.mxu0 0.0
    %2503 = vmatpush.xpose.msra.mxu0 %v2486
    %2504 = vmatmul.f32.gmra.mxu0 %v2484
    %v2505 = vpop.f32.mrf.mxu0
    %v2506 = vadd.f32 0.0, %v2505
    %2507 = vdwg.mxu0
    %v2508 = vsel %vm562, %v2478, -inf
    %2509 = vmax.xlane.f32.xlu0 %v2508
    %v2510 = vpop.xlane.xlu0 %2509
    %v2511 = vsel %vm562, %v2506, -inf
    %2512 = vmax.xlane.f32.xlu0 %v2511
    %v2513 = vpop.xlane.xlu0 %2512
    %v2514 = vsub.f32 %v2478, %v2510
    %v2515 = vsub.f32 %v2506, %v2513
    %v2516 = vmul.f32 %v2514, 1.442695
    %v2517 = vpow.pop %v2516
    %v2518 = vmul.f32 %v2515, 1.442695
    %v2519 = vpow.pop %v2518
    %v2520 = vsel %vm562, %v2517, 0.0
    %2521 = vadd.xlane.f32.xlu0 %v2520
    %v2522 = vpop.xlane.xlu0 %2521
    %v2523 = vsel %vm562, %v2519, 0.0
    %2524 = vadd.xlane.f32.xlu0 %v2523
    %v2525 = vpop.xlane.xlu0 %2524
    %v2526 = vrcp.pop %v2522
    %v2527 = vrcp.pop %v2525
    %v2528 = vmul.f32 %v2517, %v2526
    %v2529 = vmul.f32 %v2519, %v2527
    %2530 = vrot.lane.b32.xlu0 %v2185, 48
    %v2531 = vpop.permute.xlu0 %2530
    %v2534 = vsel %vm562, %v2528, 0
    %2536 = vmatpush.msra.mxu0 0.0
    %2537 = vmatpush.msra.mxu0 0.0
    %2538 = vmatpush.msra.mxu0 0.0
    %2539 = vmatpush.msra.mxu0 0.0
    %2540 = vmatpush.msra.mxu0 0.0
    %2541 = vmatpush.msra.mxu0 0.0
    %2542 = vmatpush.msra.mxu0 0.0
    %2543 = vmatpush.msra.mxu0 0.0
    %2544 = vmatpush.msra.mxu0 0.0
    %2545 = vmatpush.msra.mxu0 0.0
    %2546 = vmatpush.msra.mxu0 0.0
    %2547 = vmatpush.msra.mxu0 0.0
    %2548 = vmatpush.msra.mxu0 0.0
    %2549 = vmatpush.msra.mxu0 0.0
    %2550 = vmatpush.msra.mxu0 0.0
    %2551 = vmatpush.msra.mxu0 %v2531
    %2552 = vmatmul.f32.gmra.mxu0 %v2534
    %v2553 = vpop.f32.mrf.mxu0
    %v2554 = vadd.f32 0.0, %v2553
    %2555 = vdwg.mxu0
    %2556 = vrot.lane.b32.xlu0 %v2188, 48
    %v2557 = vpop.permute.xlu0 %2556
    %v2560 = vsel %vm562, %v2529, 0
    %2562 = vmatpush.msra.mxu0 0.0
    %2563 = vmatpush.msra.mxu0 0.0
    %2564 = vmatpush.msra.mxu0 0.0
    %2565 = vmatpush.msra.mxu0 0.0
    %2566 = vmatpush.msra.mxu0 0.0
    %2567 = vmatpush.msra.mxu0 0.0
    %2568 = vmatpush.msra.mxu0 0.0
    %2569 = vmatpush.msra.mxu0 0.0
    %2570 = vmatpush.msra.mxu0 0.0
    %2571 = vmatpush.msra.mxu0 0.0
    %2572 = vmatpush.msra.mxu0 0.0
    %2573 = vmatpush.msra.mxu0 0.0
    %2574 = vmatpush.msra.mxu0 0.0
    %2575 = vmatpush.msra.mxu0 0.0
    %2576 = vmatpush.msra.mxu0 0.0
    %2577 = vmatpush.msra.mxu0 %v2557
    %2578 = vmatmul.f32.gmra.mxu0 %v2560
    %v2579 = vpop.f32.mrf.mxu0
    %v2580 = vadd.f32 0.0, %v2579
    %2581 = vdwg.mxu0
    %2582 = vrot.lane.b32.xlu0 %v2190, 104
    %v2583 = vpop.permute.xlu0 %2582
    %2584 = vrot.lane.b32.xlu0 %v2185, 72
    %v2585 = vpop.permute.xlu0 %2584
    %v2586 = vsel %vm562, %v2583, 0
    %v2588 = vsel %vm562, %v2585, 0
    %2590 = vmatpush.xpose.msra.mxu0 0.0
    %2591 = vmatpush.xpose.msra.mxu0 0.0
    %2592 = vmatpush.xpose.msra.mxu0 0.0
    %2593 = vmatpush.xpose.msra.mxu0 0.0
    %2594 = vmatpush.xpose.msra.mxu0 0.0
    %2595 = vmatpush.xpose.msra.mxu0 0.0
    %2596 = vmatpush.xpose.msra.mxu0 0.0
    %2597 = vmatpush.xpose.msra.mxu0 0.0
    %2598 = vmatpush.xpose.msra.mxu0 0.0
    %2599 = vmatpush.xpose.msra.mxu0 0.0
    %2600 = vmatpush.xpose.msra.mxu0 0.0
    %2601 = vmatpush.xpose.msra.mxu0 0.0
    %2602 = vmatpush.xpose.msra.mxu0 0.0
    %2603 = vmatpush.xpose.msra.mxu0 0.0
    %2604 = vmatpush.xpose.msra.mxu0 0.0
    %2605 = vmatpush.xpose.msra.mxu0 %v2588
    %2606 = vmatmul.f32.gmra.mxu0 %v2586
    %v2607 = vpop.f32.mrf.mxu0
    %v2608 = vadd.f32 0.0, %v2607
    %2609 = vdwg.mxu0
    %2610 = vrot.lane.b32.xlu0 %v2191, 104
    %v2611 = vpop.permute.xlu0 %2610
    %2612 = vrot.lane.b32.xlu0 %v2188, 72
    %v2613 = vpop.permute.xlu0 %2612
    %v2614 = vsel %vm562, %v2611, 0
    %v2616 = vsel %vm562, %v2613, 0
    %2618 = vmatpush.xpose.msra.mxu0 0.0
    %2619 = vmatpush.xpose.msra.mxu0 0.0
    %2620 = vmatpush.xpose.msra.mxu0 0.0
    %2621 = vmatpush.xpose.msra.mxu0 0.0
    %2622 = vmatpush.xpose.msra.mxu0 0.0
    %2623 = vmatpush.xpose.msra.mxu0 0.0
    %2624 = vmatpush.xpose.msra.mxu0 0.0
    %2625 = vmatpush.xpose.msra.mxu0 0.0
    %2626 = vmatpush.xpose.msra.mxu0 0.0
    %2627 = vmatpush.xpose.msra.mxu0 0.0
    %2628 = vmatpush.xpose.msra.mxu0 0.0
    %2629 = vmatpush.xpose.msra.mxu0 0.0
    %2630 = vmatpush.xpose.msra.mxu0 0.0
    %2631 = vmatpush.xpose.msra.mxu0 0.0
    %2632 = vmatpush.xpose.msra.mxu0 0.0
    %2633 = vmatpush.xpose.msra.mxu0 %v2616
    %2634 = vmatmul.f32.gmra.mxu0 %v2614
    %v2635 = vpop.f32.mrf.mxu0
    %v2636 = vadd.f32 0.0, %v2635
    %2637 = vdwg.mxu0
    %v2638 = vsel %vm562, %v2608, -inf
    %2639 = vmax.xlane.f32.xlu0 %v2638
    %v2640 = vpop.xlane.xlu0 %2639
    %v2641 = vsel %vm562, %v2636, -inf
    %2642 = vmax.xlane.f32.xlu0 %v2641
    %v2643 = vpop.xlane.xlu0 %2642
    %v2644 = vsub.f32 %v2608, %v2640
    %v2645 = vsub.f32 %v2636, %v2643
    %v2646 = vmul.f32 %v2644, 1.442695
    %v2647 = vpow.pop %v2646
    %v2648 = vmul.f32 %v2645, 1.442695
    %v2649 = vpow.pop %v2648
    %v2650 = vsel %vm562, %v2647, 0.0
    %2651 = vadd.xlane.f32.xlu0 %v2650
    %v2652 = vpop.xlane.xlu0 %2651
    %v2653 = vsel %vm562, %v2649, 0.0
    %2654 = vadd.xlane.f32.xlu0 %v2653
    %v2655 = vpop.xlane.xlu0 %2654
    %v2656 = vrcp.pop %v2652
    %v2657 = vrcp.pop %v2655
    %v2658 = vmul.f32 %v2647, %v2656
    %v2659 = vmul.f32 %v2649, %v2657
    %2660 = vrot.lane.b32.xlu0 %v2185, 40
    %v2661 = vpop.permute.xlu0 %2660
    %v2664 = vsel %vm562, %v2658, 0
    %2666 = vmatpush.msra.mxu0 0.0
    %2667 = vmatpush.msra.mxu0 0.0
    %2668 = vmatpush.msra.mxu0 0.0
    %2669 = vmatpush.msra.mxu0 0.0
    %2670 = vmatpush.msra.mxu0 0.0
    %2671 = vmatpush.msra.mxu0 0.0
    %2672 = vmatpush.msra.mxu0 0.0
    %2673 = vmatpush.msra.mxu0 0.0
    %2674 = vmatpush.msra.mxu0 0.0
    %2675 = vmatpush.msra.mxu0 0.0
    %2676 = vmatpush.msra.mxu0 0.0
    %2677 = vmatpush.msra.mxu0 0.0
    %2678 = vmatpush.msra.mxu0 0.0
    %2679 = vmatpush.msra.mxu0 0.0
    %2680 = vmatpush.msra.mxu0 0.0
    %2681 = vmatpush.msra.mxu0 %v2661
    %2682 = vmatmul.f32.gmra.mxu0 %v2664
    %v2683 = vpop.f32.mrf.mxu0
    %v2684 = vadd.f32 0.0, %v2683
    %2685 = vdwg.mxu0
    %2686 = vrot.lane.b32.xlu0 %v2188, 40
    %v2687 = vpop.permute.xlu0 %2686
    %v2690 = vsel %vm562, %v2659, 0
    %2692 = vmatpush.msra.mxu0 0.0
    %2693 = vmatpush.msra.mxu0 0.0
    %2694 = vmatpush.msra.mxu0 0.0
    %2695 = vmatpush.msra.mxu0 0.0
    %2696 = vmatpush.msra.mxu0 0.0
    %2697 = vmatpush.msra.mxu0 0.0
    %2698 = vmatpush.msra.mxu0 0.0
    %2699 = vmatpush.msra.mxu0 0.0
    %2700 = vmatpush.msra.mxu0 0.0
    %2701 = vmatpush.msra.mxu0 0.0
    %2702 = vmatpush.msra.mxu0 0.0
    %2703 = vmatpush.msra.mxu0 0.0
    %2704 = vmatpush.msra.mxu0 0.0
    %2705 = vmatpush.msra.mxu0 0.0
    %2706 = vmatpush.msra.mxu0 0.0
    %2707 = vmatpush.msra.mxu0 %v2687
    %2708 = vmatmul.f32.gmra.mxu0 %v2690
    %v2709 = vpop.f32.mrf.mxu0
    %v2710 = vadd.f32 0.0, %v2709
    %2711 = vdwg.mxu0
    %2714 = vrot.lane.b32.xlu0 %v2424, 8
    %v2715 = vpop.permute.xlu0 %2714
    %2716 = vrot.lane.b32.xlu0 %v2450, 8
    %v2717 = vpop.permute.xlu0 %2716
    %2722 = vrot.lane.b32.xlu0 %v2554, 16
    %v2723 = vpop.permute.xlu0 %2722
    %2724 = vrot.lane.b32.xlu0 %v2580, 16
    %v2725 = vpop.permute.xlu0 %2724
    %2730 = vrot.lane.b32.xlu0 %v2684, 24
    %v2731 = vpop.permute.xlu0 %2730
    %2732 = vrot.lane.b32.xlu0 %v2710, 24
    %v2733 = vpop.permute.xlu0 %2732
    %v2736 = vsel %vm562, %v2294, %v2715
    %v2737 = vsel %vm562, %v2320, %v2717
    %v2738 = vsel %vm1106, %v2736, %v2723
    %v2739 = vsel %vm1106, %v2737, %v2725
    %v2740 = vsel %vm1109, %v2738, %v2731
    %v2741 = vsel %vm1109, %v2739, %v2733
    %v2742 = vld [vmem:[#allocation22] sm:$0xff]
    %v2743 = vld [vmem:[#allocation22 + $0x8] sm:$0xff]
    %v2744 = vld [vmem:[#allocation22 + $0x10] sm:$0xff]
    %v2745 = vld [vmem:[#allocation22 + $0x18] sm:$0xff]
    %v2747 = vsel %vm423, %v2740, 0
    %v2750 = vsel %vm423, %v2741, 0
    %2752 = vmatpush.msra.mxu0 0.0
    %2753 = vmatpush.msra.mxu0 0.0
    %2754 = vmatpush.msra.mxu0 0.0
    %2755 = vmatpush.msra.mxu0 0.0
    %2756 = vmatpush.msra.mxu0 0.0
    %2757 = vmatpush.msra.mxu0 0.0
    %2758 = vmatpush.msra.mxu0 0.0
    %2759 = vmatpush.msra.mxu0 0.0
    %2760 = vmatpush.msra.mxu0 0.0
    %2761 = vmatpush.msra.mxu0 0.0
    %2762 = vmatpush.msra.mxu0 0.0
    %2763 = vmatpush.msra.mxu0 0.0
    %2764 = vmatpush.msra.mxu0 %v2745
    %2765 = vmatpush.msra.mxu0 %v2744
    %2766 = vmatpush.msra.mxu0 %v2743
    %2767 = vmatpush.msra.mxu0 %v2742
    %2768 = vmatmul.f32.gmra.mxu0 %v2747
    %v2769 = vpop.f32.mrf.mxu0
    %v2770 = vadd.f32 0.0, %v2769
    %2771 = vmatmul.f32.gmra.mxu0 %v2750
    %v2772 = vpop.f32.mrf.mxu0
    %v2773 = vadd.f32 0.0, %v2772
    %2774 = vdwg.mxu0
    %v2775 = vadd.f32 %v2067, %v2770
    %v2776 = vadd.f32 %v2068, %v2773
    %v2777 = vld [vmem:[#allocation24] sm:$0x1]
    %v2779 = vperm.slane %v2777, 0
    %v2781 = vadd.f32 %v2775, %v2779
    %v2782 = vadd.f32 %v2776, %v2779
    %s2783 = sld [smem:[#allocation2 + $0x200]]
    %s2784 = sld [smem:[#allocation2 + $0x201]]
    %v2785 = vsel %vm423, %v2781, 0.0
    %2786 = vadd.xlane.f32.xlu0 %v2785
    %v2787 = vpop.xlane.xlu0 %2786
    %v2788 = vsel %vm423, %v2782, 0.0
    %2789 = vadd.xlane.f32.xlu0 %v2788
    %v2790 = vpop.xlane.xlu0 %2789
    %v2791 = vmul.f32 %v2787, %v436
    %v2792 = vmul.f32 %v2790, %v436
    %v2793 = vsub.f32 %v2781, %v2791
    %v2794 = vsub.f32 %v2782, %v2792
    %v2795 = vmul.f32 %v2793, %v2793
    %v2796 = vmul.f32 %v2794, %v2794
    %v2797 = vsel %vm423, %v2795, 0.0
    %2798 = vadd.xlane.f32.xlu0 %v2797
    %v2799 = vpop.xlane.xlu0 %2798
    %v2800 = vsel %vm423, %v2796, 0.0
    %2801 = vadd.xlane.f32.xlu0 %v2800
    %v2802 = vpop.xlane.xlu0 %2801
    %v2803 = vmul.f32 %v2799, %v455
    %v2804 = vmul.f32 %v2802, %v455
    %v2805 = vstv %s2783
    %v2806 = vmul.f32 %v2805, %v2793
    %v2807 = vmul.f32 %v2805, %v2794
    %v2808 = vrsqrt.pop %v2803
    %v2809 = vmul.f32 %v2808, %v2803
    %v2810 = vmul.f32 %v2809, %v2808
    %v2811 = vmul.f32 0.5, %v2810
    %v2812 = vsub.f32 1.5, %v2811
    %v2813 = vmul.f32 %v2808, %v2812
    %v2814 = vmul.f32 %v2803, %v2813
    %vm2815 = vcmp.eq.f32.partialorder %v2803, inf
    %v2816 = vsel %vm2815, %v2803, %v2814
    %vm2817 = vcmp.eq.f32.partialorder %v2803, 0.0
    %v2818 = vand.u32 %v2803, 2147483648
    %v2819 = vsel %vm2817, %v2818, %v2816
    %v2820 = vrsqrt.pop %v2804
    %v2821 = vmul.f32 %v2820, %v2804
    %v2822 = vmul.f32 %v2821, %v2820
    %v2823 = vmul.f32 0.5, %v2822
    %v2824 = vsub.f32 1.5, %v2823
    %v2825 = vmul.f32 %v2820, %v2824
    %v2826 = vmul.f32 %v2804, %v2825
    %vm2827 = vcmp.eq.f32.partialorder %v2804, inf
    %v2828 = vsel %vm2827, %v2804, %v2826
    %vm2829 = vcmp.eq.f32.partialorder %v2804, 0.0
    %v2830 = vand.u32 %v2804, 2147483648
    %v2831 = vsel %vm2829, %v2830, %v2828
    %v2832 = vadd.f32 %v2819, 1e-06
    %v2833 = vadd.f32 %v2831, 1e-06
    %v2834 = vrcp.pop %v2832
    %v2835 = vmul.f32 %v2832, %v2834
    %v2836 = vsub.f32 1.0, %v2835
    %v2837 = vmul.f32 %v2834, %v2836
    %v2838 = vadd.f32 %v2834, %v2837
    %vm2839 = vweird.f32 %v2832
    %vm2840 = vweird.f32 %v2834
    %vm2841 = vmor %vm2839, %vm2840
    %v2842 = vsel %vm2841, %v2834, %v2838
    %v2843 = vand.u32 2147483647, %v2832
    %vm2844 = vcmp.eq.f32.partialorder %v2843, 8.507059e+37
    %v2845 = vand.u32 %v2832, 2147483648
    %v2846 = vor.u32 1.1754944e-38, %v2845
    %v2847 = vsel %vm2844, %v2846, %v2842
    %v2848 = vmul.f32 %v2806, %v2847
    %v2849 = vrcp.pop %v2833
    %v2850 = vmul.f32 %v2833, %v2849
    %v2851 = vsub.f32 1.0, %v2850
    %v2852 = vmul.f32 %v2849, %v2851
    %v2853 = vadd.f32 %v2849, %v2852
    %vm2854 = vweird.f32 %v2833
    %vm2855 = vweird.f32 %v2849
    %vm2856 = vmor %vm2854, %vm2855
    %v2857 = vsel %vm2856, %v2849, %v2853
    %v2858 = vand.u32 2147483647, %v2833
    %vm2859 = vcmp.eq.f32.partialorder %v2858, 8.507059e+37
    %v2860 = vand.u32 %v2833, 2147483648
    %v2861 = vor.u32 1.1754944e-38, %v2860
    %v2862 = vsel %vm2859, %v2861, %v2857
    %v2863 = vmul.f32 %v2807, %v2862
    %v2864 = vstv %s2784
    %v2865 = vadd.f32 %v2848, %v2864
    %v2866 = vadd.f32 %v2863, %v2864
    %v2867 = vld [vmem:[#allocation25] sm:$0xff]
    %v2868 = vld [vmem:[#allocation25 + $0x8] sm:$0xff]
    %v2869 = vld [vmem:[#allocation25 + $0x10] sm:$0xff]
    %v2870 = vld [vmem:[#allocation25 + $0x18] sm:$0xff]
    %v2871 = vld [vmem:[#allocation27] sm:$0x1]
    %v2873 = vperm.slane %v2871, 0
    %v2876 = vsel %vm423, %v2865, 0
    %v2879 = vsel %vm423, %v2866, 0
    %2881 = vmatpush.msra.mxu0 0.0
    %2882 = vmatpush.msra.mxu0 0.0
    %2883 = vmatpush.msra.mxu0 0.0
    %2884 = vmatpush.msra.mxu0 0.0
    %2885 = vmatpush.msra.mxu0 0.0
    %2886 = vmatpush.msra.mxu0 0.0
    %2887 = vmatpush.msra.mxu0 0.0
    %2888 = vmatpush.msra.mxu0 0.0
    %2889 = vmatpush.msra.mxu0 0.0
    %2890 = vmatpush.msra.mxu0 0.0
    %2891 = vmatpush.msra.mxu0 0.0
    %2892 = vmatpush.msra.mxu0 0.0
    %2893 = vmatpush.msra.mxu0 %v2870
    %2894 = vmatpush.msra.mxu0 %v2869
    %2895 = vmatpush.msra.mxu0 %v2868
    %2896 = vmatpush.msra.mxu0 %v2867
    %2897 = vmatmul.f32.gmra.mxu0 %v2876
    %v2898 = vpop.f32.mrf.mxu0
    %v2899 = vadd.f32 %v2873, %v2898
    %2900 = vmatmul.f32.gmra.mxu0 %v2879
    %v2901 = vpop.f32.mrf.mxu0
    %v2902 = vadd.f32 %v2873, %v2901
    %2903 = vdwg.mxu0
    %v2904 = vld [vmem:[#allocation28] sm:$0xff]
    %v2905 = vld [vmem:[#allocation28 + $0x8] sm:$0xff]
    %v2906 = vld [vmem:[#allocation28 + $0x10] sm:$0xff]
    %v2907 = vld [vmem:[#allocation28 + $0x18] sm:$0xff]
    %v2908 = vld [vmem:[#allocation30] sm:$0x1]
    %v2910 = vperm.slane %v2908, 0
    %2912 = vmatpush.msra.mxu0 0.0
    %2913 = vmatpush.msra.mxu0 0.0
    %2914 = vmatpush.msra.mxu0 0.0
    %2915 = vmatpush.msra.mxu0 0.0
    %2916 = vmatpush.msra.mxu0 0.0
    %2917 = vmatpush.msra.mxu0 0.0
    %2918 = vmatpush.msra.mxu0 0.0
    %2919 = vmatpush.msra.mxu0 0.0
    %2920 = vmatpush.msra.mxu0 0.0
    %2921 = vmatpush.msra.mxu0 0.0
    %2922 = vmatpush.msra.mxu0 0.0
    %2923 = vmatpush.msra.mxu0 0.0
    %2924 = vmatpush.msra.mxu0 %v2907
    %2925 = vmatpush.msra.mxu0 %v2906
    %2926 = vmatpush.msra.mxu0 %v2905
    %2927 = vmatpush.msra.mxu0 %v2904
    %2928 = vmatmul.f32.gmra.mxu0 %v1283
    %v2929 = vpop.f32.mrf.mxu0
    %v2930 = vadd.f32 %v2910, %v2929
    %2931 = vmatmul.f32.gmra.mxu0 %v1286
    %v2932 = vpop.f32.mrf.mxu0
    %v2933 = vadd.f32 %v2910, %v2932
    %2934 = vdwg.mxu0
    %v2935 = vmul.f32 %v2899, 0.35355338
    %v2936 = vmul.f32 %v2902, 0.35355338
    %v2938 = vsel %vm562, %v2935, 0
    %v2941 = vsel %vm562, %v2930, 0
    %2943 = vmatpush.xpose.msra.mxu0 0.0
    %2944 = vmatpush.xpose.msra.mxu0 0.0
    %2945 = vmatpush.xpose.msra.mxu0 0.0
    %2946 = vmatpush.xpose.msra.mxu0 0.0
    %2947 = vmatpush.xpose.msra.mxu0 0.0
    %2948 = vmatpush.xpose.msra.mxu0 0.0
    %2949 = vmatpush.xpose.msra.mxu0 0.0
    %2950 = vmatpush.xpose.msra.mxu0 0.0
    %2951 = vmatpush.xpose.msra.mxu0 0.0
    %2952 = vmatpush.xpose.msra.mxu0 0.0
    %2953 = vmatpush.xpose.msra.mxu0 0.0
    %2954 = vmatpush.xpose.msra.mxu0 0.0
    %2955 = vmatpush.xpose.msra.mxu0 0.0
    %2956 = vmatpush.xpose.msra.mxu0 0.0
    %2957 = vmatpush.xpose.msra.mxu0 0.0
    %2958 = vmatpush.xpose.msra.mxu0 %v2941
    %2959 = vmatmul.f32.gmra.mxu0 %v2938
    %v2960 = vpop.f32.mrf.mxu0
    %v2961 = vadd.f32 0.0, %v2960
    %2962 = vdwg.mxu0
    %v2964 = vsel %vm562, %v2936, 0
    %v2967 = vsel %vm562, %v2933, 0
    %2969 = vmatpush.xpose.msra.mxu0 0.0
    %2970 = vmatpush.xpose.msra.mxu0 0.0
    %2971 = vmatpush.xpose.msra.mxu0 0.0
    %2972 = vmatpush.xpose.msra.mxu0 0.0
    %2973 = vmatpush.xpose.msra.mxu0 0.0
    %2974 = vmatpush.xpose.msra.mxu0 0.0
    %2975 = vmatpush.xpose.msra.mxu0 0.0
    %2976 = vmatpush.xpose.msra.mxu0 0.0
    %2977 = vmatpush.xpose.msra.mxu0 0.0
    %2978 = vmatpush.xpose.msra.mxu0 0.0
    %2979 = vmatpush.xpose.msra.mxu0 0.0
    %2980 = vmatpush.xpose.msra.mxu0 0.0
    %2981 = vmatpush.xpose.msra.mxu0 0.0
    %2982 = vmatpush.xpose.msra.mxu0 0.0
    %2983 = vmatpush.xpose.msra.mxu0 0.0
    %2984 = vmatpush.xpose.msra.mxu0 %v2967
    %2985 = vmatmul.f32.gmra.mxu0 %v2964
    %v2986 = vpop.f32.mrf.mxu0
    %v2987 = vadd.f32 0.0, %v2986
    %2988 = vdwg.mxu0
    %v2989 = vsel %vm562, %v2961, -inf
    %2990 = vmax.xlane.f32.xlu0 %v2989
    %v2991 = vpop.xlane.xlu0 %2990
    %v2992 = vsel %vm562, %v2987, -inf
    %2993 = vmax.xlane.f32.xlu0 %v2992
    %v2994 = vpop.xlane.xlu0 %2993
    %v2995 = vsub.f32 %v2961, %v2991
    %v2996 = vsub.f32 %v2987, %v2994
    %v2997 = vmul.f32 %v2995, 1.442695
    %v2998 = vpow.pop %v2997
    %v2999 = vmul.f32 %v2996, 1.442695
    %v3000 = vpow.pop %v2999
    %v3001 = vsel %vm562, %v2998, 0.0
    %3002 = vadd.xlane.f32.xlu0 %v3001
    %v3003 = vpop.xlane.xlu0 %3002
    %v3004 = vsel %vm562, %v3000, 0.0
    %3005 = vadd.xlane.f32.xlu0 %v3004
    %v3006 = vpop.xlane.xlu0 %3005
    %v3007 = vrcp.pop %v3003
    %v3008 = vrcp.pop %v3006
    %v3009 = vmul.f32 %v2998, %v3007
    %v3010 = vmul.f32 %v3000, %v3008
    %3011 = vrot.lane.b32.xlu0 %v2930, 96
    %v3012 = vpop.permute.xlu0 %3011
    %v3015 = vsel %vm562, %v3009, 0
    %3017 = vmatpush.msra.mxu0 0.0
    %3018 = vmatpush.msra.mxu0 0.0
    %3019 = vmatpush.msra.mxu0 0.0
    %3020 = vmatpush.msra.mxu0 0.0
    %3021 = vmatpush.msra.mxu0 0.0
    %3022 = vmatpush.msra.mxu0 0.0
    %3023 = vmatpush.msra.mxu0 0.0
    %3024 = vmatpush.msra.mxu0 0.0
    %3025 = vmatpush.msra.mxu0 0.0
    %3026 = vmatpush.msra.mxu0 0.0
    %3027 = vmatpush.msra.mxu0 0.0
    %3028 = vmatpush.msra.mxu0 0.0
    %3029 = vmatpush.msra.mxu0 0.0
    %3030 = vmatpush.msra.mxu0 0.0
    %3031 = vmatpush.msra.mxu0 0.0
    %3032 = vmatpush.msra.mxu0 %v3012
    %3033 = vmatmul.f32.gmra.mxu0 %v3015
    %v3034 = vpop.f32.mrf.mxu0
    %v3035 = vadd.f32 0.0, %v3034
    %3036 = vdwg.mxu0
    %3037 = vrot.lane.b32.xlu0 %v2933, 96
    %v3038 = vpop.permute.xlu0 %3037
    %v3041 = vsel %vm562, %v3010, 0
    %3043 = vmatpush.msra.mxu0 0.0
    %3044 = vmatpush.msra.mxu0 0.0
    %3045 = vmatpush.msra.mxu0 0.0
    %3046 = vmatpush.msra.mxu0 0.0
    %3047 = vmatpush.msra.mxu0 0.0
    %3048 = vmatpush.msra.mxu0 0.0
    %3049 = vmatpush.msra.mxu0 0.0
    %3050 = vmatpush.msra.mxu0 0.0
    %3051 = vmatpush.msra.mxu0 0.0
    %3052 = vmatpush.msra.mxu0 0.0
    %3053 = vmatpush.msra.mxu0 0.0
    %3054 = vmatpush.msra.mxu0 0.0
    %3055 = vmatpush.msra.mxu0 0.0
    %3056 = vmatpush.msra.mxu0 0.0
    %3057 = vmatpush.msra.mxu0 0.0
    %3058 = vmatpush.msra.mxu0 %v3038
    %3059 = vmatmul.f32.gmra.mxu0 %v3041
    %v3060 = vpop.f32.mrf.mxu0
    %v3061 = vadd.f32 0.0, %v3060
    %3062 = vdwg.mxu0
    %3063 = vrot.lane.b32.xlu0 %v2935, 120
    %v3064 = vpop.permute.xlu0 %3063
    %3065 = vrot.lane.b32.xlu0 %v2930, 120
    %v3066 = vpop.permute.xlu0 %3065
    %v3067 = vsel %vm562, %v3064, 0
    %v3069 = vsel %vm562, %v3066, 0
    %3071 = vmatpush.xpose.msra.mxu0 0.0
    %3072 = vmatpush.xpose.msra.mxu0 0.0
    %3073 = vmatpush.xpose.msra.mxu0 0.0
    %3074 = vmatpush.xpose.msra.mxu0 0.0
    %3075 = vmatpush.xpose.msra.mxu0 0.0
    %3076 = vmatpush.xpose.msra.mxu0 0.0
    %3077 = vmatpush.xpose.msra.mxu0 0.0
    %3078 = vmatpush.xpose.msra.mxu0 0.0
    %3079 = vmatpush.xpose.msra.mxu0 0.0
    %3080 = vmatpush.xpose.msra.mxu0 0.0
    %3081 = vmatpush.xpose.msra.mxu0 0.0
    %3082 = vmatpush.xpose.msra.mxu0 0.0
    %3083 = vmatpush.xpose.msra.mxu0 0.0
    %3084 = vmatpush.xpose.msra.mxu0 0.0
    %3085 = vmatpush.xpose.msra.mxu0 0.0
    %3086 = vmatpush.xpose.msra.mxu0 %v3069
    %3087 = vmatmul.f32.gmra.mxu0 %v3067
    %v3088 = vpop.f32.mrf.mxu0
    %v3089 = vadd.f32 0.0, %v3088
    %3090 = vdwg.mxu0
    %3091 = vrot.lane.b32.xlu0 %v2936, 120
    %v3092 = vpop.permute.xlu0 %3091
    %3093 = vrot.lane.b32.xlu0 %v2933, 120
    %v3094 = vpop.permute.xlu0 %3093
    %v3095 = vsel %vm562, %v3092, 0
    %v3097 = vsel %vm562, %v3094, 0
    %3099 = vmatpush.xpose.msra.mxu0 0.0
    %3100 = vmatpush.xpose.msra.mxu0 0.0
    %3101 = vmatpush.xpose.msra.mxu0 0.0
    %3102 = vmatpush.xpose.msra.mxu0 0.0
    %3103 = vmatpush.xpose.msra.mxu0 0.0
    %3104 = vmatpush.xpose.msra.mxu0 0.0
    %3105 = vmatpush.xpose.msra.mxu0 0.0
    %3106 = vmatpush.xpose.msra.mxu0 0.0
    %3107 = vmatpush.xpose.msra.mxu0 0.0
    %3108 = vmatpush.xpose.msra.mxu0 0.0
    %3109 = vmatpush.xpose.msra.mxu0 0.0
    %3110 = vmatpush.xpose.msra.mxu0 0.0
    %3111 = vmatpush.xpose.msra.mxu0 0.0
    %3112 = vmatpush.xpose.msra.mxu0 0.0
    %3113 = vmatpush.xpose.msra.mxu0 0.0
    %3114 = vmatpush.xpose.msra.mxu0 %v3097
    %3115 = vmatmul.f32.gmra.mxu0 %v3095
    %v3116 = vpop.f32.mrf.mxu0
    %v3117 = vadd.f32 0.0, %v3116
    %3118 = vdwg.mxu0
    %v3119 = vsel %vm562, %v3089, -inf
    %3120 = vmax.xlane.f32.xlu0 %v3119
    %v3121 = vpop.xlane.xlu0 %3120
    %v3122 = vsel %vm562, %v3117, -inf
    %3123 = vmax.xlane.f32.xlu0 %v3122
    %v3124 = vpop.xlane.xlu0 %3123
    %v3125 = vsub.f32 %v3089, %v3121
    %v3126 = vsub.f32 %v3117, %v3124
    %v3127 = vmul.f32 %v3125, 1.442695
    %v3128 = vpow.pop %v3127
    %v3129 = vmul.f32 %v3126, 1.442695
    %v3130 = vpow.pop %v3129
    %v3131 = vsel %vm562, %v3128, 0.0
    %3132 = vadd.xlane.f32.xlu0 %v3131
    %v3133 = vpop.xlane.xlu0 %3132
    %v3134 = vsel %vm562, %v3130, 0.0
    %3135 = vadd.xlane.f32.xlu0 %v3134
    %v3136 = vpop.xlane.xlu0 %3135
    %v3137 = vrcp.pop %v3133
    %v3138 = vrcp.pop %v3136
    %v3139 = vmul.f32 %v3128, %v3137
    %v3140 = vmul.f32 %v3130, %v3138
    %3141 = vrot.lane.b32.xlu0 %v2930, 88
    %v3142 = vpop.permute.xlu0 %3141
    %v3145 = vsel %vm562, %v3139, 0
    %3147 = vmatpush.msra.mxu0 0.0
    %3148 = vmatpush.msra.mxu0 0.0
    %3149 = vmatpush.msra.mxu0 0.0
    %3150 = vmatpush.msra.mxu0 0.0
    %3151 = vmatpush.msra.mxu0 0.0
    %3152 = vmatpush.msra.mxu0 0.0
    %3153 = vmatpush.msra.mxu0 0.0
    %3154 = vmatpush.msra.mxu0 0.0
    %3155 = vmatpush.msra.mxu0 0.0
    %3156 = vmatpush.msra.mxu0 0.0
    %3157 = vmatpush.msra.mxu0 0.0
    %3158 = vmatpush.msra.mxu0 0.0
    %3159 = vmatpush.msra.mxu0 0.0
    %3160 = vmatpush.msra.mxu0 0.0
    %3161 = vmatpush.msra.mxu0 0.0
    %3162 = vmatpush.msra.mxu0 %v3142
    %3163 = vmatmul.f32.gmra.mxu0 %v3145
    %v3164 = vpop.f32.mrf.mxu0
    %v3165 = vadd.f32 0.0, %v3164
    %3166 = vdwg.mxu0
    %3167 = vrot.lane.b32.xlu0 %v2933, 88
    %v3168 = vpop.permute.xlu0 %3167
    %v3171 = vsel %vm562, %v3140, 0
    %3173 = vmatpush.msra.mxu0 0.0
    %3174 = vmatpush.msra.mxu0 0.0
    %3175 = vmatpush.msra.mxu0 0.0
    %3176 = vmatpush.msra.mxu0 0.0
    %3177 = vmatpush.msra.mxu0 0.0
    %3178 = vmatpush.msra.mxu0 0.0
    %3179 = vmatpush.msra.mxu0 0.0
    %3180 = vmatpush.msra.mxu0 0.0
    %3181 = vmatpush.msra.mxu0 0.0
    %3182 = vmatpush.msra.mxu0 0.0
    %3183 = vmatpush.msra.mxu0 0.0
    %3184 = vmatpush.msra.mxu0 0.0
    %3185 = vmatpush.msra.mxu0 0.0
    %3186 = vmatpush.msra.mxu0 0.0
    %3187 = vmatpush.msra.mxu0 0.0
    %3188 = vmatpush.msra.mxu0 %v3168
    %3189 = vmatmul.f32.gmra.mxu0 %v3171
    %v3190 = vpop.f32.mrf.mxu0
    %v3191 = vadd.f32 0.0, %v3190
    %3192 = vdwg.mxu0
    %3193 = vrot.lane.b32.xlu0 %v2935, 112
    %v3194 = vpop.permute.xlu0 %3193
    %3195 = vrot.lane.b32.xlu0 %v2930, 112
    %v3196 = vpop.permute.xlu0 %3195
    %v3197 = vsel %vm562, %v3194, 0
    %v3199 = vsel %vm562, %v3196, 0
    %3201 = vmatpush.xpose.msra.mxu0 0.0
    %3202 = vmatpush.xpose.msra.mxu0 0.0
    %3203 = vmatpush.xpose.msra.mxu0 0.0
    %3204 = vmatpush.xpose.msra.mxu0 0.0
    %3205 = vmatpush.xpose.msra.mxu0 0.0
    %3206 = vmatpush.xpose.msra.mxu0 0.0
    %3207 = vmatpush.xpose.msra.mxu0 0.0
    %3208 = vmatpush.xpose.msra.mxu0 0.0
    %3209 = vmatpush.xpose.msra.mxu0 0.0
    %3210 = vmatpush.xpose.msra.mxu0 0.0
    %3211 = vmatpush.xpose.msra.mxu0 0.0
    %3212 = vmatpush.xpose.msra.mxu0 0.0
    %3213 = vmatpush.xpose.msra.mxu0 0.0
    %3214 = vmatpush.xpose.msra.mxu0 0.0
    %3215 = vmatpush.xpose.msra.mxu0 0.0
    %3216 = vmatpush.xpose.msra.mxu0 %v3199
    %3217 = vmatmul.f32.gmra.mxu0 %v3197
    %v3218 = vpop.f32.mrf.mxu0
    %v3219 = vadd.f32 0.0, %v3218
    %3220 = vdwg.mxu0
    %3221 = vrot.lane.b32.xlu0 %v2936, 112
    %v3222 = vpop.permute.xlu0 %3221
    %3223 = vrot.lane.b32.xlu0 %v2933, 112
    %v3224 = vpop.permute.xlu0 %3223
    %v3225 = vsel %vm562, %v3222, 0
    %v3227 = vsel %vm562, %v3224, 0
    %3229 = vmatpush.xpose.msra.mxu0 0.0
    %3230 = vmatpush.xpose.msra.mxu0 0.0
    %3231 = vmatpush.xpose.msra.mxu0 0.0
    %3232 = vmatpush.xpose.msra.mxu0 0.0
    %3233 = vmatpush.xpose.msra.mxu0 0.0
    %3234 = vmatpush.xpose.msra.mxu0 0.0
    %3235 = vmatpush.xpose.msra.mxu0 0.0
    %3236 = vmatpush.xpose.msra.mxu0 0.0
    %3237 = vmatpush.xpose.msra.mxu0 0.0
    %3238 = vmatpush.xpose.msra.mxu0 0.0
    %3239 = vmatpush.xpose.msra.mxu0 0.0
    %3240 = vmatpush.xpose.msra.mxu0 0.0
    %3241 = vmatpush.xpose.msra.mxu0 0.0
    %3242 = vmatpush.xpose.msra.mxu0 0.0
    %3243 = vmatpush.xpose.msra.mxu0 0.0
    %3244 = vmatpush.xpose.msra.mxu0 %v3227
    %3245 = vmatmul.f32.gmra.mxu0 %v3225
    %v3246 = vpop.f32.mrf.mxu0
    %v3247 = vadd.f32 0.0, %v3246
    %3248 = vdwg.mxu0
    %v3249 = vsel %vm562, %v3219, -inf
    %3250 = vmax.xlane.f32.xlu0 %v3249
    %v3251 = vpop.xlane.xlu0 %3250
    %v3252 = vsel %vm562, %v3247, -inf
    %3253 = vmax.xlane.f32.xlu0 %v3252
    %v3254 = vpop.xlane.xlu0 %3253
    %v3255 = vsub.f32 %v3219, %v3251
    %v3256 = vsub.f32 %v3247, %v3254
    %v3257 = vmul.f32 %v3255, 1.442695
    %v3258 = vpow.pop %v3257
    %v3259 = vmul.f32 %v3256, 1.442695
    %v3260 = vpow.pop %v3259
    %v3261 = vsel %vm562, %v3258, 0.0
    %3262 = vadd.xlane.f32.xlu0 %v3261
    %v3263 = vpop.xlane.xlu0 %3262
    %v3264 = vsel %vm562, %v3260, 0.0
    %3265 = vadd.xlane.f32.xlu0 %v3264
    %v3266 = vpop.xlane.xlu0 %3265
    %v3267 = vrcp.pop %v3263
    %v3268 = vrcp.pop %v3266
    %v3269 = vmul.f32 %v3258, %v3267
    %v3270 = vmul.f32 %v3260, %v3268
    %3271 = vrot.lane.b32.xlu0 %v2930, 80
    %v3272 = vpop.permute.xlu0 %3271
    %v3275 = vsel %vm562, %v3269, 0
    %3277 = vmatpush.msra.mxu0 0.0
    %3278 = vmatpush.msra.mxu0 0.0
    %3279 = vmatpush.msra.mxu0 0.0
    %3280 = vmatpush.msra.mxu0 0.0
    %3281 = vmatpush.msra.mxu0 0.0
    %3282 = vmatpush.msra.mxu0 0.0
    %3283 = vmatpush.msra.mxu0 0.0
    %3284 = vmatpush.msra.mxu0 0.0
    %3285 = vmatpush.msra.mxu0 0.0
    %3286 = vmatpush.msra.mxu0 0.0
    %3287 = vmatpush.msra.mxu0 0.0
    %3288 = vmatpush.msra.mxu0 0.0
    %3289 = vmatpush.msra.mxu0 0.0
    %3290 = vmatpush.msra.mxu0 0.0
    %3291 = vmatpush.msra.mxu0 0.0
    %3292 = vmatpush.msra.mxu0 %v3272
    %3293 = vmatmul.f32.gmra.mxu0 %v3275
    %v3294 = vpop.f32.mrf.mxu0
    %v3295 = vadd.f32 0.0, %v3294
    %3296 = vdwg.mxu0
    %3297 = vrot.lane.b32.xlu0 %v2933, 80
    %v3298 = vpop.permute.xlu0 %3297
    %v3301 = vsel %vm562, %v3270, 0
    %3303 = vmatpush.msra.mxu0 0.0
    %3304 = vmatpush.msra.mxu0 0.0
    %3305 = vmatpush.msra.mxu0 0.0
    %3306 = vmatpush.msra.mxu0 0.0
    %3307 = vmatpush.msra.mxu0 0.0
    %3308 = vmatpush.msra.mxu0 0.0
    %3309 = vmatpush.msra.mxu0 0.0
    %3310 = vmatpush.msra.mxu0 0.0
    %3311 = vmatpush.msra.mxu0 0.0
    %3312 = vmatpush.msra.mxu0 0.0
    %3313 = vmatpush.msra.mxu0 0.0
    %3314 = vmatpush.msra.mxu0 0.0
    %3315 = vmatpush.msra.mxu0 0.0
    %3316 = vmatpush.msra.mxu0 0.0
    %3317 = vmatpush.msra.mxu0 0.0
    %3318 = vmatpush.msra.mxu0 %v3298
    %3319 = vmatmul.f32.gmra.mxu0 %v3301
    %v3320 = vpop.f32.mrf.mxu0
    %v3321 = vadd.f32 0.0, %v3320
    %3322 = vdwg.mxu0
    %3323 = vrot.lane.b32.xlu0 %v2935, 104
    %v3324 = vpop.permute.xlu0 %3323
    %3325 = vrot.lane.b32.xlu0 %v2930, 104
    %v3326 = vpop.permute.xlu0 %3325
    %v3327 = vsel %vm562, %v3324, 0
    %v3329 = vsel %vm562, %v3326, 0
    %3331 = vmatpush.xpose.msra.mxu0 0.0
    %3332 = vmatpush.xpose.msra.mxu0 0.0
    %3333 = vmatpush.xpose.msra.mxu0 0.0
    %3334 = vmatpush.xpose.msra.mxu0 0.0
    %3335 = vmatpush.xpose.msra.mxu0 0.0
    %3336 = vmatpush.xpose.msra.mxu0 0.0
    %3337 = vmatpush.xpose.msra.mxu0 0.0
    %3338 = vmatpush.xpose.msra.mxu0 0.0
    %3339 = vmatpush.xpose.msra.mxu0 0.0
    %3340 = vmatpush.xpose.msra.mxu0 0.0
    %3341 = vmatpush.xpose.msra.mxu0 0.0
    %3342 = vmatpush.xpose.msra.mxu0 0.0
    %3343 = vmatpush.xpose.msra.mxu0 0.0
    %3344 = vmatpush.xpose.msra.mxu0 0.0
    %3345 = vmatpush.xpose.msra.mxu0 0.0
    %3346 = vmatpush.xpose.msra.mxu0 %v3329
    %3347 = vmatmul.f32.gmra.mxu0 %v3327
    %v3348 = vpop.f32.mrf.mxu0
    %v3349 = vadd.f32 0.0, %v3348
    %3350 = vdwg.mxu0
    %3351 = vrot.lane.b32.xlu0 %v2936, 104
    %v3352 = vpop.permute.xlu0 %3351
    %3353 = vrot.lane.b32.xlu0 %v2933, 104
    %v3354 = vpop.permute.xlu0 %3353
    %v3355 = vsel %vm562, %v3352, 0
    %v3357 = vsel %vm562, %v3354, 0
    %3359 = vmatpush.xpose.msra.mxu0 0.0
    %3360 = vmatpush.xpose.msra.mxu0 0.0
    %3361 = vmatpush.xpose.msra.mxu0 0.0
    %3362 = vmatpush.xpose.msra.mxu0 0.0
    %3363 = vmatpush.xpose.msra.mxu0 0.0
    %3364 = vmatpush.xpose.msra.mxu0 0.0
    %3365 = vmatpush.xpose.msra.mxu0 0.0
    %3366 = vmatpush.xpose.msra.mxu0 0.0
    %3367 = vmatpush.xpose.msra.mxu0 0.0
    %3368 = vmatpush.xpose.msra.mxu0 0.0
    %3369 = vmatpush.xpose.msra.mxu0 0.0
    %3370 = vmatpush.xpose.msra.mxu0 0.0
    %3371 = vmatpush.xpose.msra.mxu0 0.0
    %3372 = vmatpush.xpose.msra.mxu0 0.0
    %3373 = vmatpush.xpose.msra.mxu0 0.0
    %3374 = vmatpush.xpose.msra.mxu0 %v3357
    %3375 = vmatmul.f32.gmra.mxu0 %v3355
    %v3376 = vpop.f32.mrf.mxu0
    %v3377 = vadd.f32 0.0, %v3376
    %3378 = vdwg.mxu0
    %v3379 = vsel %vm562, %v3349, -inf
    %3380 = vmax.xlane.f32.xlu0 %v3379
    %v3381 = vpop.xlane.xlu0 %3380
    %v3382 = vsel %vm562, %v3377, -inf
    %3383 = vmax.xlane.f32.xlu0 %v3382
    %v3384 = vpop.xlane.xlu0 %3383
    %v3385 = vsub.f32 %v3349, %v3381
    %v3386 = vsub.f32 %v3377, %v3384
    %v3387 = vmul.f32 %v3385, 1.442695
    %v3388 = vpow.pop %v3387
    %v3389 = vmul.f32 %v3386, 1.442695
    %v3390 = vpow.pop %v3389
    %v3391 = vsel %vm562, %v3388, 0.0
    %3392 = vadd.xlane.f32.xlu0 %v3391
    %v3393 = vpop.xlane.xlu0 %3392
    %v3394 = vsel %vm562, %v3390, 0.0
    %3395 = vadd.xlane.f32.xlu0 %v3394
    %v3396 = vpop.xlane.xlu0 %3395
    %v3397 = vrcp.pop %v3393
    %v3398 = vrcp.pop %v3396
    %v3399 = vmul.f32 %v3388, %v3397
    %v3400 = vmul.f32 %v3390, %v3398
    %3401 = vrot.lane.b32.xlu0 %v2930, 72
    %v3402 = vpop.permute.xlu0 %3401
    %v3405 = vsel %vm562, %v3399, 0
    %3407 = vmatpush.msra.mxu0 0.0
    %3408 = vmatpush.msra.mxu0 0.0
    %3409 = vmatpush.msra.mxu0 0.0
    %3410 = vmatpush.msra.mxu0 0.0
    %3411 = vmatpush.msra.mxu0 0.0
    %3412 = vmatpush.msra.mxu0 0.0
    %3413 = vmatpush.msra.mxu0 0.0
    %3414 = vmatpush.msra.mxu0 0.0
    %3415 = vmatpush.msra.mxu0 0.0
    %3416 = vmatpush.msra.mxu0 0.0
    %3417 = vmatpush.msra.mxu0 0.0
    %3418 = vmatpush.msra.mxu0 0.0
    %3419 = vmatpush.msra.mxu0 0.0
    %3420 = vmatpush.msra.mxu0 0.0
    %3421 = vmatpush.msra.mxu0 0.0
    %3422 = vmatpush.msra.mxu0 %v3402
    %3423 = vmatmul.f32.gmra.mxu0 %v3405
    %v3424 = vpop.f32.mrf.mxu0
    %v3425 = vadd.f32 0.0, %v3424
    %3426 = vdwg.mxu0
    %3427 = vrot.lane.b32.xlu0 %v2933, 72
    %v3428 = vpop.permute.xlu0 %3427
    %v3431 = vsel %vm562, %v3400, 0
    %3433 = vmatpush.msra.mxu0 0.0
    %3434 = vmatpush.msra.mxu0 0.0
    %3435 = vmatpush.msra.mxu0 0.0
    %3436 = vmatpush.msra.mxu0 0.0
    %3437 = vmatpush.msra.mxu0 0.0
    %3438 = vmatpush.msra.mxu0 0.0
    %3439 = vmatpush.msra.mxu0 0.0
    %3440 = vmatpush.msra.mxu0 0.0
    %3441 = vmatpush.msra.mxu0 0.0
    %3442 = vmatpush.msra.mxu0 0.0
    %3443 = vmatpush.msra.mxu0 0.0
    %3444 = vmatpush.msra.mxu0 0.0
    %3445 = vmatpush.msra.mxu0 0.0
    %3446 = vmatpush.msra.mxu0 0.0
    %3447 = vmatpush.msra.mxu0 0.0
    %3448 = vmatpush.msra.mxu0 %v3428
    %3449 = vmatmul.f32.gmra.mxu0 %v3431
    %v3450 = vpop.f32.mrf.mxu0
    %v3451 = vadd.f32 0.0, %v3450
    %3452 = vdwg.mxu0
    %3455 = vrot.lane.b32.xlu0 %v3165, 8
    %v3456 = vpop.permute.xlu0 %3455
    %3457 = vrot.lane.b32.xlu0 %v3191, 8
    %v3458 = vpop.permute.xlu0 %3457
    %3463 = vrot.lane.b32.xlu0 %v3295, 16
    %v3464 = vpop.permute.xlu0 %3463
    %3465 = vrot.lane.b32.xlu0 %v3321, 16
    %v3466 = vpop.permute.xlu0 %3465
    %3471 = vrot.lane.b32.xlu0 %v3425, 24
    %v3472 = vpop.permute.xlu0 %3471
    %3473 = vrot.lane.b32.xlu0 %v3451, 24
    %v3474 = vpop.permute.xlu0 %3473
    %v3477 = vsel %vm562, %v3035, %v3456
    %v3478 = vsel %vm562, %v3061, %v3458
    %v3479 = vsel %vm1106, %v3477, %v3464
    %v3480 = vsel %vm1106, %v3478, %v3466
    %v3481 = vsel %vm1109, %v3479, %v3472
    %v3482 = vsel %vm1109, %v3480, %v3474
    %v3483 = vld [vmem:[%s51] sm:$0xff]
    %v3484 = vld [vmem:[%s51 + $0x8] sm:$0xff]
    %v3485 = vld [vmem:[%s51 + $0x10] sm:$0xff]
    %v3486 = vld [vmem:[%s51 + $0x18] sm:$0xff]
    %v3488 = vsel %vm423, %v3481, 0
    %v3491 = vsel %vm423, %v3482, 0
    %3493 = vmatpush.msra.mxu0 0.0
    %3494 = vmatpush.msra.mxu0 0.0
    %3495 = vmatpush.msra.mxu0 0.0
    %3496 = vmatpush.msra.mxu0 0.0
    %3497 = vmatpush.msra.mxu0 0.0
    %3498 = vmatpush.msra.mxu0 0.0
    %3499 = vmatpush.msra.mxu0 0.0
    %3500 = vmatpush.msra.mxu0 0.0
    %3501 = vmatpush.msra.mxu0 0.0
    %3502 = vmatpush.msra.mxu0 0.0
    %3503 = vmatpush.msra.mxu0 0.0
    %3504 = vmatpush.msra.mxu0 0.0
    %3505 = vmatpush.msra.mxu0 %v3486
    %3506 = vmatpush.msra.mxu0 %v3485
    %3507 = vmatpush.msra.mxu0 %v3484
    %3508 = vmatpush.msra.mxu0 %v3483
    %3509 = vmatmul.f32.gmra.mxu0 %v3488
    %v3510 = vpop.f32.mrf.mxu0
    %v3511 = vadd.f32 0.0, %v3510
    %3512 = vmatmul.f32.gmra.mxu0 %v3491
    %v3513 = vpop.f32.mrf.mxu0
    %v3514 = vadd.f32 0.0, %v3513
    %3515 = vdwg.mxu0
    %v3516 = vadd.f32 %v2781, %v3511
    %v3517 = vadd.f32 %v2782, %v3514
    %v3518 = vld [vmem:[#allocation31] sm:$0x1]
    %v3520 = vperm.slane %v3518, 0
    %v3522 = vadd.f32 %v3516, %v3520
    %v3523 = vadd.f32 %v3517, %v3520
    %s3524 = sld [smem:[#allocation2 + $0x280]]
    %s3525 = sld [smem:[#allocation2 + $0x281]]
    %v3526 = vsel %vm423, %v3522, 0.0
    %3527 = vadd.xlane.f32.xlu0 %v3526
    %v3528 = vpop.xlane.xlu0 %3527
    %v3529 = vsel %vm423, %v3523, 0.0
    %3530 = vadd.xlane.f32.xlu0 %v3529
    %v3531 = vpop.xlane.xlu0 %3530
    %v3532 = vmul.f32 %v3528, %v436
    %v3533 = vmul.f32 %v3531, %v436
    %v3534 = vsub.f32 %v3522, %v3532
    %v3535 = vsub.f32 %v3523, %v3533
    %v3536 = vmul.f32 %v3534, %v3534
    %v3537 = vmul.f32 %v3535, %v3535
    %v3538 = vsel %vm423, %v3536, 0.0
    %3539 = vadd.xlane.f32.xlu0 %v3538
    %v3540 = vpop.xlane.xlu0 %3539
    %v3541 = vsel %vm423, %v3537, 0.0
    %3542 = vadd.xlane.f32.xlu0 %v3541
    %v3543 = vpop.xlane.xlu0 %3542
    %v3544 = vmul.f32 %v3540, %v455
    %v3545 = vmul.f32 %v3543, %v455
    %v3546 = vstv %s3524
    %v3547 = vmul.f32 %v3546, %v3534
    %v3548 = vmul.f32 %v3546, %v3535
    %v3549 = vrsqrt.pop %v3544
    %v3550 = vmul.f32 %v3549, %v3544
    %v3551 = vmul.f32 %v3550, %v3549
    %v3552 = vmul.f32 0.5, %v3551
    %v3553 = vsub.f32 1.5, %v3552
    %v3554 = vmul.f32 %v3549, %v3553
    %v3555 = vmul.f32 %v3544, %v3554
    %vm3556 = vcmp.eq.f32.partialorder %v3544, inf
    %v3557 = vsel %vm3556, %v3544, %v3555
    %vm3558 = vcmp.eq.f32.partialorder %v3544, 0.0
    %v3559 = vand.u32 %v3544, 2147483648
    %v3560 = vsel %vm3558, %v3559, %v3557
    %v3561 = vrsqrt.pop %v3545
    %v3562 = vmul.f32 %v3561, %v3545
    %v3563 = vmul.f32 %v3562, %v3561
    %v3564 = vmul.f32 0.5, %v3563
    %v3565 = vsub.f32 1.5, %v3564
    %v3566 = vmul.f32 %v3561, %v3565
    %v3567 = vmul.f32 %v3545, %v3566
    %vm3568 = vcmp.eq.f32.partialorder %v3545, inf
    %v3569 = vsel %vm3568, %v3545, %v3567
    %vm3570 = vcmp.eq.f32.partialorder %v3545, 0.0
    %v3571 = vand.u32 %v3545, 2147483648
    %v3572 = vsel %vm3570, %v3571, %v3569
    %v3573 = vadd.f32 %v3560, 1e-06
    %v3574 = vadd.f32 %v3572, 1e-06
    %v3575 = vrcp.pop %v3573
    %v3576 = vmul.f32 %v3573, %v3575
    %v3577 = vsub.f32 1.0, %v3576
    %v3578 = vmul.f32 %v3575, %v3577
    %v3579 = vadd.f32 %v3575, %v3578
    %vm3580 = vweird.f32 %v3573
    %vm3581 = vweird.f32 %v3575
    %vm3582 = vmor %vm3580, %vm3581
    %v3583 = vsel %vm3582, %v3575, %v3579
    %v3584 = vand.u32 2147483647, %v3573
    %vm3585 = vcmp.eq.f32.partialorder %v3584, 8.507059e+37
    %v3586 = vand.u32 %v3573, 2147483648
    %v3587 = vor.u32 1.1754944e-38, %v3586
    %v3588 = vsel %vm3585, %v3587, %v3583
    %v3589 = vmul.f32 %v3547, %v3588
    %v3590 = vrcp.pop %v3574
    %v3591 = vmul.f32 %v3574, %v3590
    %v3592 = vsub.f32 1.0, %v3591
    %v3593 = vmul.f32 %v3590, %v3592
    %v3594 = vadd.f32 %v3590, %v3593
    %vm3595 = vweird.f32 %v3574
    %vm3596 = vweird.f32 %v3590
    %vm3597 = vmor %vm3595, %vm3596
    %v3598 = vsel %vm3597, %v3590, %v3594
    %v3599 = vand.u32 2147483647, %v3574
    %vm3600 = vcmp.eq.f32.partialorder %v3599, 8.507059e+37
    %v3601 = vand.u32 %v3574, 2147483648
    %v3602 = vor.u32 1.1754944e-38, %v3601
    %v3603 = vsel %vm3600, %v3602, %v3598
    %v3604 = vmul.f32 %v3548, %v3603
    %v3605 = vstv %s3525
    %v3606 = vadd.f32 %v3589, %v3605
    %v3607 = vadd.f32 %v3604, %v3605
    %v3608 = vld [vmem:[#allocation33] sm:$0xff]
    %v3609 = vld [vmem:[#allocation33 + $0x8] sm:$0xff]
    %v3610 = vld [vmem:[#allocation33 + $0x10] sm:$0xff]
    %v3611 = vld [vmem:[#allocation33 + $0x18] sm:$0xff]
    %v3612 = vld [vmem:[%s57] sm:$0x1]
    %v3614 = vperm.slane %v3612, 0
    %v3617 = vsel %vm423, %v3606, 0
    %v3620 = vsel %vm423, %v3607, 0
    %3622 = vmatpush.msra.mxu0 0.0
    %3623 = vmatpush.msra.mxu0 0.0
    %3624 = vmatpush.msra.mxu0 0.0
    %3625 = vmatpush.msra.mxu0 0.0
    %3626 = vmatpush.msra.mxu0 0.0
    %3627 = vmatpush.msra.mxu0 0.0
    %3628 = vmatpush.msra.mxu0 0.0
    %3629 = vmatpush.msra.mxu0 0.0
    %3630 = vmatpush.msra.mxu0 0.0
    %3631 = vmatpush.msra.mxu0 0.0
    %3632 = vmatpush.msra.mxu0 0.0
    %3633 = vmatpush.msra.mxu0 0.0
    %3634 = vmatpush.msra.mxu0 %v3611
    %3635 = vmatpush.msra.mxu0 %v3610
    %3636 = vmatpush.msra.mxu0 %v3609
    %3637 = vmatpush.msra.mxu0 %v3608
    %3638 = vmatmul.f32.gmra.mxu0 %v3617
    %v3639 = vpop.f32.mrf.mxu0
    %v3640 = vadd.f32 %v3614, %v3639
    %3641 = vmatmul.f32.gmra.mxu0 %v3620
    %v3642 = vpop.f32.mrf.mxu0
    %v3643 = vadd.f32 %v3614, %v3642
    %3644 = vdwg.mxu0
    %v3645 = vmax.f32 %v3640, 0.0
    %v3646 = vmax.f32 %v3643, 0.0
    %v3647 = vld [vmem:[%s59] sm:$0xff]
    %v3648 = vld [vmem:[%s59 + $0x8] sm:$0xff]
    %v3649 = vld [vmem:[%s59 + $0x10] sm:$0xff]
    %v3650 = vld [vmem:[%s59 + $0x18] sm:$0xff]
    %v3651 = vld [vmem:[%s59 + $0x20] sm:$0xff]
    %v3652 = vld [vmem:[%s59 + $0x28] sm:$0xff]
    %v3653 = vld [vmem:[%s59 + $0x30] sm:$0xff]
    %v3654 = vld [vmem:[%s59 + $0x38] sm:$0xff]
    %v3656 = vsel %vm2031, %v3645, 0
    %v3659 = vsel %vm2031, %v3646, 0
    %3661 = vmatpush.msra.mxu0 0.0
    %3662 = vmatpush.msra.mxu0 0.0
    %3663 = vmatpush.msra.mxu0 0.0
    %3664 = vmatpush.msra.mxu0 0.0
    %3665 = vmatpush.msra.mxu0 0.0
    %3666 = vmatpush.msra.mxu0 0.0
    %3667 = vmatpush.msra.mxu0 0.0
    %3668 = vmatpush.msra.mxu0 0.0
    %3669 = vmatpush.msra.mxu0 %v3654
    %3670 = vmatpush.msra.mxu0 %v3653
    %3671 = vmatpush.msra.mxu0 %v3652
    %3672 = vmatpush.msra.mxu0 %v3651
    %3673 = vmatpush.msra.mxu0 %v3650
    %3674 = vmatpush.msra.mxu0 %v3649
    %3675 = vmatpush.msra.mxu0 %v3648
    %3676 = vmatpush.msra.mxu0 %v3647
    %3677 = vmatmul.f32.gmra.mxu0 %v3656
    %v3678 = vpop.f32.mrf.mxu0
    %v3679 = vadd.f32 0.0, %v3678
    %3680 = vmatmul.f32.gmra.mxu0 %v3659
    %v3681 = vpop.f32.mrf.mxu0
    %v3682 = vadd.f32 0.0, %v3681
    %3683 = vdwg.mxu0
    %v3684 = vadd.f32 %v3522, %v3679
    %v3685 = vadd.f32 %v3523, %v3682
    %v3686 = vld [vmem:[%s61] sm:$0x1]
    %v3688 = vperm.slane %v3686, 0
    %v3690 = vadd.f32 %v3684, %v3688
    %v3691 = vadd.f32 %v3685, %v3688
    %s3692 = sld [smem:[#allocation2 + $0x300]]
    %s3693 = sld [smem:[#allocation2 + $0x301]]
    %v3694 = vsel %vm423, %v3690, 0.0
    %3695 = vadd.xlane.f32.xlu0 %v3694
    %v3696 = vpop.xlane.xlu0 %3695
    %v3697 = vsel %vm423, %v3691, 0.0
    %3698 = vadd.xlane.f32.xlu0 %v3697
    %v3699 = vpop.xlane.xlu0 %3698
    %v3700 = vmul.f32 %v3696, %v436
    %v3701 = vmul.f32 %v3699, %v436
    %v3702 = vsub.f32 %v3690, %v3700
    %v3703 = vsub.f32 %v3691, %v3701
    %v3704 = vmul.f32 %v3702, %v3702
    %v3705 = vmul.f32 %v3703, %v3703
    %v3706 = vsel %vm423, %v3704, 0.0
    %3707 = vadd.xlane.f32.xlu0 %v3706
    %v3708 = vpop.xlane.xlu0 %3707
    %v3709 = vsel %vm423, %v3705, 0.0
    %3710 = vadd.xlane.f32.xlu0 %v3709
    %v3711 = vpop.xlane.xlu0 %3710
    %v3712 = vmul.f32 %v3708, %v455
    %v3713 = vmul.f32 %v3711, %v455
    %v3714 = vstv %s3692
    %v3715 = vmul.f32 %v3714, %v3702
    %v3716 = vmul.f32 %v3714, %v3703
    %v3717 = vrsqrt.pop %v3712
    %v3718 = vmul.f32 %v3717, %v3712
    %v3719 = vmul.f32 %v3718, %v3717
    %v3720 = vmul.f32 0.5, %v3719
    %v3721 = vsub.f32 1.5, %v3720
    %v3722 = vmul.f32 %v3717, %v3721
    %v3723 = vmul.f32 %v3712, %v3722
    %vm3724 = vcmp.eq.f32.partialorder %v3712, inf
    %v3725 = vsel %vm3724, %v3712, %v3723
    %vm3726 = vcmp.eq.f32.partialorder %v3712, 0.0
    %v3727 = vand.u32 %v3712, 2147483648
    %v3728 = vsel %vm3726, %v3727, %v3725
    %v3729 = vrsqrt.pop %v3713
    %v3730 = vmul.f32 %v3729, %v3713
    %v3731 = vmul.f32 %v3730, %v3729
    %v3732 = vmul.f32 0.5, %v3731
    %v3733 = vsub.f32 1.5, %v3732
    %v3734 = vmul.f32 %v3729, %v3733
    %v3735 = vmul.f32 %v3713, %v3734
    %vm3736 = vcmp.eq.f32.partialorder %v3713, inf
    %v3737 = vsel %vm3736, %v3713, %v3735
    %vm3738 = vcmp.eq.f32.partialorder %v3713, 0.0
    %v3739 = vand.u32 %v3713, 2147483648
    %v3740 = vsel %vm3738, %v3739, %v3737
    %v3741 = vadd.f32 %v3728, 1e-06
    %v3742 = vadd.f32 %v3740, 1e-06
    %v3743 = vrcp.pop %v3741
    %v3744 = vmul.f32 %v3741, %v3743
    %v3745 = vsub.f32 1.0, %v3744
    %v3746 = vmul.f32 %v3743, %v3745
    %v3747 = vadd.f32 %v3743, %v3746
    %vm3748 = vweird.f32 %v3741
    %vm3749 = vweird.f32 %v3743
    %vm3750 = vmor %vm3748, %vm3749
    %v3751 = vsel %vm3750, %v3743, %v3747
    %v3752 = vand.u32 2147483647, %v3741
    %vm3753 = vcmp.eq.f32.partialorder %v3752, 8.507059e+37
    %v3754 = vand.u32 %v3741, 2147483648
    %v3755 = vor.u32 1.1754944e-38, %v3754
    %v3756 = vsel %vm3753, %v3755, %v3751
    %v3757 = vmul.f32 %v3715, %v3756
    %v3758 = vrcp.pop %v3742
    %v3759 = vmul.f32 %v3742, %v3758
    %v3760 = vsub.f32 1.0, %v3759
    %v3761 = vmul.f32 %v3758, %v3760
    %v3762 = vadd.f32 %v3758, %v3761
    %vm3763 = vweird.f32 %v3742
    %vm3764 = vweird.f32 %v3758
    %vm3765 = vmor %vm3763, %vm3764
    %v3766 = vsel %vm3765, %v3758, %v3762
    %v3767 = vand.u32 2147483647, %v3742
    %vm3768 = vcmp.eq.f32.partialorder %v3767, 8.507059e+37
    %v3769 = vand.u32 %v3742, 2147483648
    %v3770 = vor.u32 1.1754944e-38, %v3769
    %v3771 = vsel %vm3768, %v3770, %v3766
    %v3772 = vmul.f32 %v3716, %v3771
    %v3773 = vstv %s3693
    %v3774 = vadd.f32 %v3757, %v3773
    %v3775 = vadd.f32 %v3772, %v3773
    %3776 = vst.msk [vmem:[#allocation34] sm:$0xff] %vm423, %v3774
    %3777 = vst.msk [vmem:[#allocation34 + $0x8] sm:$0xff] %vm423, %v3775
    // Predicated region
    $region206: #{tpu_custom_call.1} parent=1 // pred_check
      _
    $region207: #{tpu_custom_call.1} parent=1 // pred_check_branch
      %3779 = sbr.rel (0) target = $region209
    $region208: #{tpu_custom_call.1} parent=1 // pred_region
      %3781 = vsyncadd [#allocation4], 0
      %s3782 = sshll.u32 [#allocation34], 4
      %s3783 = int_to_ptr.vmem [resolvable:$true] %s3782
      %s3784 = sshll.u32 %s63, 4
      %s3785 = int_to_ptr.hbm [resolvable:$true] %s3784
      %3790 = dma.vmem_to_hbm [thread:$0]  %s3783, 256, %s3785, [#allocation4], 128, 128, 8
    $region209: #{tpu_custom_call.1} parent=1 // pred_fallthru
      _
    // Predicated region
    $region210: #{tpu_custom_call.1} parent=1 // pred_check
      _
    $region211: #{tpu_custom_call.1} parent=1 // pred_check_branch
      %3792 = sbr.rel (0) target = $region213
    $region212: #{tpu_custom_call.1} parent=1 // pred_region
      %3794 = dma.done [#allocation4], 256
    $region213: #{tpu_custom_call.1} parent=1 // pred_fallthru
      _
    %3795 = vsyncpa [#allocation3], 1
    %3796 = vsyncpa [#allocation8], 1
    %3797 = vsyncpa [#allocation11], 1
    %3798 = vsyncpa [#allocation14], 1
    %3799 = vsyncpa [#allocation17], 1
    %3800 = vsyncpa [#allocation20], 1
    %3801 = vsyncpa [#allocation23], 1
    %3802 = vsyncpa [#allocation26], 1
    %3803 = vsyncpa [#allocation29], 1
    %3804 = vsyncpa [#allocation32], 1
    %3805 = vsyncpa [#allocation4], 1
    %3806 = vsyncpa [#allocation5], 1

</llo_original>
